<compile_context>
chip_gen: v7x
topology: tpu7x:2x2x1
jax: 0.10.0
libtpu: 0.0.40
codegen_flags: <defaults>
</compile_context>

<pallas_src>
import jax
import jax.numpy as jnp
from jax import lax
from jax.experimental import pallas as pl
from jax.experimental.pallas import tpu as pltpu


_LEAKY_SLOPE = 0.2
_BN_EPS = 1e-5
_LANE = 128


# ---------------------------------------------------------------------------
# Tiling helpers
# ---------------------------------------------------------------------------

def _pick_tm(m: int) -> int:
    """Largest power-of-two tile (<=512, >=8 sublanes) that divides M."""
    for tm in (512, 256, 128, 64, 32, 16, 8):
        if m % tm == 0:
            return tm
    return m  # tiny layers (e.g. final conv, M == N): single full block


def _vmem_limit_bytes(tm: int, k: int, cout: int) -> int:
    """Explicit scoped-VMEM budget: double-buffered tiles + resident weights,
    with 2x headroom, clamped well under v7x's 64 MiB physical VMEM."""
    need = 2 * (tm * k * 2)             # bf16 patch tile, double-buffered
    need += 2 * 2 * (tm * cout * 4)     # f32 output tile(s), double-buffered
    need += k * cout * 2                # resident bf16 weights
    need += 4 * cout * 4                # stats accumulators
    return int(min(max(2 * need, 16 * 1024 * 1024), 48 * 1024 * 1024))


# ---------------------------------------------------------------------------
# Pallas kernels
# ---------------------------------------------------------------------------

def _make_matmul_act_kernel(act: str):
    """Conv-as-matmul + elementwise activation (no BatchNorm). bf16 in, f32 out."""

    def kernel(x_ref, w_ref, o_ref):
        y = jnp.dot(x_ref[...], w_ref[...], preferred_element_type=jnp.float32)
        if act == "leaky":
            y = jnp.where(y >= 0.0, y, _LEAKY_SLOPE * y)
        elif act == "sigmoid":
            y = 1.0 / (1.0 + jnp.exp(-y))
        o_ref[...] = y.astype(o_ref.dtype)

    return kernel


def _matmul_act(patches_bf16, w_mat_bf16, act: str):
    m, k = patches_bf16.shape
    _, cout = w_mat_bf16.shape
    tm = _pick_tm(m)
    return pl.pallas_call(
        _make_matmul_act_kernel(act),
        out_shape=jax.ShapeDtypeStruct((m, cout), jnp.float32),
        grid_spec=pltpu.PrefetchScalarGridSpec(
            num_scalar_prefetch=0,
            grid=(m // tm,),
            in_specs=[
                pl.BlockSpec((tm, k), lambda i: (i, 0)),      # streamed patch tiles
                pl.BlockSpec((k, cout), lambda i: (0, 0)),    # resident weights
            ],
            out_specs=pl.BlockSpec((tm, cout), lambda i: (i, 0)),
        ),
        compiler_params=pltpu.CompilerParams(
            dimension_semantics=("parallel",),
            vmem_limit_bytes=_vmem_limit_bytes(tm, k, cout),
        ),
        cost_estimate=pl.CostEstimate(
            flops=2 * m * k * cout,
            transcendentals=m * cout if act == "sigmoid" else 0,
            bytes_accessed=m * k * 2 + k * cout * 2 + m * cout * 4,
        ),
    )(patches_bf16, w_mat_bf16)


def _matmul_stats_kernel(x_ref, w_ref, y_ref, sum_ref, sq_ref):
    """Conv-as-matmul + global per-channel sum / sum-of-squares accumulation.

    sum/sq outputs keep the same block index across the M grid axis, so they stay
    resident in VMEM and accumulate (init via pl.when at step 0). The M axis is a
    reduction for them -> grid axis marked "arbitrary" in the caller.
    """

    @pl.when(pl.program_id(0) == 0)
    def _():
        sum_ref[...] = jnp.zeros_like(sum_ref)
        sq_ref[...] = jnp.zeros_like(sq_ref)

    y = jnp.dot(x_ref[...], w_ref[...], preferred_element_type=jnp.float32)
    y_ref[...] = y
    sum_ref[...] += jnp.sum(y, axis=0, keepdims=True)
    sq_ref[...] += jnp.sum(y * y, axis=0, keepdims=True)


def _matmul_with_stats(patches_bf16, w_mat_bf16):
    m, k = patches_bf16.shape
    _, cout = w_mat_bf16.shape
    tm = _pick_tm(m)
    return pl.pallas_call(
        _matmul_stats_kernel,
        out_shape=(
            jax.ShapeDtypeStruct((m, cout), jnp.float32),   # raw conv output
            jax.ShapeDtypeStruct((1, cout), jnp.float32),   # per-channel sum
            jax.ShapeDtypeStruct((1, cout), jnp.float32),   # per-channel sum of squares
        ),
        grid_spec=pltpu.PrefetchScalarGridSpec(
            num_scalar_prefetch=0,
            grid=(m // tm,),
            in_specs=[
                pl.BlockSpec((tm, k), lambda i: (i, 0)),
                pl.BlockSpec((k, cout), lambda i: (0, 0)),
            ],
            out_specs=[
                pl.BlockSpec((tm, cout), lambda i: (i, 0)),
                pl.BlockSpec((1, cout), lambda i: (0, 0)),
                pl.BlockSpec((1, cout), lambda i: (0, 0)),
            ],
        ),
        compiler_params=pltpu.CompilerParams(
            dimension_semantics=("arbitrary",),   # stats accumulate across this axis
            vmem_limit_bytes=_vmem_limit_bytes(tm, k, cout),
        ),
        cost_estimate=pl.CostEstimate(
            flops=2 * m * k * cout + 3 * m * cout,
            transcendentals=0,
            bytes_accessed=m * k * 2 + k * cout * 2 + m * cout * 4 + 2 * cout * 4,
        ),
    )(patches_bf16, w_mat_bf16)


def _make_bn_leaky_kernel(m_total: int):
    """Second pass: normalize with the GLOBAL batch stats + LeakyReLU(0.2)."""
    inv_m = 1.0 / float(m_total)

    def kernel(y_ref, sum_ref, sq_ref, o_ref):
        y = y_ref[...]
        mean = sum_ref[...] * inv_m                       # (1, Cout)
        var = jnp.maximum(sq_ref[...] * inv_m - mean * mean, 0.0)  # biased batch var
        yhat = (y - mean) * lax.rsqrt(var + _BN_EPS)
        o_ref[...] = jnp.where(yhat >= 0.0, yhat, _LEAKY_SLOPE * yhat)

    return kernel


def _bn_leaky(y, s1, s2):
    m, cout = y.shape
    tm = _pick_tm(m)
    return pl.pallas_call(
        _make_bn_leaky_kernel(m),
        out_shape=jax.ShapeDtypeStruct((m, cout), jnp.float32),
        grid_spec=pltpu.PrefetchScalarGridSpec(
            num_scalar_prefetch=0,
            grid=(m // tm,),
            in_specs=[
                pl.BlockSpec((tm, cout), lambda i: (i, 0)),
                pl.BlockSpec((1, cout), lambda i: (0, 0)),
                pl.BlockSpec((1, cout), lambda i: (0, 0)),
            ],
            out_specs=pl.BlockSpec((tm, cout), lambda i: (i, 0)),
        ),
        compiler_params=pltpu.CompilerParams(
            dimension_semantics=("parallel",),
            vmem_limit_bytes=_vmem_limit_bytes(tm, cout, cout),
        ),
        cost_estimate=pl.CostEstimate(
            flops=6 * m * cout,
            transcendentals=cout,
            bytes_accessed=2 * m * cout * 4 + 2 * cout * 4,
        ),
    )(y, s1, s2)


# ---------------------------------------------------------------------------
# Plain-JAX layout glue (im2col) + layer wrapper
# ---------------------------------------------------------------------------

def _im2col(x_nhwc, kh, kw, stride, pad):
    # TODO(synk): move patch assembly into the matmul kernel (DMA NHWC input tiles and
    # build the (TM, K) block in VMEM) to eliminate the KH*KW/stride^2 im2col blow-up
    # and its extra HBM round trip on the memory-bound early layers.
    n, h, w, cin = x_nhwc.shape
    oh = (h + 2 * pad - kh) // stride + 1
    ow = (w + 2 * pad - kw) // stride + 1
    xp = jnp.pad(x_nhwc, ((0, 0), (pad, pad), (pad, pad), (0, 0)))
    cols = []
    for i in range(kh):
        for j in range(kw):
            cols.append(
                lax.slice(
                    xp,
                    (0, i, j, 0),
                    (n, i + stride * (oh - 1) + 1, j + stride * (ow - 1) + 1, cin),
                    (1, stride, stride, 1),
                )
            )  # (N, OH, OW, Cin)
    patches = jnp.concatenate(cols, axis=-1).reshape(n * oh * ow, kh * kw * cin)
    return patches, oh, ow


def _conv_layer(x_nhwc, w_mat_bf16, *, stride, pad, kh, kw, use_bn, act):
    n = x_nhwc.shape[0]
    # Cast BEFORE patch extraction so the HBM-resident im2col matrix (the largest
    # array, 4x the input bytes) is bf16 and the kernel DMA moves half the bytes.
    patches, oh, ow = _im2col(x_nhwc.astype(jnp.bfloat16), kh, kw, stride, pad)
    cout = w_mat_bf16.shape[1]
    if use_bn:
        assert act == "leaky"
        y, s1, s2 = _matmul_with_stats(patches, w_mat_bf16)
        out = _bn_leaky(y, s1, s2)
    else:
        out = _matmul_act(patches, w_mat_bf16, act)
    return out.reshape(n, oh, ow, cout)


# ---------------------------------------------------------------------------
# Parameters + forward
# ---------------------------------------------------------------------------

def init_params(key, imsize=(3, 64, 64), s=64):
    """PyTorch-shaped (Cout, Cin, KH, KW) Conv2d weights, DCGAN-style N(0, 0.02)."""
    cin = imsize[0]
    shapes = [
        (s, cin, 4, 4),
        (2 * s, s, 4, 4),
        (4 * s, 2 * s, 4, 4),
        (8 * s, 4 * s, 4, 4),
        (1, 8 * s, 4, 4),
    ]
    keys = jax.random.split(key, len(shapes))
    return [0.02 * jax.random.normal(k, sh, jnp.float32) for k, sh in zip(keys, shapes)]


def prepare_weight_mats(params):
    """One-time OIHW -> (K, Cout) bf16 matmul operands (done outside the forward).
    The final Cout=1 layer is zero-padded to a lane-dense Cout=128."""
    mats = []
    for idx, w in enumerate(params):
        cout, cin, kh, kw = w.shape
        w_mat = jnp.transpose(w, (2, 3, 1, 0)).reshape(kh * kw * cin, cout)
        if idx == len(params) - 1 and cout < _LANE:
            w_mat = jnp.pad(w_mat, ((0, 0), (0, _LANE - cout)))
        mats.append(w_mat.astype(jnp.bfloat16))
    return mats


def conv_discriminator_forward(x_nchw, w_mats):
    """Equivalent of ConvDiscriminator.forward (BatchNorm uses training-mode batch
    stats with gamma=1 / beta=0, i.e. the module's parameters at init). Returns (N,)."""
    x = jnp.transpose(x_nchw, (0, 2, 3, 1))  # NCHW -> NHWC (once)
    w1, w2, w3, w4, w5 = w_mats
    x = _conv_layer(x, w1, stride=2, pad=1, kh=4, kw=4, use_bn=False, act="leaky")
    x = _conv_layer(x, w2, stride=2, pad=1, kh=4, kw=4, use_bn=True, act="leaky")
    x = _conv_layer(x, w3, stride=2, pad=1, kh=4, kw=4, use_bn=True, act="leaky")
    x = _conv_layer(x, w4, stride=2, pad=1, kh=4, kw=4, use_bn=True, act="leaky")
    x = _conv_layer(x, w5, stride=1, pad=0, kh=4, kw=4, use_bn=False, act="sigmoid")
    # x: (N, 1, 1, 128-padded); only channel 0 is the real sigmoid output.
    # PyTorch: output.view(-1, 1).squeeze(1) -> (N,)
    return x[:, 0, 0, 0]


if __name__ == "__main__":
    # Spatial size must be 64 so the final 4x4 valid conv sees a 4x4 map
    # (64 -> 32 -> 16 -> 8 -> 4 -> 1); keep batch and channel width small.
    batch = 2
    imsize = (3, 64, 64)
    s = 8

    key = jax.random.PRNGKey(0)
    k_x, k_p = jax.random.split(key)
    x = jax.random.normal(k_x, (batch,) + imsize, jnp.float32)
    params = init_params(k_p, imsize=imsize, s=s)
    w_mats = prepare_weight_mats(params)  # weight transpose/pad done once, not per forward

    fwd = jax.jit(conv_discriminator_forward)
    out = jax.block_until_ready(fwd(x, w_mats))

    assert out.shape == (batch,), out.shape
    assert bool(jnp.all(jnp.isfinite(out)))
    print("KERNEL_OK")
</pallas_src>

<mosaic_0001>
module attributes {stable_mosaic.version = 11 : i64} {
  func.func @kernel(%arg0: i32, %arg1: memref<512x48xbf16, #tpu.memory_space<vmem>>, %arg2: memref<48x8xbf16, #tpu.memory_space<vmem>>, %arg3: memref<512x8xf32, #tpu.memory_space<vmem>>) attributes {dimension_semantics = [#tpu.dimension_semantics<parallel>], iteration_bounds = array<i64: 4>, scalar_prefetch = 0 : i64, scratch_operands = 0 : i64, tpu.core_type = #tpu.core_type<tc>, window_params = [{transform_indices = @transform_0, window_bounds = array<i64: 512, 48>}, {pipeline_mode = #tpu.pipeline_mode<synchronous>, transform_indices = @transform_1, window_bounds = array<i64: 48, 8>}, {transform_indices = @transform_2, window_bounds = array<i64: 512, 8>}]} {
    %c0 = arith.constant 0 : index
    %c0_0 = arith.constant 0 : index
    %0 = vector.load %arg1[%c0, %c0_0] : memref<512x48xbf16, #tpu.memory_space<vmem>>, vector<512x48xbf16>
    %c0_1 = arith.constant 0 : index
    %c0_2 = arith.constant 0 : index
    %1 = vector.load %arg2[%c0_1, %c0_2] : memref<48x8xbf16, #tpu.memory_space<vmem>>, vector<48x8xbf16>
    %cst = arith.constant dense<0.000000e+00> : vector<512x8xf32>
    %2 = tpu.matmul %0, %1, %cst {dimension_numbers = #tpu.dot_dimension_numbers<[1], [0], [0], [1], [0, 0, 1, 1], [], []>} : vector<512x48xbf16>, vector<48x8xbf16>, vector<512x8xf32> -> vector<512x8xf32>
    %cst_3 = arith.constant 0.000000e+00 : f32
    %3 = vector.broadcast %cst_3 : f32 to vector<512x8xf32>
    %4 = arith.cmpf oge, %2, %3 : vector<512x8xf32>
    %cst_4 = arith.constant 2.000000e-01 : f32
    %5 = vector.broadcast %cst_4 : f32 to vector<512x8xf32>
    %6 = arith.mulf %5, %2 : vector<512x8xf32>
    %7 = arith.select %4, %2, %6 : vector<512x8xi1>, vector<512x8xf32>
    %c0_5 = arith.constant 0 : index
    %c0_6 = arith.constant 0 : index
    %8 = vector.load %arg3[%c0_5, %c0_6] : memref<512x8xf32, #tpu.memory_space<vmem>>, vector<512x8xf32>
    tpu.vector_store %arg3[%c0_5, %c0_6], %7 {strides = array<i32>} : memref<512x8xf32, #tpu.memory_space<vmem>>, vector<512x8xf32>,
    return
  }
  func.func @transform_0(%arg0: i32) -> (i32, i32) {
    %c0_i32 = arith.constant 0 : i32
    %c0_i32_0 = arith.constant 0 : i32
    return %arg0, %c0_i32 : i32, i32
  }
  func.func @transform_1(%arg0: i32) -> (i32, i32) {
    %c0_i32 = arith.constant 0 : i32
    %c0_i32_0 = arith.constant 0 : i32
    %c0_i32_1 = arith.constant 0 : i32
    return %c0_i32, %c0_i32_0 : i32, i32
  }
  func.func @transform_2(%arg0: i32) -> (i32, i32) {
    %c0_i32 = arith.constant 0 : i32
    %c0_i32_0 = arith.constant 0 : i32
    return %arg0, %c0_i32 : i32, i32
  }
}

module attributes {stable_mosaic.version = 11 : i64} {
  func.func @_matmul_stats_kernel(%arg0: i32, %arg1: memref<512x128xbf16, #tpu.memory_space<vmem>>, %arg2: memref<128x16xbf16, #tpu.memory_space<vmem>>, %arg3: memref<512x16xf32, #tpu.memory_space<vmem>>, %arg4: memref<1x16xf32, #tpu.memory_space<vmem>>, %arg5: memref<1x16xf32, #tpu.memory_space<vmem>>) attributes {dimension_semantics = [#tpu.dimension_semantics<arbitrary>], iteration_bounds = array<i64: 1>, scalar_prefetch = 0 : i64, scratch_operands = 0 : i64, tpu.core_type = #tpu.core_type<tc>, window_params = [{transform_indices = @transform_0, window_bounds = array<i64: 512, 128>}, {pipeline_mode = #tpu.pipeline_mode<synchronous>, transform_indices = @transform_1, window_bounds = array<i64: 128, 16>}, {transform_indices = @transform_2, window_bounds = array<i64: 512, 16>}, {pipeline_mode = #tpu.pipeline_mode<synchronous>, transform_indices = @transform_3, window_bounds = array<i64: 1, 16>}, {pipeline_mode = #tpu.pipeline_mode<synchronous>, transform_indices = @transform_4, window_bounds = array<i64: 1, 16>}]} {
    %c0_i32 = arith.constant 0 : i32
    %0 = arith.cmpi eq, %arg0, %c0_i32 : i32
    %1 = arith.extui %0 : i1 to i32
    %c0_i32_0 = arith.constant 0 : i32
    %2 = arith.cmpi ne, %1, %c0_i32_0 : i32
    scf.if %2 {
      %cst_16 = arith.constant 0.000000e+00 : f32
      %18 = vector.broadcast %cst_16 : f32 to vector<1x16xf32>
      %c0_17 = arith.constant 0 : index
      %c0_18 = arith.constant 0 : index
      %19 = vector.load %arg4[%c0_17, %c0_18] : memref<1x16xf32, #tpu.memory_space<vmem>>, vector<1x16xf32>
      tpu.vector_store %arg4[%c0_17, %c0_18], %18 {strides = array<i32>} : memref<1x16xf32, #tpu.memory_space<vmem>>, vector<1x16xf32>,
      %cst_19 = arith.constant 0.000000e+00 : f32
      %20 = vector.broadcast %cst_19 : f32 to vector<1x16xf32>
      %c0_20 = arith.constant 0 : index
      %c0_21 = arith.constant 0 : index
      %21 = vector.load %arg5[%c0_20, %c0_21] : memref<1x16xf32, #tpu.memory_space<vmem>>, vector<1x16xf32>
      tpu.vector_store %arg5[%c0_20, %c0_21], %20 {strides = array<i32>} : memref<1x16xf32, #tpu.memory_space<vmem>>, vector<1x16xf32>,
    } else {
    }
    %c0 = arith.constant 0 : index
    %c0_1 = arith.constant 0 : index
    %3 = vector.load %arg1[%c0, %c0_1] : memref<512x128xbf16, #tpu.memory_space<vmem>>, vector<512x128xbf16>
    %c0_2 = arith.constant 0 : index
    %c0_3 = arith.constant 0 : index
    %4 = vector.load %arg2[%c0_2, %c0_3] : memref<128x16xbf16, #tpu.memory_space<vmem>>, vector<128x16xbf16>
    %cst = arith.constant dense<0.000000e+00> : vector<512x16xf32>
    %5 = tpu.matmul %3, %4, %cst {dimension_numbers = #tpu.dot_dimension_numbers<[1], [0], [0], [1], [0, 0, 1, 1], [], []>} : vector<512x128xbf16>, vector<128x16xbf16>, vector<512x16xf32> -> vector<512x16xf32>
    %c0_4 = arith.constant 0 : index
    %c0_5 = arith.constant 0 : index
    %6 = vector.load %arg3[%c0_4, %c0_5] : memref<512x16xf32, #tpu.memory_space<vmem>>, vector<512x16xf32>
    tpu.vector_store %arg3[%c0_4, %c0_5], %5 {strides = array<i32>} : memref<512x16xf32, #tpu.memory_space<vmem>>, vector<512x16xf32>,
    %c0_6 = arith.constant 0 : index
    %c0_7 = arith.constant 0 : index
    %7 = vector.load %arg4[%c0_6, %c0_7] : memref<1x16xf32, #tpu.memory_space<vmem>>, vector<1x16xf32>
    %cst_8 = arith.constant dense<0.000000e+00> : vector<16xf32>
    %8 = vector.multi_reduction <add>, %5, %cst_8 [0] : vector<512x16xf32> to vector<16xf32>
    %9 = vector.shape_cast %8 : vector<16xf32> to vector<1x16xf32>
    %10 = arith.addf %7, %9 : vector<1x16xf32>
    %c0_9 = arith.constant 0 : index
    %c0_10 = arith.constant 0 : index
    %11 = vector.load %arg4[%c0_9, %c0_10] : memref<1x16xf32, #tpu.memory_space<vmem>>, vector<1x16xf32>
    tpu.vector_store %arg4[%c0_9, %c0_10], %10 {strides = array<i32>} : memref<1x16xf32, #tpu.memory_space<vmem>>, vector<1x16xf32>,
    %c0_11 = arith.constant 0 : index
    %c0_12 = arith.constant 0 : index
    %12 = vector.load %arg5[%c0_11, %c0_12] : memref<1x16xf32, #tpu.memory_space<vmem>>, vector<1x16xf32>
    %13 = arith.mulf %5, %5 : vector<512x16xf32>
    %cst_13 = arith.constant dense<0.000000e+00> : vector<16xf32>
    %14 = vector.multi_reduction <add>, %13, %cst_13 [0] : vector<512x16xf32> to vector<16xf32>
    %15 = vector.shape_cast %14 : vector<16xf32> to vector<1x16xf32>
    %16 = arith.addf %12, %15 : vector<1x16xf32>
    %c0_14 = arith.constant 0 : index
    %c0_15 = arith.constant 0 : index
    %17 = vector.load %arg5[%c0_14, %c0_15] : memref<1x16xf32, #tpu.memory_space<vmem>>, vector<1x16xf32>
    tpu.vector_store %arg5[%c0_14, %c0_15], %16 {strides = array<i32>} : memref<1x16xf32, #tpu.memory_space<vmem>>, vector<1x16xf32>,
    return
  }
  func.func @transform_0(%arg0: i32) -> (i32, i32) {
    %c0_i32 = arith.constant 0 : i32
    %c0_i32_0 = arith.constant 0 : i32
    return %arg0, %c0_i32 : i32, i32
  }
  func.func @transform_1(%arg0: i32) -> (i32, i32) {
    %c0_i32 = arith.constant 0 : i32
    %c0_i32_0 = arith.constant 0 : i32
    %c0_i32_1 = arith.constant 0 : i32
    return %c0_i32, %c0_i32_0 : i32, i32
  }
  func.func @transform_2(%arg0: i32) -> (i32, i32) {
    %c0_i32 = arith.constant 0 : i32
    %c0_i32_0 = arith.constant 0 : i32
    return %arg0, %c0_i32 : i32, i32
  }
  func.func @transform_3(%arg0: i32) -> (i32, i32) {
    %c0_i32 = arith.constant 0 : i32
    %c0_i32_0 = arith.constant 0 : i32
    %c0_i32_1 = arith.constant 0 : i32
    return %c0_i32, %c0_i32_0 : i32, i32
  }
  func.func @transform_4(%arg0: i32) -> (i32, i32) {
    %c0_i32 = arith.constant 0 : i32
    %c0_i32_0 = arith.constant 0 : i32
    %c0_i32_1 = arith.constant 0 : i32
    return %c0_i32, %c0_i32_0 : i32, i32
  }
}

module attributes {stable_mosaic.version = 11 : i64} {
  func.func @kernel(%arg0: i32, %arg1: memref<512x16xf32, #tpu.memory_space<vmem>>, %arg2: memref<1x16xf32, #tpu.memory_space<vmem>>, %arg3: memref<1x16xf32, #tpu.memory_space<vmem>>, %arg4: memref<512x16xf32, #tpu.memory_space<vmem>>) attributes {dimension_semantics = [#tpu.dimension_semantics<parallel>], iteration_bounds = array<i64: 1>, scalar_prefetch = 0 : i64, scratch_operands = 0 : i64, tpu.core_type = #tpu.core_type<tc>, window_params = [{transform_indices = @transform_0, window_bounds = array<i64: 512, 16>}, {pipeline_mode = #tpu.pipeline_mode<synchronous>, transform_indices = @transform_1, window_bounds = array<i64: 1, 16>}, {pipeline_mode = #tpu.pipeline_mode<synchronous>, transform_indices = @transform_2, window_bounds = array<i64: 1, 16>}, {transform_indices = @transform_3, window_bounds = array<i64: 512, 16>}]} {
    %c0 = arith.constant 0 : index
    %c0_0 = arith.constant 0 : index
    %0 = vector.load %arg1[%c0, %c0_0] : memref<512x16xf32, #tpu.memory_space<vmem>>, vector<512x16xf32>
    %c0_1 = arith.constant 0 : index
    %c0_2 = arith.constant 0 : index
    %1 = vector.load %arg2[%c0_1, %c0_2] : memref<1x16xf32, #tpu.memory_space<vmem>>, vector<1x16xf32>
    %cst = arith.constant 0.001953125 : f32
    %2 = vector.broadcast %cst : f32 to vector<1x16xf32>
    %3 = arith.mulf %1, %2 : vector<1x16xf32>
    %c0_3 = arith.constant 0 : index
    %c0_4 = arith.constant 0 : index
    %4 = vector.load %arg3[%c0_3, %c0_4] : memref<1x16xf32, #tpu.memory_space<vmem>>, vector<1x16xf32>
    %cst_5 = arith.constant 0.001953125 : f32
    %5 = vector.broadcast %cst_5 : f32 to vector<1x16xf32>
    %6 = arith.mulf %4, %5 : vector<1x16xf32>
    %7 = arith.mulf %3, %3 : vector<1x16xf32>
    %8 = arith.subf %6, %7 : vector<1x16xf32>
    %cst_6 = arith.constant 0.000000e+00 : f32
    %9 = vector.broadcast %cst_6 : f32 to vector<1x16xf32>
    %10 = arith.maximumf %8, %9 : vector<1x16xf32>
    %11 = vector.broadcast %3 : vector<1x16xf32> to vector<512x16xf32>
    %12 = arith.subf %0, %11 : vector<512x16xf32>
    %cst_7 = arith.constant 9.99999974E-6 : f32
    %13 = vector.broadcast %cst_7 : f32 to vector<1x16xf32>
    %14 = arith.addf %10, %13 : vector<1x16xf32>
    %15 = math.rsqrt %14 : vector<1x16xf32>
    %16 = vector.broadcast %15 : vector<1x16xf32> to vector<512x16xf32>
    %17 = arith.mulf %12, %16 : vector<512x16xf32>
    %cst_8 = arith.constant 0.000000e+00 : f32
    %18 = vector.broadcast %cst_8 : f32 to vector<512x16xf32>
    %19 = arith.cmpf oge, %17, %18 : vector<512x16xf32>
    %cst_9 = arith.constant 2.000000e-01 : f32
    %20 = vector.broadcast %cst_9 : f32 to vector<512x16xf32>
    %21 = arith.mulf %20, %17 : vector<512x16xf32>
    %22 = arith.select %19, %17, %21 : vector<512x16xi1>, vector<512x16xf32>
    %c0_10 = arith.constant 0 : index
    %c0_11 = arith.constant 0 : index
    %23 = vector.load %arg4[%c0_10, %c0_11] : memref<512x16xf32, #tpu.memory_space<vmem>>, vector<512x16xf32>
    tpu.vector_store %arg4[%c0_10, %c0_11], %22 {strides = array<i32>} : memref<512x16xf32, #tpu.memory_space<vmem>>, vector<512x16xf32>,
    return
  }
  func.func @transform_0(%arg0: i32) -> (i32, i32) {
    %c0_i32 = arith.constant 0 : i32
    %c0_i32_0 = arith.constant 0 : i32
    return %arg0, %c0_i32 : i32, i32
  }
  func.func @transform_1(%arg0: i32) -> (i32, i32) {
    %c0_i32 = arith.constant 0 : i32
    %c0_i32_0 = arith.constant 0 : i32
    %c0_i32_1 = arith.constant 0 : i32
    return %c0_i32, %c0_i32_0 : i32, i32
  }
  func.func @transform_2(%arg0: i32) -> (i32, i32) {
    %c0_i32 = arith.constant 0 : i32
    %c0_i32_0 = arith.constant 0 : i32
    %c0_i32_1 = arith.constant 0 : i32
    return %c0_i32, %c0_i32_0 : i32, i32
  }
  func.func @transform_3(%arg0: i32) -> (i32, i32) {
    %c0_i32 = arith.constant 0 : i32
    %c0_i32_0 = arith.constant 0 : i32
    return %arg0, %c0_i32 : i32, i32
  }
}

module attributes {stable_mosaic.version = 11 : i64} {
  func.func @kernel(%arg0: i32, %arg1: memref<128x32xf32, #tpu.memory_space<vmem>>, %arg2: memref<1x32xf32, #tpu.memory_space<vmem>>, %arg3: memref<1x32xf32, #tpu.memory_space<vmem>>, %arg4: memref<128x32xf32, #tpu.memory_space<vmem>>) attributes {dimension_semantics = [#tpu.dimension_semantics<parallel>], iteration_bounds = array<i64: 1>, scalar_prefetch = 0 : i64, scratch_operands = 0 : i64, tpu.core_type = #tpu.core_type<tc>, window_params = [{transform_indices = @transform_0, window_bounds = array<i64: 128, 32>}, {pipeline_mode = #tpu.pipeline_mode<synchronous>, transform_indices = @transform_1, window_bounds = array<i64: 1, 32>}, {pipeline_mode = #tpu.pipeline_mode<synchronous>, transform_indices = @transform_2, window_bounds = array<i64: 1, 32>}, {transform_indices = @transform_3, window_bounds = array<i64: 128, 32>}]} {
    %c0 = arith.constant 0 : index
    %c0_0 = arith.constant 0 : index
    %0 = vector.load %arg1[%c0, %c0_0] : memref<128x32xf32, #tpu.memory_space<vmem>>, vector<128x32xf32>
    %c0_1 = arith.constant 0 : index
    %c0_2 = arith.constant 0 : index
    %1 = vector.load %arg2[%c0_1, %c0_2] : memref<1x32xf32, #tpu.memory_space<vmem>>, vector<1x32xf32>
    %cst = arith.constant 7.812500e-03 : f32
    %2 = vector.broadcast %cst : f32 to vector<1x32xf32>
    %3 = arith.mulf %1, %2 : vector<1x32xf32>
    %c0_3 = arith.constant 0 : index
    %c0_4 = arith.constant 0 : index
    %4 = vector.load %arg3[%c0_3, %c0_4] : memref<1x32xf32, #tpu.memory_space<vmem>>, vector<1x32xf32>
    %cst_5 = arith.constant 7.812500e-03 : f32
    %5 = vector.broadcast %cst_5 : f32 to vector<1x32xf32>
    %6 = arith.mulf %4, %5 : vector<1x32xf32>
    %7 = arith.mulf %3, %3 : vector<1x32xf32>
    %8 = arith.subf %6, %7 : vector<1x32xf32>
    %cst_6 = arith.constant 0.000000e+00 : f32
    %9 = vector.broadcast %cst_6 : f32 to vector<1x32xf32>
    %10 = arith.maximumf %8, %9 : vector<1x32xf32>
    %11 = vector.broadcast %3 : vector<1x32xf32> to vector<128x32xf32>
    %12 = arith.subf %0, %11 : vector<128x32xf32>
    %cst_7 = arith.constant 9.99999974E-6 : f32
    %13 = vector.broadcast %cst_7 : f32 to vector<1x32xf32>
    %14 = arith.addf %10, %13 : vector<1x32xf32>
    %15 = math.rsqrt %14 : vector<1x32xf32>
    %16 = vector.broadcast %15 : vector<1x32xf32> to vector<128x32xf32>
    %17 = arith.mulf %12, %16 : vector<128x32xf32>
    %cst_8 = arith.constant 0.000000e+00 : f32
    %18 = vector.broadcast %cst_8 : f32 to vector<128x32xf32>
    %19 = arith.cmpf oge, %17, %18 : vector<128x32xf32>
    %cst_9 = arith.constant 2.000000e-01 : f32
    %20 = vector.broadcast %cst_9 : f32 to vector<128x32xf32>
    %21 = arith.mulf %20, %17 : vector<128x32xf32>
    %22 = arith.select %19, %17, %21 : vector<128x32xi1>, vector<128x32xf32>
    %c0_10 = arith.constant 0 : index
    %c0_11 = arith.constant 0 : index
    %23 = vector.load %arg4[%c0_10, %c0_11] : memref<128x32xf32, #tpu.memory_space<vmem>>, vector<128x32xf32>
    tpu.vector_store %arg4[%c0_10, %c0_11], %22 {strides = array<i32>} : memref<128x32xf32, #tpu.memory_space<vmem>>, vector<128x32xf32>,
    return
  }
  func.func @transform_0(%arg0: i32) -> (i32, i32) {
    %c0_i32 = arith.constant 0 : i32
    %c0_i32_0 = arith.constant 0 : i32
    return %arg0, %c0_i32 : i32, i32
  }
  func.func @transform_1(%arg0: i32) -> (i32, i32) {
    %c0_i32 = arith.constant 0 : i32
    %c0_i32_0 = arith.constant 0 : i32
    %c0_i32_1 = arith.constant 0 : i32
    return %c0_i32, %c0_i32_0 : i32, i32
  }
  func.func @transform_2(%arg0: i32) -> (i32, i32) {
    %c0_i32 = arith.constant 0 : i32
    %c0_i32_0 = arith.constant 0 : i32
    %c0_i32_1 = arith.constant 0 : i32
    return %c0_i32, %c0_i32_0 : i32, i32
  }
  func.func @transform_3(%arg0: i32) -> (i32, i32) {
    %c0_i32 = arith.constant 0 : i32
    %c0_i32_0 = arith.constant 0 : i32
    return %arg0, %c0_i32 : i32, i32
  }
}

module attributes {stable_mosaic.version = 11 : i64} {
  func.func @_matmul_stats_kernel(%arg0: i32, %arg1: memref<128x256xbf16, #tpu.memory_space<vmem>>, %arg2: memref<256x32xbf16, #tpu.memory_space<vmem>>, %arg3: memref<128x32xf32, #tpu.memory_space<vmem>>, %arg4: memref<1x32xf32, #tpu.memory_space<vmem>>, %arg5: memref<1x32xf32, #tpu.memory_space<vmem>>) attributes {dimension_semantics = [#tpu.dimension_semantics<arbitrary>], iteration_bounds = array<i64: 1>, scalar_prefetch = 0 : i64, scratch_operands = 0 : i64, tpu.core_type = #tpu.core_type<tc>, window_params = [{transform_indices = @transform_0, window_bounds = array<i64: 128, 256>}, {pipeline_mode = #tpu.pipeline_mode<synchronous>, transform_indices = @transform_1, window_bounds = array<i64: 256, 32>}, {transform_indices = @transform_2, window_bounds = array<i64: 128, 32>}, {pipeline_mode = #tpu.pipeline_mode<synchronous>, transform_indices = @transform_3, window_bounds = array<i64: 1, 32>}, {pipeline_mode = #tpu.pipeline_mode<synchronous>, transform_indices = @transform_4, window_bounds = array<i64: 1, 32>}]} {
    %c0_i32 = arith.constant 0 : i32
    %0 = arith.cmpi eq, %arg0, %c0_i32 : i32
    %1 = arith.extui %0 : i1 to i32
    %c0_i32_0 = arith.constant 0 : i32
    %2 = arith.cmpi ne, %1, %c0_i32_0 : i32
    scf.if %2 {
      %cst_16 = arith.constant 0.000000e+00 : f32
      %18 = vector.broadcast %cst_16 : f32 to vector<1x32xf32>
      %c0_17 = arith.constant 0 : index
      %c0_18 = arith.constant 0 : index
      %19 = vector.load %arg4[%c0_17, %c0_18] : memref<1x32xf32, #tpu.memory_space<vmem>>, vector<1x32xf32>
      tpu.vector_store %arg4[%c0_17, %c0_18], %18 {strides = array<i32>} : memref<1x32xf32, #tpu.memory_space<vmem>>, vector<1x32xf32>,
      %cst_19 = arith.constant 0.000000e+00 : f32
      %20 = vector.broadcast %cst_19 : f32 to vector<1x32xf32>
      %c0_20 = arith.constant 0 : index
      %c0_21 = arith.constant 0 : index
      %21 = vector.load %arg5[%c0_20, %c0_21] : memref<1x32xf32, #tpu.memory_space<vmem>>, vector<1x32xf32>
      tpu.vector_store %arg5[%c0_20, %c0_21], %20 {strides = array<i32>} : memref<1x32xf32, #tpu.memory_space<vmem>>, vector<1x32xf32>,
    } else {
    }
    %c0 = arith.constant 0 : index
    %c0_1 = arith.constant 0 : index
    %3 = vector.load %arg1[%c0, %c0_1] : memref<128x256xbf16, #tpu.memory_space<vmem>>, vector<128x256xbf16>
    %c0_2 = arith.constant 0 : index
    %c0_3 = arith.constant 0 : index
    %4 = vector.load %arg2[%c0_2, %c0_3] : memref<256x32xbf16, #tpu.memory_space<vmem>>, vector<256x32xbf16>
    %cst = arith.constant dense<0.000000e+00> : vector<128x32xf32>
    %5 = tpu.matmul %3, %4, %cst {dimension_numbers = #tpu.dot_dimension_numbers<[1], [0], [0], [1], [0, 0, 1, 1], [], []>} : vector<128x256xbf16>, vector<256x32xbf16>, vector<128x32xf32> -> vector<128x32xf32>
    %c0_4 = arith.constant 0 : index
    %c0_5 = arith.constant 0 : index
    %6 = vector.load %arg3[%c0_4, %c0_5] : memref<128x32xf32, #tpu.memory_space<vmem>>, vector<128x32xf32>
    tpu.vector_store %arg3[%c0_4, %c0_5], %5 {strides = array<i32>} : memref<128x32xf32, #tpu.memory_space<vmem>>, vector<128x32xf32>,
    %c0_6 = arith.constant 0 : index
    %c0_7 = arith.constant 0 : index
    %7 = vector.load %arg4[%c0_6, %c0_7] : memref<1x32xf32, #tpu.memory_space<vmem>>, vector<1x32xf32>
    %cst_8 = arith.constant dense<0.000000e+00> : vector<32xf32>
    %8 = vector.multi_reduction <add>, %5, %cst_8 [0] : vector<128x32xf32> to vector<32xf32>
    %9 = vector.shape_cast %8 : vector<32xf32> to vector<1x32xf32>
    %10 = arith.addf %7, %9 : vector<1x32xf32>
    %c0_9 = arith.constant 0 : index
    %c0_10 = arith.constant 0 : index
    %11 = vector.load %arg4[%c0_9, %c0_10] : memref<1x32xf32, #tpu.memory_space<vmem>>, vector<1x32xf32>
    tpu.vector_store %arg4[%c0_9, %c0_10], %10 {strides = array<i32>} : memref<1x32xf32, #tpu.memory_space<vmem>>, vector<1x32xf32>,
    %c0_11 = arith.constant 0 : index
    %c0_12 = arith.constant 0 : index
    %12 = vector.load %arg5[%c0_11, %c0_12] : memref<1x32xf32, #tpu.memory_space<vmem>>, vector<1x32xf32>
    %13 = arith.mulf %5, %5 : vector<128x32xf32>
    %cst_13 = arith.constant dense<0.000000e+00> : vector<32xf32>
    %14 = vector.multi_reduction <add>, %13, %cst_13 [0] : vector<128x32xf32> to vector<32xf32>
    %15 = vector.shape_cast %14 : vector<32xf32> to vector<1x32xf32>
    %16 = arith.addf %12, %15 : vector<1x32xf32>
    %c0_14 = arith.constant 0 : index
    %c0_15 = arith.constant 0 : index
    %17 = vector.load %arg5[%c0_14, %c0_15] : memref<1x32xf32, #tpu.memory_space<vmem>>, vector<1x32xf32>
    tpu.vector_store %arg5[%c0_14, %c0_15], %16 {strides = array<i32>} : memref<1x32xf32, #tpu.memory_space<vmem>>, vector<1x32xf32>,
    return
  }
  func.func @transform_0(%arg0: i32) -> (i32, i32) {
    %c0_i32 = arith.constant 0 : i32
    %c0_i32_0 = arith.constant 0 : i32
    return %arg0, %c0_i32 : i32, i32
  }
  func.func @transform_1(%arg0: i32) -> (i32, i32) {
    %c0_i32 = arith.constant 0 : i32
    %c0_i32_0 = arith.constant 0 : i32
    %c0_i32_1 = arith.constant 0 : i32
    return %c0_i32, %c0_i32_0 : i32, i32
  }
  func.func @transform_2(%arg0: i32) -> (i32, i32) {
    %c0_i32 = arith.constant 0 : i32
    %c0_i32_0 = arith.constant 0 : i32
    return %arg0, %c0_i32 : i32, i32
  }
  func.func @transform_3(%arg0: i32) -> (i32, i32) {
    %c0_i32 = arith.constant 0 : i32
    %c0_i32_0 = arith.constant 0 : i32
    %c0_i32_1 = arith.constant 0 : i32
    return %c0_i32, %c0_i32_0 : i32, i32
  }
  func.func @transform_4(%arg0: i32) -> (i32, i32) {
    %c0_i32 = arith.constant 0 : i32
    %c0_i32_0 = arith.constant 0 : i32
    %c0_i32_1 = arith.constant 0 : i32
    return %c0_i32, %c0_i32_0 : i32, i32
  }
}

module attributes {stable_mosaic.version = 11 : i64} {
  func.func @_matmul_stats_kernel(%arg0: i32, %arg1: memref<32x512xbf16, #tpu.memory_space<vmem>>, %arg2: memref<512x64xbf16, #tpu.memory_space<vmem>>, %arg3: memref<32x64xf32, #tpu.memory_space<vmem>>, %arg4: memref<1x64xf32, #tpu.memory_space<vmem>>, %arg5: memref<1x64xf32, #tpu.memory_space<vmem>>) attributes {dimension_semantics = [#tpu.dimension_semantics<arbitrary>], iteration_bounds = array<i64: 1>, scalar_prefetch = 0 : i64, scratch_operands = 0 : i64, tpu.core_type = #tpu.core_type<tc>, window_params = [{transform_indices = @transform_0, window_bounds = array<i64: 32, 512>}, {pipeline_mode = #tpu.pipeline_mode<synchronous>, transform_indices = @transform_1, window_bounds = array<i64: 512, 64>}, {transform_indices = @transform_2, window_bounds = array<i64: 32, 64>}, {pipeline_mode = #tpu.pipeline_mode<synchronous>, transform_indices = @transform_3, window_bounds = array<i64: 1, 64>}, {pipeline_mode = #tpu.pipeline_mode<synchronous>, transform_indices = @transform_4, window_bounds = array<i64: 1, 64>}]} {
    %c0_i32 = arith.constant 0 : i32
    %0 = arith.cmpi eq, %arg0, %c0_i32 : i32
    %1 = arith.extui %0 : i1 to i32
    %c0_i32_0 = arith.constant 0 : i32
    %2 = arith.cmpi ne, %1, %c0_i32_0 : i32
    scf.if %2 {
      %cst_16 = arith.constant 0.000000e+00 : f32
      %18 = vector.broadcast %cst_16 : f32 to vector<1x64xf32>
      %c0_17 = arith.constant 0 : index
      %c0_18 = arith.constant 0 : index
      %19 = vector.load %arg4[%c0_17, %c0_18] : memref<1x64xf32, #tpu.memory_space<vmem>>, vector<1x64xf32>
      tpu.vector_store %arg4[%c0_17, %c0_18], %18 {strides = array<i32>} : memref<1x64xf32, #tpu.memory_space<vmem>>, vector<1x64xf32>,
      %cst_19 = arith.constant 0.000000e+00 : f32
      %20 = vector.broadcast %cst_19 : f32 to vector<1x64xf32>
      %c0_20 = arith.constant 0 : index
      %c0_21 = arith.constant 0 : index
      %21 = vector.load %arg5[%c0_20, %c0_21] : memref<1x64xf32, #tpu.memory_space<vmem>>, vector<1x64xf32>
      tpu.vector_store %arg5[%c0_20, %c0_21], %20 {strides = array<i32>} : memref<1x64xf32, #tpu.memory_space<vmem>>, vector<1x64xf32>,
    } else {
    }
    %c0 = arith.constant 0 : index
    %c0_1 = arith.constant 0 : index
    %3 = vector.load %arg1[%c0, %c0_1] : memref<32x512xbf16, #tpu.memory_space<vmem>>, vector<32x512xbf16>
    %c0_2 = arith.constant 0 : index
    %c0_3 = arith.constant 0 : index
    %4 = vector.load %arg2[%c0_2, %c0_3] : memref<512x64xbf16, #tpu.memory_space<vmem>>, vector<512x64xbf16>
    %cst = arith.constant dense<0.000000e+00> : vector<32x64xf32>
    %5 = tpu.matmul %3, %4, %cst {dimension_numbers = #tpu.dot_dimension_numbers<[1], [0], [0], [1], [0, 0, 1, 1], [], []>} : vector<32x512xbf16>, vector<512x64xbf16>, vector<32x64xf32> -> vector<32x64xf32>
    %c0_4 = arith.constant 0 : index
    %c0_5 = arith.constant 0 : index
    %6 = vector.load %arg3[%c0_4, %c0_5] : memref<32x64xf32, #tpu.memory_space<vmem>>, vector<32x64xf32>
    tpu.vector_store %arg3[%c0_4, %c0_5], %5 {strides = array<i32>} : memref<32x64xf32, #tpu.memory_space<vmem>>, vector<32x64xf32>,
    %c0_6 = arith.constant 0 : index
    %c0_7 = arith.constant 0 : index
    %7 = vector.load %arg4[%c0_6, %c0_7] : memref<1x64xf32, #tpu.memory_space<vmem>>, vector<1x64xf32>
    %cst_8 = arith.constant dense<0.000000e+00> : vector<64xf32>
    %8 = vector.multi_reduction <add>, %5, %cst_8 [0] : vector<32x64xf32> to vector<64xf32>
    %9 = vector.shape_cast %8 : vector<64xf32> to vector<1x64xf32>
    %10 = arith.addf %7, %9 : vector<1x64xf32>
    %c0_9 = arith.constant 0 : index
    %c0_10 = arith.constant 0 : index
    %11 = vector.load %arg4[%c0_9, %c0_10] : memref<1x64xf32, #tpu.memory_space<vmem>>, vector<1x64xf32>
    tpu.vector_store %arg4[%c0_9, %c0_10], %10 {strides = array<i32>} : memref<1x64xf32, #tpu.memory_space<vmem>>, vector<1x64xf32>,
    %c0_11 = arith.constant 0 : index
    %c0_12 = arith.constant 0 : index
    %12 = vector.load %arg5[%c0_11, %c0_12] : memref<1x64xf32, #tpu.memory_space<vmem>>, vector<1x64xf32>
    %13 = arith.mulf %5, %5 : vector<32x64xf32>
    %cst_13 = arith.constant dense<0.000000e+00> : vector<64xf32>
    %14 = vector.multi_reduction <add>, %13, %cst_13 [0] : vector<32x64xf32> to vector<64xf32>
    %15 = vector.shape_cast %14 : vector<64xf32> to vector<1x64xf32>
    %16 = arith.addf %12, %15 : vector<1x64xf32>
    %c0_14 = arith.constant 0 : index
    %c0_15 = arith.constant 0 : index
    %17 = vector.load %arg5[%c0_14, %c0_15] : memref<1x64xf32, #tpu.memory_space<vmem>>, vector<1x64xf32>
    tpu.vector_store %arg5[%c0_14, %c0_15], %16 {strides = array<i32>} : memref<1x64xf32, #tpu.memory_space<vmem>>, vector<1x64xf32>,
    return
  }
  func.func @transform_0(%arg0: i32) -> (i32, i32) {
    %c0_i32 = arith.constant 0 : i32
    %c0_i32_0 = arith.constant 0 : i32
    return %arg0, %c0_i32 : i32, i32
  }
  func.func @transform_1(%arg0: i32) -> (i32, i32) {
    %c0_i32 = arith.constant 0 : i32
    %c0_i32_0 = arith.constant 0 : i32
    %c0_i32_1 = arith.constant 0 : i32
    return %c0_i32, %c0_i32_0 : i32, i32
  }
  func.func @transform_2(%arg0: i32) -> (i32, i32) {
    %c0_i32 = arith.constant 0 : i32
    %c0_i32_0 = arith.constant 0 : i32
    return %arg0, %c0_i32 : i32, i32
  }
  func.func @transform_3(%arg0: i32) -> (i32, i32) {
    %c0_i32 = arith.constant 0 : i32
    %c0_i32_0 = arith.constant 0 : i32
    %c0_i32_1 = arith.constant 0 : i32
    return %c0_i32, %c0_i32_0 : i32, i32
  }
  func.func @transform_4(%arg0: i32) -> (i32, i32) {
    %c0_i32 = arith.constant 0 : i32
    %c0_i32_0 = arith.constant 0 : i32
    %c0_i32_1 = arith.constant 0 : i32
    return %c0_i32, %c0_i32_0 : i32, i32
  }
}

module attributes {stable_mosaic.version = 11 : i64} {
  func.func @kernel(%arg0: i32, %arg1: memref<32x64xf32, #tpu.memory_space<vmem>>, %arg2: memref<1x64xf32, #tpu.memory_space<vmem>>, %arg3: memref<1x64xf32, #tpu.memory_space<vmem>>, %arg4: memref<32x64xf32, #tpu.memory_space<vmem>>) attributes {dimension_semantics = [#tpu.dimension_semantics<parallel>], iteration_bounds = array<i64: 1>, scalar_prefetch = 0 : i64, scratch_operands = 0 : i64, tpu.core_type = #tpu.core_type<tc>, window_params = [{transform_indices = @transform_0, window_bounds = array<i64: 32, 64>}, {pipeline_mode = #tpu.pipeline_mode<synchronous>, transform_indices = @transform_1, window_bounds = array<i64: 1, 64>}, {pipeline_mode = #tpu.pipeline_mode<synchronous>, transform_indices = @transform_2, window_bounds = array<i64: 1, 64>}, {transform_indices = @transform_3, window_bounds = array<i64: 32, 64>}]} {
    %c0 = arith.constant 0 : index
    %c0_0 = arith.constant 0 : index
    %0 = vector.load %arg1[%c0, %c0_0] : memref<32x64xf32, #tpu.memory_space<vmem>>, vector<32x64xf32>
    %c0_1 = arith.constant 0 : index
    %c0_2 = arith.constant 0 : index
    %1 = vector.load %arg2[%c0_1, %c0_2] : memref<1x64xf32, #tpu.memory_space<vmem>>, vector<1x64xf32>
    %cst = arith.constant 3.125000e-02 : f32
    %2 = vector.broadcast %cst : f32 to vector<1x64xf32>
    %3 = arith.mulf %1, %2 : vector<1x64xf32>
    %c0_3 = arith.constant 0 : index
    %c0_4 = arith.constant 0 : index
    %4 = vector.load %arg3[%c0_3, %c0_4] : memref<1x64xf32, #tpu.memory_space<vmem>>, vector<1x64xf32>
    %cst_5 = arith.constant 3.125000e-02 : f32
    %5 = vector.broadcast %cst_5 : f32 to vector<1x64xf32>
    %6 = arith.mulf %4, %5 : vector<1x64xf32>
    %7 = arith.mulf %3, %3 : vector<1x64xf32>
    %8 = arith.subf %6, %7 : vector<1x64xf32>
    %cst_6 = arith.constant 0.000000e+00 : f32
    %9 = vector.broadcast %cst_6 : f32 to vector<1x64xf32>
    %10 = arith.maximumf %8, %9 : vector<1x64xf32>
    %11 = vector.broadcast %3 : vector<1x64xf32> to vector<32x64xf32>
    %12 = arith.subf %0, %11 : vector<32x64xf32>
    %cst_7 = arith.constant 9.99999974E-6 : f32
    %13 = vector.broadcast %cst_7 : f32 to vector<1x64xf32>
    %14 = arith.addf %10, %13 : vector<1x64xf32>
    %15 = math.rsqrt %14 : vector<1x64xf32>
    %16 = vector.broadcast %15 : vector<1x64xf32> to vector<32x64xf32>
    %17 = arith.mulf %12, %16 : vector<32x64xf32>
    %cst_8 = arith.constant 0.000000e+00 : f32
    %18 = vector.broadcast %cst_8 : f32 to vector<32x64xf32>
    %19 = arith.cmpf oge, %17, %18 : vector<32x64xf32>
    %cst_9 = arith.constant 2.000000e-01 : f32
    %20 = vector.broadcast %cst_9 : f32 to vector<32x64xf32>
    %21 = arith.mulf %20, %17 : vector<32x64xf32>
    %22 = arith.select %19, %17, %21 : vector<32x64xi1>, vector<32x64xf32>
    %c0_10 = arith.constant 0 : index
    %c0_11 = arith.constant 0 : index
    %23 = vector.load %arg4[%c0_10, %c0_11] : memref<32x64xf32, #tpu.memory_space<vmem>>, vector<32x64xf32>
    tpu.vector_store %arg4[%c0_10, %c0_11], %22 {strides = array<i32>} : memref<32x64xf32, #tpu.memory_space<vmem>>, vector<32x64xf32>,
    return
  }
  func.func @transform_0(%arg0: i32) -> (i32, i32) {
    %c0_i32 = arith.constant 0 : i32
    %c0_i32_0 = arith.constant 0 : i32
    return %arg0, %c0_i32 : i32, i32
  }
  func.func @transform_1(%arg0: i32) -> (i32, i32) {
    %c0_i32 = arith.constant 0 : i32
    %c0_i32_0 = arith.constant 0 : i32
    %c0_i32_1 = arith.constant 0 : i32
    return %c0_i32, %c0_i32_0 : i32, i32
  }
  func.func @transform_2(%arg0: i32) -> (i32, i32) {
    %c0_i32 = arith.constant 0 : i32
    %c0_i32_0 = arith.constant 0 : i32
    %c0_i32_1 = arith.constant 0 : i32
    return %c0_i32, %c0_i32_0 : i32, i32
  }
  func.func @transform_3(%arg0: i32) -> (i32, i32) {
    %c0_i32 = arith.constant 0 : i32
    %c0_i32_0 = arith.constant 0 : i32
    return %arg0, %c0_i32 : i32, i32
  }
}

module attributes {stable_mosaic.version = 11 : i64} {
  func.func @kernel(%arg0: i32, %arg1: memref<2x1024xbf16, #tpu.memory_space<vmem>>, %arg2: memref<1024x128xbf16, #tpu.memory_space<vmem>>, %arg3: memref<2x128xf32, #tpu.memory_space<vmem>>) attributes {dimension_semantics = [#tpu.dimension_semantics<parallel>], iteration_bounds = array<i64: 1>, scalar_prefetch = 0 : i64, scratch_operands = 0 : i64, tpu.core_type = #tpu.core_type<tc>, window_params = [{transform_indices = @transform_0, window_bounds = array<i64: 2, 1024>}, {pipeline_mode = #tpu.pipeline_mode<synchronous>, transform_indices = @transform_1, window_bounds = array<i64: 1024, 128>}, {transform_indices = @transform_2, window_bounds = array<i64: 2, 128>}]} {
    %c0 = arith.constant 0 : index
    %c0_0 = arith.constant 0 : index
    %0 = vector.load %arg1[%c0, %c0_0] : memref<2x1024xbf16, #tpu.memory_space<vmem>>, vector<2x1024xbf16>
    %c0_1 = arith.constant 0 : index
    %c0_2 = arith.constant 0 : index
    %1 = vector.load %arg2[%c0_1, %c0_2] : memref<1024x128xbf16, #tpu.memory_space<vmem>>, vector<1024x128xbf16>
    %cst = arith.constant dense<0.000000e+00> : vector<2x128xf32>
    %2 = tpu.matmul %0, %1, %cst {dimension_numbers = #tpu.dot_dimension_numbers<[1], [0], [0], [1], [0, 0, 1, 1], [], []>} : vector<2x1024xbf16>, vector<1024x128xbf16>, vector<2x128xf32> -> vector<2x128xf32>
    %cst_3 = arith.constant 0.000000e+00 : f32
    %3 = vector.broadcast %cst_3 : f32 to vector<2x128xf32>
    %4 = arith.subf %3, %2 : vector<2x128xf32>
    %5 = math.exp %4 : vector<2x128xf32>
    %cst_4 = arith.constant 1.000000e+00 : f32
    %6 = vector.broadcast %cst_4 : f32 to vector<2x128xf32>
    %7 = arith.addf %6, %5 : vector<2x128xf32>
    %cst_5 = arith.constant 1.000000e+00 : f32
    %8 = vector.broadcast %cst_5 : f32 to vector<2x128xf32>
    %9 = arith.divf %8, %7 : vector<2x128xf32>
    %c0_6 = arith.constant 0 : index
    %c0_7 = arith.constant 0 : index
    %10 = vector.load %arg3[%c0_6, %c0_7] : memref<2x128xf32, #tpu.memory_space<vmem>>, vector<2x128xf32>
    tpu.vector_store %arg3[%c0_6, %c0_7], %9 {strides = array<i32>} : memref<2x128xf32, #tpu.memory_space<vmem>>, vector<2x128xf32>,
    return
  }
  func.func @transform_0(%arg0: i32) -> (i32, i32) {
    %c0_i32 = arith.constant 0 : i32
    %c0_i32_0 = arith.constant 0 : i32
    return %arg0, %c0_i32 : i32, i32
  }
  func.func @transform_1(%arg0: i32) -> (i32, i32) {
    %c0_i32 = arith.constant 0 : i32
    %c0_i32_0 = arith.constant 0 : i32
    %c0_i32_1 = arith.constant 0 : i32
    return %c0_i32, %c0_i32_0 : i32, i32
  }
  func.func @transform_2(%arg0: i32) -> (i32, i32) {
    %c0_i32 = arith.constant 0 : i32
    %c0_i32_0 = arith.constant 0 : i32
    return %arg0, %c0_i32 : i32, i32
  }
}

</mosaic_0001>

<llo_original>
// kernel: conv_discriminator_forward.8
$region0: #{conv_discriminator_forward.8}
  #allocation0 [shape = 'u32[]', space=smem, size = 0x4, offset = 0x4, fixed_abs, tag = 'smem constant byte address 0x4 - core index']
  #allocation1 [shape = 'u32[144,128]{1,0:T(1,128)}', space=vmem, size = 0x12000, scoped, tag = 'internal scratch']
  %s0 = inlined_call_operand.vmem [shape: bf16[2048,48], index: 0, kind: input, shape index: {}]
  %s1 = inlined_call_operand.vmem [shape: bf16[48,8], index: 1, kind: input, shape index: {}]
  %s2 = inlined_call_operand.vmem [shape: f32[2048,8], index: 2, kind: output, shape index: {}]
  %s3 = sld [smem:[#allocation0]]
  $region41: #{conv_discriminator_forward.8} parent=0
    _
  %s5 = ssub.s32 1, %s3
  %s6 = scalar_select 0, %s5, %s3
  loop: start=0, step=1, limit=6
  $region2: #{conv_discriminator_forward.8} parent=0 // loop_pre_header
    _
  $region3: #{conv_discriminator_forward.8} parent=0 // loop_header
    %s8 = sphi 0, %s12
    %p9 = scmp.ge.s32.totalorder %s8, 6
    %s18 = sphi 0, %s20
    %s21 = sphi 0, %s18
    %s22 = sphi 0, %s21
    %s38 = sphi 0, %s22
    %s42 = sphi 0, %s42
    %s44 = sphi 0, %s42
    %s45 = sphi 0, %s44
    %s59 = sphi 0, %s45
    %s65 = sphi 0, %s67
    %s68 = sphi 0, %s65
    %s69 = sphi 0, %s68
    %s85 = sphi 0, %s69
  $region4: #{conv_discriminator_forward.8} parent=0 // loop_header_branch
    %11 = sbr.rel (%p9) target = $region8
  $region5: #{conv_discriminator_forward.8} parent=0 // loop_body
    %s13 = ssub.s32 %s8, 1
    %s14 = ssub.s32 %s8, 2
    %s15 = sadd.s32 %s8, 1
    %s16 = ssub.s32 %s8, %s15
    %p17 = scmp.eq.s32.totalorder %s16, 0
    %s19 = sadd.s32 %s18, 1
    %s20 = scalar_select %p17, %s18, %s19
    %p23 = pneg %p17
    %p24 = scmp.eq.s32.totalorder %s8, 3
    %p25 = por %p23, %p24
    %p26 = scmp.ne.s32.totalorder %s18, %s21
    %p27 = scmp.eq.s32.totalorder %s8, 0
    %p28 = por %p26, %p27
    %p29 = scmp.ne.s32.totalorder %s18, %s21
    %p30 = scmp.eq.s32.totalorder %s13, 3
    %p31 = por %p29, %p30
    %p32 = scmp.ne.s32.totalorder %s21, %s22
    %p33 = scmp.eq.s32.totalorder %s13, 0
    %p34 = por %p32, %p33
    %p35 = scmp.ne.s32.totalorder %s21, %s22
    %p36 = scmp.eq.s32.totalorder %s14, 3
    %p37 = por %p35, %p36
    %p39 = scmp.ne.s32.totalorder %s22, %s38
    %p40 = scmp.eq.s32.totalorder %s14, 0
    %p41 = por %p39, %p40
    %s43 = sadd.s32 %s42, 1
    %p46 = scmp.eq.s32.totalorder %s8, 3
    %p47 = scmp.ne.s32.totalorder %s42, %s44
    %p48 = scmp.eq.s32.totalorder %s8, 0
    %p49 = por %p47, %p48
    %p50 = scmp.ne.s32.totalorder %s42, %s44
    %p51 = scmp.eq.s32.totalorder %s13, 3
    %p52 = por %p50, %p51
    %p53 = scmp.ne.s32.totalorder %s44, %s45
    %p54 = scmp.eq.s32.totalorder %s13, 0
    %p55 = por %p53, %p54
    %p56 = scmp.ne.s32.totalorder %s44, %s45
    %p57 = scmp.eq.s32.totalorder %s14, 3
    %p58 = por %p56, %p57
    %p60 = scmp.ne.s32.totalorder %s45, %s59
    %p61 = scmp.eq.s32.totalorder %s14, 0
    %p62 = por %p60, %p61
    %s63 = ssub.s32 %s8, %s15
    %p64 = scmp.eq.s32.totalorder %s63, 0
    %s66 = sadd.s32 %s65, 1
    %s67 = scalar_select %p64, %s65, %s66
    %p70 = pneg %p64
    %p71 = scmp.eq.s32.totalorder %s8, 3
    %p72 = por %p70, %p71
    %p73 = scmp.ne.s32.totalorder %s65, %s68
    %p74 = scmp.eq.s32.totalorder %s8, 0
    %p75 = por %p73, %p74
    %p76 = scmp.ne.s32.totalorder %s65, %s68
    %p77 = scmp.eq.s32.totalorder %s13, 3
    %p78 = por %p76, %p77
    %p79 = scmp.ne.s32.totalorder %s68, %s69
    %p80 = scmp.eq.s32.totalorder %s13, 0
    %p81 = por %p79, %p80
    %p82 = scmp.ne.s32.totalorder %s68, %s69
    %p83 = scmp.eq.s32.totalorder %s14, 3
    %p84 = por %p82, %p83
    %p86 = scmp.ne.s32.totalorder %s69, %s85
    %p87 = scmp.eq.s32.totalorder %s14, 0
    %p88 = por %p86, %p87
    %p89 = scmp.le.s32.totalorder 1, %s8
    %p90 = scmp.lt.s32.totalorder %s8, 5
    %p91 = pnand %p89, %p90
    %p92 = pneg %p91
    // Predicated region
    $region9: #{conv_discriminator_forward.8} parent=5 // pred_check
      _
    $region10: #{conv_discriminator_forward.8} parent=5 // pred_check_branch
      %94 = sbr.rel (%p91) target = $region12
    $region11: #{conv_discriminator_forward.8} parent=5 // pred_region
      %s95 = ssub.s32 %s8, 1
      // Predicated region
      $region13: #{conv_discriminator_forward.8} parent=11 // pred_check
        %p96 = pneg %p55
      $region14: #{conv_discriminator_forward.8} parent=11 // pred_check_branch
        %98 = sbr.rel (%p96) target = $region16
      $region15: #{conv_discriminator_forward.8} parent=11 // pred_region
        _
      $region16: #{conv_discriminator_forward.8} parent=11 // pred_fallthru
        _
    $region12: #{conv_discriminator_forward.8} parent=5 // pred_fallthru
      _
    %p99 = scmp.lt.s32.totalorder %s8, 4
    // Predicated region
    $region17: #{conv_discriminator_forward.8} parent=5 // pred_check
      %p100 = pneg %p99
    $region18: #{conv_discriminator_forward.8} parent=5 // pred_check_branch
      %102 = sbr.rel (%p100) target = $region20
    $region19: #{conv_discriminator_forward.8} parent=5 // pred_region
      // Predicated region
      $region21: #{conv_discriminator_forward.8} parent=19 // pred_check
        %p103 = pneg %p28
      $region22: #{conv_discriminator_forward.8} parent=19 // pred_check_branch
        %105 = sbr.rel (%p103) target = $region24
      $region23: #{conv_discriminator_forward.8} parent=19 // pred_region
        %s106 = smul.u32 64, %s8
        %p107 = scmp.lt.s32.totalorder %s106, 255
        %s108 = scalar_select %p107, %s106, 255
        %s109 = smul.addr %s108, 4
        %s110 = scalar_lea.vmem %s0, %s109
        %s111 = smul.u32 64, %s8
      $region24: #{conv_discriminator_forward.8} parent=19 // pred_fallthru
        _
    $region20: #{conv_discriminator_forward.8} parent=5 // pred_fallthru
      _
    %p112 = scmp.le.s32.totalorder 1, %s8
    %p113 = scmp.lt.s32.totalorder %s8, 5
    %p114 = pnand %p112, %p113
    %p115 = pneg %p114
    // Predicated region
    $region25: #{conv_discriminator_forward.8} parent=5 // pred_check
      _
    $region26: #{conv_discriminator_forward.8} parent=5 // pred_check_branch
      %117 = sbr.rel (%p114) target = $region28
    $region27: #{conv_discriminator_forward.8} parent=5 // pred_region
      %s118 = ssub.s32 %s8, 1
      %s119 = smul.u32 64, %s13
      %p120 = scmp.lt.s32.totalorder %s119, 255
      %s121 = scalar_select %p120, %s119, 255
      %s122 = smul.addr %s121, 4
      %s123 = scalar_lea.vmem %s0, %s122
      %p124 = pneg %p34
      %p125 = pneg %p31
      %p126 = pneg %p55
      %p127 = pneg %p52
      %p128 = pneg %p81
      %p129 = pneg %p78
      %s130 = smul.u32 64, %s13
      %p131 = scmp.lt.s32.totalorder %s130, 255
      %s132 = scalar_select %p131, %s130, 255
      %s133 = smul.addr %s132, 8
      %s134 = scalar_lea.vmem %s2, %s133
      %s135 = smul.u32 64, %s13
      %p136 = scmp.lt.s32.totalorder %s135, 255
      %s137 = scalar_select %p136, %s135, 255
      %s138 = smul.addr %s137, 4
      %s139 = scalar_lea.vmem %s0, %s138
      %s140 = smul.u32 64, %s13
      %s141 = smul.u32 64, %s13
      %p142 = scmp.lt.s32.totalorder %s141, 255
      %s143 = scalar_select %p142, %s141, 255
      %s144 = smul.addr %s143, 8
      %s145 = scalar_lea.vmem %s2, %s144
      %s146 = smul.u32 64, %s13
      %v148 = vld [vmem:[%s139] sm:$0xf]
      %v149 = vld [vmem:[%s139 + $0x4] sm:$0xf]
      %v150 = vld [vmem:[%s139 + $0x8] sm:$0xf]
      %v151 = vld [vmem:[%s139 + $0xc] sm:$0xf]
      %v152 = vld [vmem:[%s139 + $0x10] sm:$0xf]
      %v153 = vld [vmem:[%s139 + $0x14] sm:$0xf]
      %v154 = vld [vmem:[%s139 + $0x18] sm:$0xf]
      %v155 = vld [vmem:[%s139 + $0x1c] sm:$0xf]
      %v156 = vld [vmem:[%s139 + $0x20] sm:$0xf]
      %v157 = vld [vmem:[%s139 + $0x24] sm:$0xf]
      %v158 = vld [vmem:[%s139 + $0x28] sm:$0xf]
      %v159 = vld [vmem:[%s139 + $0x2c] sm:$0xf]
      %v160 = vld [vmem:[%s139 + $0x30] sm:$0xf]
      %v161 = vld [vmem:[%s139 + $0x34] sm:$0xf]
      %v162 = vld [vmem:[%s139 + $0x38] sm:$0xf]
      %v163 = vld [vmem:[%s139 + $0x3c] sm:$0xf]
      %v164 = vld [vmem:[%s139 + $0x40] sm:$0xf]
      %v165 = vld [vmem:[%s139 + $0x44] sm:$0xf]
      %v166 = vld [vmem:[%s139 + $0x48] sm:$0xf]
      %v167 = vld [vmem:[%s139 + $0x4c] sm:$0xf]
      %v168 = vld [vmem:[%s139 + $0x50] sm:$0xf]
      %v169 = vld [vmem:[%s139 + $0x54] sm:$0xf]
      %v170 = vld [vmem:[%s139 + $0x58] sm:$0xf]
      %v171 = vld [vmem:[%s139 + $0x5c] sm:$0xf]
      %v172 = vld [vmem:[%s139 + $0x60] sm:$0xf]
      %v173 = vld [vmem:[%s139 + $0x64] sm:$0xf]
      %v174 = vld [vmem:[%s139 + $0x68] sm:$0xf]
      %v175 = vld [vmem:[%s139 + $0x6c] sm:$0xf]
      %v176 = vld [vmem:[%s139 + $0x70] sm:$0xf]
      %v177 = vld [vmem:[%s139 + $0x74] sm:$0xf]
      %v178 = vld [vmem:[%s139 + $0x78] sm:$0xf]
      %v179 = vld [vmem:[%s139 + $0x7c] sm:$0xf]
      %v180 = vld [vmem:[%s139 + $0x80] sm:$0xf]
      %v181 = vld [vmem:[%s139 + $0x84] sm:$0xf]
      %v182 = vld [vmem:[%s139 + $0x88] sm:$0xf]
      %v183 = vld [vmem:[%s139 + $0x8c] sm:$0xf]
      %v184 = vld [vmem:[%s139 + $0x90] sm:$0xf]
      %v185 = vld [vmem:[%s139 + $0x94] sm:$0xf]
      %v186 = vld [vmem:[%s139 + $0x98] sm:$0xf]
      %v187 = vld [vmem:[%s139 + $0x9c] sm:$0xf]
      %v188 = vld [vmem:[%s139 + $0xa0] sm:$0xf]
      %v189 = vld [vmem:[%s139 + $0xa4] sm:$0xf]
      %v190 = vld [vmem:[%s139 + $0xa8] sm:$0xf]
      %v191 = vld [vmem:[%s139 + $0xac] sm:$0xf]
      %v192 = vld [vmem:[%s139 + $0xb0] sm:$0xf]
      %v193 = vld [vmem:[%s139 + $0xb4] sm:$0xf]
      %v194 = vld [vmem:[%s139 + $0xb8] sm:$0xf]
      %v195 = vld [vmem:[%s139 + $0xbc] sm:$0xf]
      %v196 = vld [vmem:[%s139 + $0xc0] sm:$0xf]
      %v197 = vld [vmem:[%s139 + $0xc4] sm:$0xf]
      %v198 = vld [vmem:[%s139 + $0xc8] sm:$0xf]
      %v199 = vld [vmem:[%s139 + $0xcc] sm:$0xf]
      %v200 = vld [vmem:[%s139 + $0xd0] sm:$0xf]
      %v201 = vld [vmem:[%s139 + $0xd4] sm:$0xf]
      %v202 = vld [vmem:[%s139 + $0xd8] sm:$0xf]
      %v203 = vld [vmem:[%s139 + $0xdc] sm:$0xf]
      %v204 = vld [vmem:[%s139 + $0xe0] sm:$0xf]
      %v205 = vld [vmem:[%s139 + $0xe4] sm:$0xf]
      %v206 = vld [vmem:[%s139 + $0xe8] sm:$0xf]
      %v207 = vld [vmem:[%s139 + $0xec] sm:$0xf]
      %v208 = vld [vmem:[%s139 + $0xf0] sm:$0xf]
      %v209 = vld [vmem:[%s139 + $0xf4] sm:$0xf]
      %v210 = vld [vmem:[%s139 + $0xf8] sm:$0xf]
      %v211 = vld [vmem:[%s139 + $0xfc] sm:$0xf]
      %v212 = vld [vmem:[%s1] sm:$0xf]
      %v213 = vld [vmem:[%s1 + $0x4] sm:$0xf]
      %v214 = vld [vmem:[%s1 + $0x8] sm:$0xf]
      %v215 = vld [vmem:[%s1 + $0xc] sm:$0xf]
      %v216 = vld [vmem:[%s1 + $0x10] sm:$0xf]
      %v217 = vld [vmem:[%s1 + $0x14] sm:$0xf]
      %v282 = vunpack.c.l.b16 %v148
      %v283 = vunpack.c.l.b16 %v149
      %v284 = vunpack.c.l.b16 %v150
      %v285 = vunpack.c.l.b16 %v151
      %v286 = vunpack.c.l.b16 %v152
      %v287 = vunpack.c.l.b16 %v153
      %v288 = vunpack.c.l.b16 %v154
      %v289 = vunpack.c.l.b16 %v155
      %v290 = vunpack.c.l.b16 %v156
      %v291 = vunpack.c.l.b16 %v157
      %v292 = vunpack.c.l.b16 %v158
      %v293 = vunpack.c.l.b16 %v159
      %v294 = vunpack.c.l.b16 %v160
      %v295 = vunpack.c.l.b16 %v161
      %v296 = vunpack.c.l.b16 %v162
      %v297 = vunpack.c.l.b16 %v163
      %v298 = vunpack.c.l.b16 %v164
      %v299 = vunpack.c.l.b16 %v165
      %v300 = vunpack.c.l.b16 %v166
      %v301 = vunpack.c.l.b16 %v167
      %v302 = vunpack.c.l.b16 %v168
      %v303 = vunpack.c.l.b16 %v169
      %v304 = vunpack.c.l.b16 %v170
      %v305 = vunpack.c.l.b16 %v171
      %v306 = vunpack.c.l.b16 %v172
      %v307 = vunpack.c.l.b16 %v173
      %v308 = vunpack.c.l.b16 %v174
      %v309 = vunpack.c.l.b16 %v175
      %v310 = vunpack.c.l.b16 %v176
      %v311 = vunpack.c.l.b16 %v177
      %v312 = vunpack.c.l.b16 %v178
      %v313 = vunpack.c.l.b16 %v179
      %v314 = vunpack.c.l.b16 %v180
      %v315 = vunpack.c.l.b16 %v181
      %v316 = vunpack.c.l.b16 %v182
      %v317 = vunpack.c.l.b16 %v183
      %v318 = vunpack.c.l.b16 %v184
      %v319 = vunpack.c.l.b16 %v185
      %v320 = vunpack.c.l.b16 %v186
      %v321 = vunpack.c.l.b16 %v187
      %v322 = vunpack.c.l.b16 %v188
      %v323 = vunpack.c.l.b16 %v189
      %v324 = vunpack.c.l.b16 %v190
      %v325 = vunpack.c.l.b16 %v191
      %v326 = vunpack.c.l.b16 %v192
      %v327 = vunpack.c.l.b16 %v193
      %v328 = vunpack.c.l.b16 %v194
      %v329 = vunpack.c.l.b16 %v195
      %v330 = vunpack.c.l.b16 %v196
      %v331 = vunpack.c.l.b16 %v197
      %v332 = vunpack.c.l.b16 %v198
      %v333 = vunpack.c.l.b16 %v199
      %v334 = vunpack.c.l.b16 %v200
      %v335 = vunpack.c.l.b16 %v201
      %v336 = vunpack.c.l.b16 %v202
      %v337 = vunpack.c.l.b16 %v203
      %v338 = vunpack.c.l.b16 %v204
      %v339 = vunpack.c.l.b16 %v205
      %v340 = vunpack.c.l.b16 %v206
      %v341 = vunpack.c.l.b16 %v207
      %v342 = vunpack.c.l.b16 %v208
      %v343 = vunpack.c.l.b16 %v209
      %v344 = vunpack.c.l.b16 %v210
      %v345 = vunpack.c.l.b16 %v211
      %v346 = vpack.c.b16 %v283, %v282
      %v347 = vpack.c.b16 %v285, %v284
      %v348 = vpack.c.b16 %v287, %v286
      %v349 = vpack.c.b16 %v289, %v288
      %v350 = vpack.c.b16 %v291, %v290
      %v351 = vpack.c.b16 %v293, %v292
      %v352 = vpack.c.b16 %v295, %v294
      %v353 = vpack.c.b16 %v297, %v296
      %v354 = vpack.c.b16 %v299, %v298
      %v355 = vpack.c.b16 %v301, %v300
      %v356 = vpack.c.b16 %v303, %v302
      %v357 = vpack.c.b16 %v305, %v304
      %v358 = vpack.c.b16 %v307, %v306
      %v359 = vpack.c.b16 %v309, %v308
      %v360 = vpack.c.b16 %v311, %v310
      %v361 = vpack.c.b16 %v313, %v312
      %v362 = vpack.c.b16 %v315, %v314
      %v363 = vpack.c.b16 %v317, %v316
      %v364 = vpack.c.b16 %v319, %v318
      %v365 = vpack.c.b16 %v321, %v320
      %v366 = vpack.c.b16 %v323, %v322
      %v367 = vpack.c.b16 %v325, %v324
      %v368 = vpack.c.b16 %v327, %v326
      %v369 = vpack.c.b16 %v329, %v328
      %v370 = vpack.c.b16 %v331, %v330
      %v371 = vpack.c.b16 %v333, %v332
      %v372 = vpack.c.b16 %v335, %v334
      %v373 = vpack.c.b16 %v337, %v336
      %v374 = vpack.c.b16 %v339, %v338
      %v375 = vpack.c.b16 %v341, %v340
      %v376 = vpack.c.b16 %v343, %v342
      %v377 = vpack.c.b16 %v345, %v344
      %v384 = vunpack.c.l.b16 %v212
      %v385 = vunpack.c.l.b16 %v213
      %v386 = vunpack.c.l.b16 %v214
      %v387 = vunpack.c.l.b16 %v215
      %v388 = vunpack.c.l.b16 %v216
      %v389 = vunpack.c.l.b16 %v217
      %v390 = vpack.c.b16 %v385, %v384
      %v391 = vpack.c.b16 %v387, %v386
      %v392 = vpack.c.b16 %v389, %v388
      %vm396 = vcmask 392192
      %v398 = vsel %vm396, %v346, 0
      %v401 = vsel %vm396, %v347, 0
      %v404 = vsel %vm396, %v348, 0
      %v407 = vsel %vm396, %v349, 0
      %v410 = vsel %vm396, %v350, 0
      %v413 = vsel %vm396, %v351, 0
      %v416 = vsel %vm396, %v352, 0
      %v419 = vsel %vm396, %v353, 0
      %v422 = vsel %vm396, %v354, 0
      %v425 = vsel %vm396, %v355, 0
      %v428 = vsel %vm396, %v356, 0
      %v431 = vsel %vm396, %v357, 0
      %v434 = vsel %vm396, %v358, 0
      %v437 = vsel %vm396, %v359, 0
      %v440 = vsel %vm396, %v360, 0
      %v443 = vsel %vm396, %v361, 0
      %v446 = vsel %vm396, %v362, 0
      %v449 = vsel %vm396, %v363, 0
      %v452 = vsel %vm396, %v364, 0
      %v455 = vsel %vm396, %v365, 0
      %v458 = vsel %vm396, %v366, 0
      %v461 = vsel %vm396, %v367, 0
      %v464 = vsel %vm396, %v368, 0
      %v467 = vsel %vm396, %v369, 0
      %v470 = vsel %vm396, %v370, 0
      %v473 = vsel %vm396, %v371, 0
      %v476 = vsel %vm396, %v372, 0
      %v479 = vsel %vm396, %v373, 0
      %v482 = vsel %vm396, %v374, 0
      %v485 = vsel %vm396, %v375, 0
      %v488 = vsel %vm396, %v376, 0
      %v491 = vsel %vm396, %v377, 0
      %493 = vmatprep.subr.bf16.mxu0 0
      %494 = vmatpush1.bf16.msra.mxu0 %v390
      %495 = vmatprep.subr.bf16.mxu0 0
      %496 = vmatpush1.bf16.msra.mxu0 %v391
      %497 = vmatprep.subr.bf16.mxu0 0
      %498 = vmatpush1.bf16.msra.mxu0 %v392
      %499 = vmatprep.subr.bf16.mxu0 0
      %500 = vmatpush1.bf16.msra.mxu0 0
      %501 = vmatprep.subr.bf16.mxu0 0
      %502 = vmatpush1.bf16.msra.mxu0 0
      %503 = vmatprep.subr.bf16.mxu0 0
      %504 = vmatpush1.bf16.msra.mxu0 0
      %505 = vmatprep.subr.bf16.mxu0 0
      %506 = vmatpush1.bf16.msra.mxu0 0
      %507 = vmatprep.subr.bf16.mxu0 0
      %508 = vmatpush1.bf16.msra.mxu0 0
      %509 = vmatprep.subr.bf16.mxu0 0
      %510 = vmatpush1.bf16.msra.mxu0 0
      %511 = vmatprep.subr.bf16.mxu0 0
      %512 = vmatpush1.bf16.msra.mxu0 0
      %513 = vmatprep.subr.bf16.mxu0 0
      %514 = vmatpush1.bf16.msra.mxu0 0
      %515 = vmatprep.subr.bf16.mxu0 0
      %516 = vmatpush1.bf16.msra.mxu0 0
      %517 = vmatprep.subr.bf16.mxu0 0
      %518 = vmatpush1.bf16.msra.mxu0 0
      %519 = vmatprep.subr.bf16.mxu0 0
      %520 = vmatpush1.bf16.msra.mxu0 0
      %521 = vmatprep.subr.bf16.mxu0 0
      %522 = vmatpush1.bf16.msra.mxu0 0
      %523 = vmatprep.subr.bf16.mxu0 0
      %524 = vmatpush1.bf16.msra.mxu0 0
      %525 = vmatprep.mubr.bf16.mxu0 0
      %526 = vmatmul.mubr.bf16.gmra.mrb[0].mxu0 %v398
      %v527 = vpop.f32.mrb[0].mxu0
      %v528 = vadd.f32 0.0, %v527
      %v529 = vpop.f32.mrb[0].mxu0
      %v530 = vpop.f32.mrb[0].mxu0
      %v531 = vadd.f32 0.0, %v530
      %v532 = vpop.f32.mrb[0].mxu0
      %533 = vmatprep.mubr.bf16.mxu0 0
      %534 = vmatmul.mubr.bf16.gmra.mrb[0].mxu0 %v401
      %v535 = vpop.f32.mrb[0].mxu0
      %v536 = vadd.f32 0.0, %v535
      %v537 = vpop.f32.mrb[0].mxu0
      %v538 = vpop.f32.mrb[0].mxu0
      %v539 = vadd.f32 0.0, %v538
      %v540 = vpop.f32.mrb[0].mxu0
      %541 = vmatprep.mubr.bf16.mxu0 0
      %542 = vmatmul.mubr.bf16.gmra.mrb[0].mxu0 %v404
      %v543 = vpop.f32.mrb[0].mxu0
      %v544 = vadd.f32 0.0, %v543
      %v545 = vpop.f32.mrb[0].mxu0
      %v546 = vpop.f32.mrb[0].mxu0
      %v547 = vadd.f32 0.0, %v546
      %v548 = vpop.f32.mrb[0].mxu0
      %549 = vmatprep.mubr.bf16.mxu0 0
      %550 = vmatmul.mubr.bf16.gmra.mrb[0].mxu0 %v407
      %v551 = vpop.f32.mrb[0].mxu0
      %v552 = vadd.f32 0.0, %v551
      %v553 = vpop.f32.mrb[0].mxu0
      %v554 = vpop.f32.mrb[0].mxu0
      %v555 = vadd.f32 0.0, %v554
      %v556 = vpop.f32.mrb[0].mxu0
      %557 = vmatprep.mubr.bf16.mxu0 0
      %558 = vmatmul.mubr.bf16.gmra.mrb[0].mxu0 %v410
      %v559 = vpop.f32.mrb[0].mxu0
      %v560 = vadd.f32 0.0, %v559
      %v561 = vpop.f32.mrb[0].mxu0
      %v562 = vpop.f32.mrb[0].mxu0
      %v563 = vadd.f32 0.0, %v562
      %v564 = vpop.f32.mrb[0].mxu0
      %565 = vmatprep.mubr.bf16.mxu0 0
      %566 = vmatmul.mubr.bf16.gmra.mrb[0].mxu0 %v413
      %v567 = vpop.f32.mrb[0].mxu0
      %v568 = vadd.f32 0.0, %v567
      %v569 = vpop.f32.mrb[0].mxu0
      %v570 = vpop.f32.mrb[0].mxu0
      %v571 = vadd.f32 0.0, %v570
      %v572 = vpop.f32.mrb[0].mxu0
      %573 = vmatprep.mubr.bf16.mxu0 0
      %574 = vmatmul.mubr.bf16.gmra.mrb[0].mxu0 %v416
      %v575 = vpop.f32.mrb[0].mxu0
      %v576 = vadd.f32 0.0, %v575
      %v577 = vpop.f32.mrb[0].mxu0
      %v578 = vpop.f32.mrb[0].mxu0
      %v579 = vadd.f32 0.0, %v578
      %v580 = vpop.f32.mrb[0].mxu0
      %581 = vmatprep.mubr.bf16.mxu0 0
      %582 = vmatmul.mubr.bf16.gmra.mrb[0].mxu0 %v419
      %v583 = vpop.f32.mrb[0].mxu0
      %v584 = vadd.f32 0.0, %v583
      %v585 = vpop.f32.mrb[0].mxu0
      %v586 = vpop.f32.mrb[0].mxu0
      %v587 = vadd.f32 0.0, %v586
      %v588 = vpop.f32.mrb[0].mxu0
      %589 = vmatprep.mubr.bf16.mxu0 0
      %590 = vmatmul.mubr.bf16.gmra.mrb[0].mxu0 %v422
      %v591 = vpop.f32.mrb[0].mxu0
      %v592 = vadd.f32 0.0, %v591
      %v593 = vpop.f32.mrb[0].mxu0
      %v594 = vpop.f32.mrb[0].mxu0
      %v595 = vadd.f32 0.0, %v594
      %v596 = vpop.f32.mrb[0].mxu0
      %597 = vmatprep.mubr.bf16.mxu0 0
      %598 = vmatmul.mubr.bf16.gmra.mrb[0].mxu0 %v425
      %v599 = vpop.f32.mrb[0].mxu0
      %v600 = vadd.f32 0.0, %v599
      %v601 = vpop.f32.mrb[0].mxu0
      %v602 = vpop.f32.mrb[0].mxu0
      %v603 = vadd.f32 0.0, %v602
      %v604 = vpop.f32.mrb[0].mxu0
      %605 = vmatprep.mubr.bf16.mxu0 0
      %606 = vmatmul.mubr.bf16.gmra.mrb[0].mxu0 %v428
      %v607 = vpop.f32.mrb[0].mxu0
      %v608 = vadd.f32 0.0, %v607
      %v609 = vpop.f32.mrb[0].mxu0
      %v610 = vpop.f32.mrb[0].mxu0
      %v611 = vadd.f32 0.0, %v610
      %v612 = vpop.f32.mrb[0].mxu0
      %613 = vmatprep.mubr.bf16.mxu0 0
      %614 = vmatmul.mubr.bf16.gmra.mrb[0].mxu0 %v431
      %v615 = vpop.f32.mrb[0].mxu0
      %v616 = vadd.f32 0.0, %v615
      %v617 = vpop.f32.mrb[0].mxu0
      %v618 = vpop.f32.mrb[0].mxu0
      %v619 = vadd.f32 0.0, %v618
      %v620 = vpop.f32.mrb[0].mxu0
      %621 = vmatprep.mubr.bf16.mxu0 0
      %622 = vmatmul.mubr.bf16.gmra.mrb[0].mxu0 %v434
      %v623 = vpop.f32.mrb[0].mxu0
      %v624 = vadd.f32 0.0, %v623
      %v625 = vpop.f32.mrb[0].mxu0
      %v626 = vpop.f32.mrb[0].mxu0
      %v627 = vadd.f32 0.0, %v626
      %v628 = vpop.f32.mrb[0].mxu0
      %629 = vmatprep.mubr.bf16.mxu0 0
      %630 = vmatmul.mubr.bf16.gmra.mrb[0].mxu0 %v437
      %v631 = vpop.f32.mrb[0].mxu0
      %v632 = vadd.f32 0.0, %v631
      %v633 = vpop.f32.mrb[0].mxu0
      %v634 = vpop.f32.mrb[0].mxu0
      %v635 = vadd.f32 0.0, %v634
      %v636 = vpop.f32.mrb[0].mxu0
      %637 = vmatprep.mubr.bf16.mxu0 0
      %638 = vmatmul.mubr.bf16.gmra.mrb[0].mxu0 %v440
      %v639 = vpop.f32.mrb[0].mxu0
      %v640 = vadd.f32 0.0, %v639
      %v641 = vpop.f32.mrb[0].mxu0
      %v642 = vpop.f32.mrb[0].mxu0
      %v643 = vadd.f32 0.0, %v642
      %v644 = vpop.f32.mrb[0].mxu0
      %645 = vmatprep.mubr.bf16.mxu0 0
      %646 = vmatmul.mubr.bf16.gmra.mrb[0].mxu0 %v443
      %v647 = vpop.f32.mrb[0].mxu0
      %v648 = vadd.f32 0.0, %v647
      %v649 = vpop.f32.mrb[0].mxu0
      %v650 = vpop.f32.mrb[0].mxu0
      %v651 = vadd.f32 0.0, %v650
      %v652 = vpop.f32.mrb[0].mxu0
      %653 = vmatprep.mubr.bf16.mxu0 0
      %654 = vmatmul.mubr.bf16.gmra.mrb[0].mxu0 %v446
      %v655 = vpop.f32.mrb[0].mxu0
      %v656 = vadd.f32 0.0, %v655
      %v657 = vpop.f32.mrb[0].mxu0
      %v658 = vpop.f32.mrb[0].mxu0
      %v659 = vadd.f32 0.0, %v658
      %v660 = vpop.f32.mrb[0].mxu0
      %661 = vmatprep.mubr.bf16.mxu0 0
      %662 = vmatmul.mubr.bf16.gmra.mrb[0].mxu0 %v449
      %v663 = vpop.f32.mrb[0].mxu0
      %v664 = vadd.f32 0.0, %v663
      %v665 = vpop.f32.mrb[0].mxu0
      %v666 = vpop.f32.mrb[0].mxu0
      %v667 = vadd.f32 0.0, %v666
      %v668 = vpop.f32.mrb[0].mxu0
      %669 = vmatprep.mubr.bf16.mxu0 0
      %670 = vmatmul.mubr.bf16.gmra.mrb[0].mxu0 %v452
      %v671 = vpop.f32.mrb[0].mxu0
      %v672 = vadd.f32 0.0, %v671
      %v673 = vpop.f32.mrb[0].mxu0
      %v674 = vpop.f32.mrb[0].mxu0
      %v675 = vadd.f32 0.0, %v674
      %v676 = vpop.f32.mrb[0].mxu0
      %677 = vmatprep.mubr.bf16.mxu0 0
      %678 = vmatmul.mubr.bf16.gmra.mrb[0].mxu0 %v455
      %v679 = vpop.f32.mrb[0].mxu0
      %v680 = vadd.f32 0.0, %v679
      %v681 = vpop.f32.mrb[0].mxu0
      %v682 = vpop.f32.mrb[0].mxu0
      %v683 = vadd.f32 0.0, %v682
      %v684 = vpop.f32.mrb[0].mxu0
      %685 = vmatprep.mubr.bf16.mxu0 0
      %686 = vmatmul.mubr.bf16.gmra.mrb[0].mxu0 %v458
      %v687 = vpop.f32.mrb[0].mxu0
      %v688 = vadd.f32 0.0, %v687
      %v689 = vpop.f32.mrb[0].mxu0
      %v690 = vpop.f32.mrb[0].mxu0
      %v691 = vadd.f32 0.0, %v690
      %v692 = vpop.f32.mrb[0].mxu0
      %693 = vmatprep.mubr.bf16.mxu0 0
      %694 = vmatmul.mubr.bf16.gmra.mrb[0].mxu0 %v461
      %v695 = vpop.f32.mrb[0].mxu0
      %v696 = vadd.f32 0.0, %v695
      %v697 = vpop.f32.mrb[0].mxu0
      %v698 = vpop.f32.mrb[0].mxu0
      %v699 = vadd.f32 0.0, %v698
      %v700 = vpop.f32.mrb[0].mxu0
      %701 = vmatprep.mubr.bf16.mxu0 0
      %702 = vmatmul.mubr.bf16.gmra.mrb[0].mxu0 %v464
      %v703 = vpop.f32.mrb[0].mxu0
      %v704 = vadd.f32 0.0, %v703
      %v705 = vpop.f32.mrb[0].mxu0
      %v706 = vpop.f32.mrb[0].mxu0
      %v707 = vadd.f32 0.0, %v706
      %v708 = vpop.f32.mrb[0].mxu0
      %709 = vmatprep.mubr.bf16.mxu0 0
      %710 = vmatmul.mubr.bf16.gmra.mrb[0].mxu0 %v467
      %v711 = vpop.f32.mrb[0].mxu0
      %v712 = vadd.f32 0.0, %v711
      %v713 = vpop.f32.mrb[0].mxu0
      %v714 = vpop.f32.mrb[0].mxu0
      %v715 = vadd.f32 0.0, %v714
      %v716 = vpop.f32.mrb[0].mxu0
      %717 = vmatprep.mubr.bf16.mxu0 0
      %718 = vmatmul.mubr.bf16.gmra.mrb[0].mxu0 %v470
      %v719 = vpop.f32.mrb[0].mxu0
      %v720 = vadd.f32 0.0, %v719
      %v721 = vpop.f32.mrb[0].mxu0
      %v722 = vpop.f32.mrb[0].mxu0
      %v723 = vadd.f32 0.0, %v722
      %v724 = vpop.f32.mrb[0].mxu0
      %725 = vmatprep.mubr.bf16.mxu0 0
      %726 = vmatmul.mubr.bf16.gmra.mrb[0].mxu0 %v473
      %v727 = vpop.f32.mrb[0].mxu0
      %v728 = vadd.f32 0.0, %v727
      %v729 = vpop.f32.mrb[0].mxu0
      %v730 = vpop.f32.mrb[0].mxu0
      %v731 = vadd.f32 0.0, %v730
      %v732 = vpop.f32.mrb[0].mxu0
      %733 = vmatprep.mubr.bf16.mxu0 0
      %734 = vmatmul.mubr.bf16.gmra.mrb[0].mxu0 %v476
      %v735 = vpop.f32.mrb[0].mxu0
      %v736 = vadd.f32 0.0, %v735
      %v737 = vpop.f32.mrb[0].mxu0
      %v738 = vpop.f32.mrb[0].mxu0
      %v739 = vadd.f32 0.0, %v738
      %v740 = vpop.f32.mrb[0].mxu0
      %741 = vmatprep.mubr.bf16.mxu0 0
      %742 = vmatmul.mubr.bf16.gmra.mrb[0].mxu0 %v479
      %v743 = vpop.f32.mrb[0].mxu0
      %v744 = vadd.f32 0.0, %v743
      %v745 = vpop.f32.mrb[0].mxu0
      %v746 = vpop.f32.mrb[0].mxu0
      %v747 = vadd.f32 0.0, %v746
      %v748 = vpop.f32.mrb[0].mxu0
      %749 = vmatprep.mubr.bf16.mxu0 0
      %750 = vmatmul.mubr.bf16.gmra.mrb[0].mxu0 %v482
      %v751 = vpop.f32.mrb[0].mxu0
      %v752 = vadd.f32 0.0, %v751
      %v753 = vpop.f32.mrb[0].mxu0
      %v754 = vpop.f32.mrb[0].mxu0
      %v755 = vadd.f32 0.0, %v754
      %v756 = vpop.f32.mrb[0].mxu0
      %757 = vmatprep.mubr.bf16.mxu0 0
      %758 = vmatmul.mubr.bf16.gmra.mrb[0].mxu0 %v485
      %v759 = vpop.f32.mrb[0].mxu0
      %v760 = vadd.f32 0.0, %v759
      %v761 = vpop.f32.mrb[0].mxu0
      %v762 = vpop.f32.mrb[0].mxu0
      %v763 = vadd.f32 0.0, %v762
      %v764 = vpop.f32.mrb[0].mxu0
      %765 = vmatprep.mubr.bf16.mxu0 0
      %766 = vmatmul.mubr.bf16.gmra.mrb[0].mxu0 %v488
      %v767 = vpop.f32.mrb[0].mxu0
      %v768 = vadd.f32 0.0, %v767
      %v769 = vpop.f32.mrb[0].mxu0
      %v770 = vpop.f32.mrb[0].mxu0
      %v771 = vadd.f32 0.0, %v770
      %v772 = vpop.f32.mrb[0].mxu0
      %773 = vmatprep.mubr.bf16.mxu0 0
      %774 = vmatmul.mubr.bf16.gmra.mrb[0].mxu0 %v491
      %v775 = vpop.f32.mrb[0].mxu0
      %v776 = vadd.f32 0.0, %v775
      %v777 = vpop.f32.mrb[0].mxu0
      %v778 = vpop.f32.mrb[0].mxu0
      %v779 = vadd.f32 0.0, %v778
      %v780 = vpop.f32.mrb[0].mxu0
      %781 = vdwg.mxu0
      %vm782 = vcmp.ge.f32.partialorder %v528, 0.0
      %vm783 = vcmp.ge.f32.partialorder %v531, 0.0
      %vm784 = vcmp.ge.f32.partialorder %v536, 0.0
      %vm785 = vcmp.ge.f32.partialorder %v539, 0.0
      %vm786 = vcmp.ge.f32.partialorder %v544, 0.0
      %vm787 = vcmp.ge.f32.partialorder %v547, 0.0
      %vm788 = vcmp.ge.f32.partialorder %v552, 0.0
      %vm789 = vcmp.ge.f32.partialorder %v555, 0.0
      %vm790 = vcmp.ge.f32.partialorder %v560, 0.0
      %vm791 = vcmp.ge.f32.partialorder %v563, 0.0
      %vm792 = vcmp.ge.f32.partialorder %v568, 0.0
      %vm793 = vcmp.ge.f32.partialorder %v571, 0.0
      %vm794 = vcmp.ge.f32.partialorder %v576, 0.0
      %vm795 = vcmp.ge.f32.partialorder %v579, 0.0
      %vm796 = vcmp.ge.f32.partialorder %v584, 0.0
      %vm797 = vcmp.ge.f32.partialorder %v587, 0.0
      %vm798 = vcmp.ge.f32.partialorder %v592, 0.0
      %vm799 = vcmp.ge.f32.partialorder %v595, 0.0
      %vm800 = vcmp.ge.f32.partialorder %v600, 0.0
      %vm801 = vcmp.ge.f32.partialorder %v603, 0.0
      %vm802 = vcmp.ge.f32.partialorder %v608, 0.0
      %vm803 = vcmp.ge.f32.partialorder %v611, 0.0
      %vm804 = vcmp.ge.f32.partialorder %v616, 0.0
      %vm805 = vcmp.ge.f32.partialorder %v619, 0.0
      %vm806 = vcmp.ge.f32.partialorder %v624, 0.0
      %vm807 = vcmp.ge.f32.partialorder %v627, 0.0
      %vm808 = vcmp.ge.f32.partialorder %v632, 0.0
      %vm809 = vcmp.ge.f32.partialorder %v635, 0.0
      %vm810 = vcmp.ge.f32.partialorder %v640, 0.0
      %vm811 = vcmp.ge.f32.partialorder %v643, 0.0
      %vm812 = vcmp.ge.f32.partialorder %v648, 0.0
      %vm813 = vcmp.ge.f32.partialorder %v651, 0.0
      %vm814 = vcmp.ge.f32.partialorder %v656, 0.0
      %vm815 = vcmp.ge.f32.partialorder %v659, 0.0
      %vm816 = vcmp.ge.f32.partialorder %v664, 0.0
      %vm817 = vcmp.ge.f32.partialorder %v667, 0.0
      %vm818 = vcmp.ge.f32.partialorder %v672, 0.0
      %vm819 = vcmp.ge.f32.partialorder %v675, 0.0
      %vm820 = vcmp.ge.f32.partialorder %v680, 0.0
      %vm821 = vcmp.ge.f32.partialorder %v683, 0.0
      %vm822 = vcmp.ge.f32.partialorder %v688, 0.0
      %vm823 = vcmp.ge.f32.partialorder %v691, 0.0
      %vm824 = vcmp.ge.f32.partialorder %v696, 0.0
      %vm825 = vcmp.ge.f32.partialorder %v699, 0.0
      %vm826 = vcmp.ge.f32.partialorder %v704, 0.0
      %vm827 = vcmp.ge.f32.partialorder %v707, 0.0
      %vm828 = vcmp.ge.f32.partialorder %v712, 0.0
      %vm829 = vcmp.ge.f32.partialorder %v715, 0.0
      %vm830 = vcmp.ge.f32.partialorder %v720, 0.0
      %vm831 = vcmp.ge.f32.partialorder %v723, 0.0
      %vm832 = vcmp.ge.f32.partialorder %v728, 0.0
      %vm833 = vcmp.ge.f32.partialorder %v731, 0.0
      %vm834 = vcmp.ge.f32.partialorder %v736, 0.0
      %vm835 = vcmp.ge.f32.partialorder %v739, 0.0
      %vm836 = vcmp.ge.f32.partialorder %v744, 0.0
      %vm837 = vcmp.ge.f32.partialorder %v747, 0.0
      %vm838 = vcmp.ge.f32.partialorder %v752, 0.0
      %vm839 = vcmp.ge.f32.partialorder %v755, 0.0
      %vm840 = vcmp.ge.f32.partialorder %v760, 0.0
      %vm841 = vcmp.ge.f32.partialorder %v763, 0.0
      %vm842 = vcmp.ge.f32.partialorder %v768, 0.0
      %vm843 = vcmp.ge.f32.partialorder %v771, 0.0
      %vm844 = vcmp.ge.f32.partialorder %v776, 0.0
      %vm845 = vcmp.ge.f32.partialorder %v779, 0.0
      %v846 = vmul.f32 %v528, 0.2
      %v847 = vmul.f32 %v531, 0.2
      %v848 = vmul.f32 %v536, 0.2
      %v849 = vmul.f32 %v539, 0.2
      %v850 = vmul.f32 %v544, 0.2
      %v851 = vmul.f32 %v547, 0.2
      %v852 = vmul.f32 %v552, 0.2
      %v853 = vmul.f32 %v555, 0.2
      %v854 = vmul.f32 %v560, 0.2
      %v855 = vmul.f32 %v563, 0.2
      %v856 = vmul.f32 %v568, 0.2
      %v857 = vmul.f32 %v571, 0.2
      %v858 = vmul.f32 %v576, 0.2
      %v859 = vmul.f32 %v579, 0.2
      %v860 = vmul.f32 %v584, 0.2
      %v861 = vmul.f32 %v587, 0.2
      %v862 = vmul.f32 %v592, 0.2
      %v863 = vmul.f32 %v595, 0.2
      %v864 = vmul.f32 %v600, 0.2
      %v865 = vmul.f32 %v603, 0.2
      %v866 = vmul.f32 %v608, 0.2
      %v867 = vmul.f32 %v611, 0.2
      %v868 = vmul.f32 %v616, 0.2
      %v869 = vmul.f32 %v619, 0.2
      %v870 = vmul.f32 %v624, 0.2
      %v871 = vmul.f32 %v627, 0.2
      %v872 = vmul.f32 %v632, 0.2
      %v873 = vmul.f32 %v635, 0.2
      %v874 = vmul.f32 %v640, 0.2
      %v875 = vmul.f32 %v643, 0.2
      %v876 = vmul.f32 %v648, 0.2
      %v877 = vmul.f32 %v651, 0.2
      %v878 = vmul.f32 %v656, 0.2
      %v879 = vmul.f32 %v659, 0.2
      %v880 = vmul.f32 %v664, 0.2
      %v881 = vmul.f32 %v667, 0.2
      %v882 = vmul.f32 %v672, 0.2
      %v883 = vmul.f32 %v675, 0.2
      %v884 = vmul.f32 %v680, 0.2
      %v885 = vmul.f32 %v683, 0.2
      %v886 = vmul.f32 %v688, 0.2
      %v887 = vmul.f32 %v691, 0.2
      %v888 = vmul.f32 %v696, 0.2
      %v889 = vmul.f32 %v699, 0.2
      %v890 = vmul.f32 %v704, 0.2
      %v891 = vmul.f32 %v707, 0.2
      %v892 = vmul.f32 %v712, 0.2
      %v893 = vmul.f32 %v715, 0.2
      %v894 = vmul.f32 %v720, 0.2
      %v895 = vmul.f32 %v723, 0.2
      %v896 = vmul.f32 %v728, 0.2
      %v897 = vmul.f32 %v731, 0.2
      %v898 = vmul.f32 %v736, 0.2
      %v899 = vmul.f32 %v739, 0.2
      %v900 = vmul.f32 %v744, 0.2
      %v901 = vmul.f32 %v747, 0.2
      %v902 = vmul.f32 %v752, 0.2
      %v903 = vmul.f32 %v755, 0.2
      %v904 = vmul.f32 %v760, 0.2
      %v905 = vmul.f32 %v763, 0.2
      %v906 = vmul.f32 %v768, 0.2
      %v907 = vmul.f32 %v771, 0.2
      %v908 = vmul.f32 %v776, 0.2
      %v909 = vmul.f32 %v779, 0.2
      %v910 = vsel %vm782, %v528, %v846
      %v911 = vsel %vm783, %v531, %v847
      %v912 = vsel %vm784, %v536, %v848
      %v913 = vsel %vm785, %v539, %v849
      %v914 = vsel %vm786, %v544, %v850
      %v915 = vsel %vm787, %v547, %v851
      %v916 = vsel %vm788, %v552, %v852
      %v917 = vsel %vm789, %v555, %v853
      %v918 = vsel %vm790, %v560, %v854
      %v919 = vsel %vm791, %v563, %v855
      %v920 = vsel %vm792, %v568, %v856
      %v921 = vsel %vm793, %v571, %v857
      %v922 = vsel %vm794, %v576, %v858
      %v923 = vsel %vm795, %v579, %v859
      %v924 = vsel %vm796, %v584, %v860
      %v925 = vsel %vm797, %v587, %v861
      %v926 = vsel %vm798, %v592, %v862
      %v927 = vsel %vm799, %v595, %v863
      %v928 = vsel %vm800, %v600, %v864
      %v929 = vsel %vm801, %v603, %v865
      %v930 = vsel %vm802, %v608, %v866
      %v931 = vsel %vm803, %v611, %v867
      %v932 = vsel %vm804, %v616, %v868
      %v933 = vsel %vm805, %v619, %v869
      %v934 = vsel %vm806, %v624, %v870
      %v935 = vsel %vm807, %v627, %v871
      %v936 = vsel %vm808, %v632, %v872
      %v937 = vsel %vm809, %v635, %v873
      %v938 = vsel %vm810, %v640, %v874
      %v939 = vsel %vm811, %v643, %v875
      %v940 = vsel %vm812, %v648, %v876
      %v941 = vsel %vm813, %v651, %v877
      %v942 = vsel %vm814, %v656, %v878
      %v943 = vsel %vm815, %v659, %v879
      %v944 = vsel %vm816, %v664, %v880
      %v945 = vsel %vm817, %v667, %v881
      %v946 = vsel %vm818, %v672, %v882
      %v947 = vsel %vm819, %v675, %v883
      %v948 = vsel %vm820, %v680, %v884
      %v949 = vsel %vm821, %v683, %v885
      %v950 = vsel %vm822, %v688, %v886
      %v951 = vsel %vm823, %v691, %v887
      %v952 = vsel %vm824, %v696, %v888
      %v953 = vsel %vm825, %v699, %v889
      %v954 = vsel %vm826, %v704, %v890
      %v955 = vsel %vm827, %v707, %v891
      %v956 = vsel %vm828, %v712, %v892
      %v957 = vsel %vm829, %v715, %v893
      %v958 = vsel %vm830, %v720, %v894
      %v959 = vsel %vm831, %v723, %v895
      %v960 = vsel %vm832, %v728, %v896
      %v961 = vsel %vm833, %v731, %v897
      %v962 = vsel %vm834, %v736, %v898
      %v963 = vsel %vm835, %v739, %v899
      %v964 = vsel %vm836, %v744, %v900
      %v965 = vsel %vm837, %v747, %v901
      %v966 = vsel %vm838, %v752, %v902
      %v967 = vsel %vm839, %v755, %v903
      %v968 = vsel %vm840, %v760, %v904
      %v969 = vsel %vm841, %v763, %v905
      %v970 = vsel %vm842, %v768, %v906
      %v971 = vsel %vm843, %v771, %v907
      %v972 = vsel %vm844, %v776, %v908
      %v973 = vsel %vm845, %v779, %v909
      %vm974 = vcmask 64512
      %975 = vst.msk [vmem:[%s145] sm:$0xff] %vm974, %v910
      %976 = vst.msk [vmem:[%s145 + $0x8] sm:$0xff] %vm974, %v911
      %977 = vst.msk [vmem:[%s145 + $0x10] sm:$0xff] %vm974, %v912
      %978 = vst.msk [vmem:[%s145 + $0x18] sm:$0xff] %vm974, %v913
      %979 = vst.msk [vmem:[%s145 + $0x20] sm:$0xff] %vm974, %v914
      %980 = vst.msk [vmem:[%s145 + $0x28] sm:$0xff] %vm974, %v915
      %981 = vst.msk [vmem:[%s145 + $0x30] sm:$0xff] %vm974, %v916
      %982 = vst.msk [vmem:[%s145 + $0x38] sm:$0xff] %vm974, %v917
      %983 = vst.msk [vmem:[%s145 + $0x40] sm:$0xff] %vm974, %v918
      %984 = vst.msk [vmem:[%s145 + $0x48] sm:$0xff] %vm974, %v919
      %985 = vst.msk [vmem:[%s145 + $0x50] sm:$0xff] %vm974, %v920
      %986 = vst.msk [vmem:[%s145 + $0x58] sm:$0xff] %vm974, %v921
      %987 = vst.msk [vmem:[%s145 + $0x60] sm:$0xff] %vm974, %v922
      %988 = vst.msk [vmem:[%s145 + $0x68] sm:$0xff] %vm974, %v923
      %989 = vst.msk [vmem:[%s145 + $0x70] sm:$0xff] %vm974, %v924
      %990 = vst.msk [vmem:[%s145 + $0x78] sm:$0xff] %vm974, %v925
      %991 = vst.msk [vmem:[%s145 + $0x80] sm:$0xff] %vm974, %v926
      %992 = vst.msk [vmem:[%s145 + $0x88] sm:$0xff] %vm974, %v927
      %993 = vst.msk [vmem:[%s145 + $0x90] sm:$0xff] %vm974, %v928
      %994 = vst.msk [vmem:[%s145 + $0x98] sm:$0xff] %vm974, %v929
      %995 = vst.msk [vmem:[%s145 + $0xa0] sm:$0xff] %vm974, %v930
      %996 = vst.msk [vmem:[%s145 + $0xa8] sm:$0xff] %vm974, %v931
      %997 = vst.msk [vmem:[%s145 + $0xb0] sm:$0xff] %vm974, %v932
      %998 = vst.msk [vmem:[%s145 + $0xb8] sm:$0xff] %vm974, %v933
      %999 = vst.msk [vmem:[%s145 + $0xc0] sm:$0xff] %vm974, %v934
      %1000 = vst.msk [vmem:[%s145 + $0xc8] sm:$0xff] %vm974, %v935
      %1001 = vst.msk [vmem:[%s145 + $0xd0] sm:$0xff] %vm974, %v936
      %1002 = vst.msk [vmem:[%s145 + $0xd8] sm:$0xff] %vm974, %v937
      %1003 = vst.msk [vmem:[%s145 + $0xe0] sm:$0xff] %vm974, %v938
      %1004 = vst.msk [vmem:[%s145 + $0xe8] sm:$0xff] %vm974, %v939
      %1005 = vst.msk [vmem:[%s145 + $0xf0] sm:$0xff] %vm974, %v940
      %1006 = vst.msk [vmem:[%s145 + $0xf8] sm:$0xff] %vm974, %v941
      %1007 = vst.msk [vmem:[%s145 + $0x100] sm:$0xff] %vm974, %v942
      %1008 = vst.msk [vmem:[%s145 + $0x108] sm:$0xff] %vm974, %v943
      %1009 = vst.msk [vmem:[%s145 + $0x110] sm:$0xff] %vm974, %v944
      %1010 = vst.msk [vmem:[%s145 + $0x118] sm:$0xff] %vm974, %v945
      %1011 = vst.msk [vmem:[%s145 + $0x120] sm:$0xff] %vm974, %v946
      %1012 = vst.msk [vmem:[%s145 + $0x128] sm:$0xff] %vm974, %v947
      %1013 = vst.msk [vmem:[%s145 + $0x130] sm:$0xff] %vm974, %v948
      %1014 = vst.msk [vmem:[%s145 + $0x138] sm:$0xff] %vm974, %v949
      %1015 = vst.msk [vmem:[%s145 + $0x140] sm:$0xff] %vm974, %v950
      %1016 = vst.msk [vmem:[%s145 + $0x148] sm:$0xff] %vm974, %v951
      %1017 = vst.msk [vmem:[%s145 + $0x150] sm:$0xff] %vm974, %v952
      %1018 = vst.msk [vmem:[%s145 + $0x158] sm:$0xff] %vm974, %v953
      %1019 = vst.msk [vmem:[%s145 + $0x160] sm:$0xff] %vm974, %v954
      %1020 = vst.msk [vmem:[%s145 + $0x168] sm:$0xff] %vm974, %v955
      %1021 = vst.msk [vmem:[%s145 + $0x170] sm:$0xff] %vm974, %v956
      %1022 = vst.msk [vmem:[%s145 + $0x178] sm:$0xff] %vm974, %v957
      %1023 = vst.msk [vmem:[%s145 + $0x180] sm:$0xff] %vm974, %v958
      %1024 = vst.msk [vmem:[%s145 + $0x188] sm:$0xff] %vm974, %v959
      %1025 = vst.msk [vmem:[%s145 + $0x190] sm:$0xff] %vm974, %v960
      %1026 = vst.msk [vmem:[%s145 + $0x198] sm:$0xff] %vm974, %v961
      %1027 = vst.msk [vmem:[%s145 + $0x1a0] sm:$0xff] %vm974, %v962
      %1028 = vst.msk [vmem:[%s145 + $0x1a8] sm:$0xff] %vm974, %v963
      %1029 = vst.msk [vmem:[%s145 + $0x1b0] sm:$0xff] %vm974, %v964
      %1030 = vst.msk [vmem:[%s145 + $0x1b8] sm:$0xff] %vm974, %v965
      %1031 = vst.msk [vmem:[%s145 + $0x1c0] sm:$0xff] %vm974, %v966
      %1032 = vst.msk [vmem:[%s145 + $0x1c8] sm:$0xff] %vm974, %v967
      %1033 = vst.msk [vmem:[%s145 + $0x1d0] sm:$0xff] %vm974, %v968
      %1034 = vst.msk [vmem:[%s145 + $0x1d8] sm:$0xff] %vm974, %v969
      %1035 = vst.msk [vmem:[%s145 + $0x1e0] sm:$0xff] %vm974, %v970
      %1036 = vst.msk [vmem:[%s145 + $0x1e8] sm:$0xff] %vm974, %v971
      %1037 = vst.msk [vmem:[%s145 + $0x1f0] sm:$0xff] %vm974, %v972
      %1038 = vst.msk [vmem:[%s145 + $0x1f8] sm:$0xff] %vm974, %v973
      %s1039 = smul.u32 64, %s13
      %p1040 = scmp.lt.s32.totalorder %s1039, 255
      %s1041 = scalar_select %p1040, %s1039, 255
      %s1042 = smul.addr %s1041, 8
      %s1043 = scalar_lea.vmem %s2, %s1042
      // Predicated region
      $region29: #{conv_discriminator_forward.8} parent=27 // pred_check
        %p1044 = pneg %p78
      $region30: #{conv_discriminator_forward.8} parent=27 // pred_check_branch
        %1046 = sbr.rel (%p1044) target = $region32
      $region31: #{conv_discriminator_forward.8} parent=27 // pred_region
        %s1047 = smul.u32 64, %s13
      $region32: #{conv_discriminator_forward.8} parent=27 // pred_fallthru
        _
    $region28: #{conv_discriminator_forward.8} parent=5 // pred_fallthru
      _
    %p1048 = scmp.le.s32.totalorder 2, %s8
    // Predicated region
    $region33: #{conv_discriminator_forward.8} parent=5 // pred_check
      %p1049 = pneg %p1048
    $region34: #{conv_discriminator_forward.8} parent=5 // pred_check_branch
      %1051 = sbr.rel (%p1049) target = $region36
    $region35: #{conv_discriminator_forward.8} parent=5 // pred_region
      %s1052 = ssub.s32 %s8, 2
      // Predicated region
      $region37: #{conv_discriminator_forward.8} parent=35 // pred_check
        %p1053 = pneg %p84
      $region38: #{conv_discriminator_forward.8} parent=35 // pred_check_branch
        %1055 = sbr.rel (%p1053) target = $region40
      $region39: #{conv_discriminator_forward.8} parent=35 // pred_region
        %s1056 = smul.u32 64, %s14
        %p1057 = scmp.lt.s32.totalorder %s1056, 255
        %s1058 = scalar_select %p1057, %s1056, 255
        %s1059 = smul.addr %s1058, 8
        %s1060 = scalar_lea.vmem %s2, %s1059
      $region40: #{conv_discriminator_forward.8} parent=35 // pred_fallthru
        _
    $region36: #{conv_discriminator_forward.8} parent=5 // pred_fallthru
      _
  $region6: #{conv_discriminator_forward.8} parent=0 // loop_footer
    %s12 = sadd.s32 1, %s8
  $region7: #{conv_discriminator_forward.8} parent=0 // loop_footer_branch
    %7 = sbr.rel target = $region3
  $region8: #{conv_discriminator_forward.8} parent=0 // loop_exit
    _

// kernel: conv_discriminator_forward.10
$region0: #{conv_discriminator_forward.10}
  #allocation0 [shape = 'u32[]', space=smem, size = 0x4, offset = 0x4, fixed_abs, tag = 'smem constant byte address 0x4 - core index']
  #allocation1 [shape = 'u32[144,128]{1,0:T(1,128)}', space=vmem, size = 0x12000, scoped, tag = 'internal scratch']
  %s0 = inlined_call_operand.vmem [shape: f32[512,16], index: 0, kind: input, shape index: {}]
  %s1 = inlined_call_operand.vmem [shape: f32[1,16], index: 1, kind: input, shape index: {}]
  %s2 = inlined_call_operand.vmem [shape: f32[1,16], index: 2, kind: input, shape index: {}]
  %s3 = inlined_call_operand.vmem [shape: f32[512,16], index: 3, kind: output, shape index: {}]
  %s4 = sld [smem:[#allocation0]]
  $region22: #{conv_discriminator_forward.10} parent=0
    _
  %s6 = ssub.s32 1, %s4
  %s7 = scalar_select 0, %s6, %s4
  // Predicated region
  $region2: #{conv_discriminator_forward.10} parent=0 // pred_check
    _
  $region3: #{conv_discriminator_forward.10} parent=0 // pred_check_branch
    %9 = sbr.rel (0) target = $region5
  $region4: #{conv_discriminator_forward.10} parent=0 // pred_region
    _
  $region5: #{conv_discriminator_forward.10} parent=0 // pred_fallthru
    _
  // Predicated region
  $region6: #{conv_discriminator_forward.10} parent=0 // pred_check
    _
  $region7: #{conv_discriminator_forward.10} parent=0 // pred_check_branch
    %11 = sbr.rel (0) target = $region9
  $region8: #{conv_discriminator_forward.10} parent=0 // pred_region
    _
  $region9: #{conv_discriminator_forward.10} parent=0 // pred_fallthru
    _
  // Predicated region
  $region10: #{conv_discriminator_forward.10} parent=0 // pred_check
    _
  $region11: #{conv_discriminator_forward.10} parent=0 // pred_check_branch
    %13 = sbr.rel (0) target = $region13
  $region12: #{conv_discriminator_forward.10} parent=0 // pred_region
    _
  $region13: #{conv_discriminator_forward.10} parent=0 // pred_fallthru
    _
  %v14 = vld [vmem:[%s0] sm:$0xff]
  %v15 = vld [vmem:[%s0 + $0x8] sm:$0xff]
  %v16 = vld [vmem:[%s0 + $0x10] sm:$0xff]
  %v17 = vld [vmem:[%s0 + $0x18] sm:$0xff]
  %v18 = vld [vmem:[%s0 + $0x20] sm:$0xff]
  %v19 = vld [vmem:[%s0 + $0x28] sm:$0xff]
  %v20 = vld [vmem:[%s0 + $0x30] sm:$0xff]
  %v21 = vld [vmem:[%s0 + $0x38] sm:$0xff]
  %v22 = vld [vmem:[%s0 + $0x40] sm:$0xff]
  %v23 = vld [vmem:[%s0 + $0x48] sm:$0xff]
  %v24 = vld [vmem:[%s0 + $0x50] sm:$0xff]
  %v25 = vld [vmem:[%s0 + $0x58] sm:$0xff]
  %v26 = vld [vmem:[%s0 + $0x60] sm:$0xff]
  %v27 = vld [vmem:[%s0 + $0x68] sm:$0xff]
  %v28 = vld [vmem:[%s0 + $0x70] sm:$0xff]
  %v29 = vld [vmem:[%s0 + $0x78] sm:$0xff]
  %v30 = vld [vmem:[%s0 + $0x80] sm:$0xff]
  %v31 = vld [vmem:[%s0 + $0x88] sm:$0xff]
  %v32 = vld [vmem:[%s0 + $0x90] sm:$0xff]
  %v33 = vld [vmem:[%s0 + $0x98] sm:$0xff]
  %v34 = vld [vmem:[%s0 + $0xa0] sm:$0xff]
  %v35 = vld [vmem:[%s0 + $0xa8] sm:$0xff]
  %v36 = vld [vmem:[%s0 + $0xb0] sm:$0xff]
  %v37 = vld [vmem:[%s0 + $0xb8] sm:$0xff]
  %v38 = vld [vmem:[%s0 + $0xc0] sm:$0xff]
  %v39 = vld [vmem:[%s0 + $0xc8] sm:$0xff]
  %v40 = vld [vmem:[%s0 + $0xd0] sm:$0xff]
  %v41 = vld [vmem:[%s0 + $0xd8] sm:$0xff]
  %v42 = vld [vmem:[%s0 + $0xe0] sm:$0xff]
  %v43 = vld [vmem:[%s0 + $0xe8] sm:$0xff]
  %v44 = vld [vmem:[%s0 + $0xf0] sm:$0xff]
  %v45 = vld [vmem:[%s0 + $0xf8] sm:$0xff]
  %v46 = vld [vmem:[%s0 + $0x100] sm:$0xff]
  %v47 = vld [vmem:[%s0 + $0x108] sm:$0xff]
  %v48 = vld [vmem:[%s0 + $0x110] sm:$0xff]
  %v49 = vld [vmem:[%s0 + $0x118] sm:$0xff]
  %v50 = vld [vmem:[%s0 + $0x120] sm:$0xff]
  %v51 = vld [vmem:[%s0 + $0x128] sm:$0xff]
  %v52 = vld [vmem:[%s0 + $0x130] sm:$0xff]
  %v53 = vld [vmem:[%s0 + $0x138] sm:$0xff]
  %v54 = vld [vmem:[%s0 + $0x140] sm:$0xff]
  %v55 = vld [vmem:[%s0 + $0x148] sm:$0xff]
  %v56 = vld [vmem:[%s0 + $0x150] sm:$0xff]
  %v57 = vld [vmem:[%s0 + $0x158] sm:$0xff]
  %v58 = vld [vmem:[%s0 + $0x160] sm:$0xff]
  %v59 = vld [vmem:[%s0 + $0x168] sm:$0xff]
  %v60 = vld [vmem:[%s0 + $0x170] sm:$0xff]
  %v61 = vld [vmem:[%s0 + $0x178] sm:$0xff]
  %v62 = vld [vmem:[%s0 + $0x180] sm:$0xff]
  %v63 = vld [vmem:[%s0 + $0x188] sm:$0xff]
  %v64 = vld [vmem:[%s0 + $0x190] sm:$0xff]
  %v65 = vld [vmem:[%s0 + $0x198] sm:$0xff]
  %v66 = vld [vmem:[%s0 + $0x1a0] sm:$0xff]
  %v67 = vld [vmem:[%s0 + $0x1a8] sm:$0xff]
  %v68 = vld [vmem:[%s0 + $0x1b0] sm:$0xff]
  %v69 = vld [vmem:[%s0 + $0x1b8] sm:$0xff]
  %v70 = vld [vmem:[%s0 + $0x1c0] sm:$0xff]
  %v71 = vld [vmem:[%s0 + $0x1c8] sm:$0xff]
  %v72 = vld [vmem:[%s0 + $0x1d0] sm:$0xff]
  %v73 = vld [vmem:[%s0 + $0x1d8] sm:$0xff]
  %v74 = vld [vmem:[%s0 + $0x1e0] sm:$0xff]
  %v75 = vld [vmem:[%s0 + $0x1e8] sm:$0xff]
  %v76 = vld [vmem:[%s0 + $0x1f0] sm:$0xff]
  %v77 = vld [vmem:[%s0 + $0x1f8] sm:$0xff]
  %v78 = vld [vmem:[%s1] sm:$0x1]
  %v79 = vmul.f32 %v78, 0.001953125
  %v80 = vld [vmem:[%s2] sm:$0x1]
  %v81 = vmul.f32 %v80, 0.001953125
  %v82 = vmul.f32 %v79, %v79
  %v83 = vsub.f32 %v81, %v82
  %v84 = vmax.f32 %v83, 0.0
  %v86 = vlaneseq
  %v87 = vshrl.u32 %v86, 7
  %v88 = vsub.s32 0, %v87
  %v89 = vrot.slane %v79, %v88
  %v91 = vsub.f32 %v14, %v89
  %v92 = vsub.f32 %v15, %v89
  %v93 = vsub.f32 %v16, %v89
  %v94 = vsub.f32 %v17, %v89
  %v95 = vsub.f32 %v18, %v89
  %v96 = vsub.f32 %v19, %v89
  %v97 = vsub.f32 %v20, %v89
  %v98 = vsub.f32 %v21, %v89
  %v99 = vsub.f32 %v22, %v89
  %v100 = vsub.f32 %v23, %v89
  %v101 = vsub.f32 %v24, %v89
  %v102 = vsub.f32 %v25, %v89
  %v103 = vsub.f32 %v26, %v89
  %v104 = vsub.f32 %v27, %v89
  %v105 = vsub.f32 %v28, %v89
  %v106 = vsub.f32 %v29, %v89
  %v107 = vsub.f32 %v30, %v89
  %v108 = vsub.f32 %v31, %v89
  %v109 = vsub.f32 %v32, %v89
  %v110 = vsub.f32 %v33, %v89
  %v111 = vsub.f32 %v34, %v89
  %v112 = vsub.f32 %v35, %v89
  %v113 = vsub.f32 %v36, %v89
  %v114 = vsub.f32 %v37, %v89
  %v115 = vsub.f32 %v38, %v89
  %v116 = vsub.f32 %v39, %v89
  %v117 = vsub.f32 %v40, %v89
  %v118 = vsub.f32 %v41, %v89
  %v119 = vsub.f32 %v42, %v89
  %v120 = vsub.f32 %v43, %v89
  %v121 = vsub.f32 %v44, %v89
  %v122 = vsub.f32 %v45, %v89
  %v123 = vsub.f32 %v46, %v89
  %v124 = vsub.f32 %v47, %v89
  %v125 = vsub.f32 %v48, %v89
  %v126 = vsub.f32 %v49, %v89
  %v127 = vsub.f32 %v50, %v89
  %v128 = vsub.f32 %v51, %v89
  %v129 = vsub.f32 %v52, %v89
  %v130 = vsub.f32 %v53, %v89
  %v131 = vsub.f32 %v54, %v89
  %v132 = vsub.f32 %v55, %v89
  %v133 = vsub.f32 %v56, %v89
  %v134 = vsub.f32 %v57, %v89
  %v135 = vsub.f32 %v58, %v89
  %v136 = vsub.f32 %v59, %v89
  %v137 = vsub.f32 %v60, %v89
  %v138 = vsub.f32 %v61, %v89
  %v139 = vsub.f32 %v62, %v89
  %v140 = vsub.f32 %v63, %v89
  %v141 = vsub.f32 %v64, %v89
  %v142 = vsub.f32 %v65, %v89
  %v143 = vsub.f32 %v66, %v89
  %v144 = vsub.f32 %v67, %v89
  %v145 = vsub.f32 %v68, %v89
  %v146 = vsub.f32 %v69, %v89
  %v147 = vsub.f32 %v70, %v89
  %v148 = vsub.f32 %v71, %v89
  %v149 = vsub.f32 %v72, %v89
  %v150 = vsub.f32 %v73, %v89
  %v151 = vsub.f32 %v74, %v89
  %v152 = vsub.f32 %v75, %v89
  %v153 = vsub.f32 %v76, %v89
  %v154 = vsub.f32 %v77, %v89
  %v155 = vadd.f32 %v84, 1e-05
  %v156 = vrsqrt.pop %v155
  %v158 = vlaneseq
  %v159 = vshrl.u32 %v158, 7
  %v160 = vsub.s32 0, %v159
  %v161 = vrot.slane %v156, %v160
  %v163 = vmul.f32 %v91, %v161
  %v164 = vmul.f32 %v92, %v161
  %v165 = vmul.f32 %v93, %v161
  %v166 = vmul.f32 %v94, %v161
  %v167 = vmul.f32 %v95, %v161
  %v168 = vmul.f32 %v96, %v161
  %v169 = vmul.f32 %v97, %v161
  %v170 = vmul.f32 %v98, %v161
  %v171 = vmul.f32 %v99, %v161
  %v172 = vmul.f32 %v100, %v161
  %v173 = vmul.f32 %v101, %v161
  %v174 = vmul.f32 %v102, %v161
  %v175 = vmul.f32 %v103, %v161
  %v176 = vmul.f32 %v104, %v161
  %v177 = vmul.f32 %v105, %v161
  %v178 = vmul.f32 %v106, %v161
  %v179 = vmul.f32 %v107, %v161
  %v180 = vmul.f32 %v108, %v161
  %v181 = vmul.f32 %v109, %v161
  %v182 = vmul.f32 %v110, %v161
  %v183 = vmul.f32 %v111, %v161
  %v184 = vmul.f32 %v112, %v161
  %v185 = vmul.f32 %v113, %v161
  %v186 = vmul.f32 %v114, %v161
  %v187 = vmul.f32 %v115, %v161
  %v188 = vmul.f32 %v116, %v161
  %v189 = vmul.f32 %v117, %v161
  %v190 = vmul.f32 %v118, %v161
  %v191 = vmul.f32 %v119, %v161
  %v192 = vmul.f32 %v120, %v161
  %v193 = vmul.f32 %v121, %v161
  %v194 = vmul.f32 %v122, %v161
  %v195 = vmul.f32 %v123, %v161
  %v196 = vmul.f32 %v124, %v161
  %v197 = vmul.f32 %v125, %v161
  %v198 = vmul.f32 %v126, %v161
  %v199 = vmul.f32 %v127, %v161
  %v200 = vmul.f32 %v128, %v161
  %v201 = vmul.f32 %v129, %v161
  %v202 = vmul.f32 %v130, %v161
  %v203 = vmul.f32 %v131, %v161
  %v204 = vmul.f32 %v132, %v161
  %v205 = vmul.f32 %v133, %v161
  %v206 = vmul.f32 %v134, %v161
  %v207 = vmul.f32 %v135, %v161
  %v208 = vmul.f32 %v136, %v161
  %v209 = vmul.f32 %v137, %v161
  %v210 = vmul.f32 %v138, %v161
  %v211 = vmul.f32 %v139, %v161
  %v212 = vmul.f32 %v140, %v161
  %v213 = vmul.f32 %v141, %v161
  %v214 = vmul.f32 %v142, %v161
  %v215 = vmul.f32 %v143, %v161
  %v216 = vmul.f32 %v144, %v161
  %v217 = vmul.f32 %v145, %v161
  %v218 = vmul.f32 %v146, %v161
  %v219 = vmul.f32 %v147, %v161
  %v220 = vmul.f32 %v148, %v161
  %v221 = vmul.f32 %v149, %v161
  %v222 = vmul.f32 %v150, %v161
  %v223 = vmul.f32 %v151, %v161
  %v224 = vmul.f32 %v152, %v161
  %v225 = vmul.f32 %v153, %v161
  %v226 = vmul.f32 %v154, %v161
  %vm227 = vcmp.ge.f32.partialorder %v163, 0.0
  %vm228 = vcmp.ge.f32.partialorder %v164, 0.0
  %vm229 = vcmp.ge.f32.partialorder %v165, 0.0
  %vm230 = vcmp.ge.f32.partialorder %v166, 0.0
  %vm231 = vcmp.ge.f32.partialorder %v167, 0.0
  %vm232 = vcmp.ge.f32.partialorder %v168, 0.0
  %vm233 = vcmp.ge.f32.partialorder %v169, 0.0
  %vm234 = vcmp.ge.f32.partialorder %v170, 0.0
  %vm235 = vcmp.ge.f32.partialorder %v171, 0.0
  %vm236 = vcmp.ge.f32.partialorder %v172, 0.0
  %vm237 = vcmp.ge.f32.partialorder %v173, 0.0
  %vm238 = vcmp.ge.f32.partialorder %v174, 0.0
  %vm239 = vcmp.ge.f32.partialorder %v175, 0.0
  %vm240 = vcmp.ge.f32.partialorder %v176, 0.0
  %vm241 = vcmp.ge.f32.partialorder %v177, 0.0
  %vm242 = vcmp.ge.f32.partialorder %v178, 0.0
  %vm243 = vcmp.ge.f32.partialorder %v179, 0.0
  %vm244 = vcmp.ge.f32.partialorder %v180, 0.0
  %vm245 = vcmp.ge.f32.partialorder %v181, 0.0
  %vm246 = vcmp.ge.f32.partialorder %v182, 0.0
  %vm247 = vcmp.ge.f32.partialorder %v183, 0.0
  %vm248 = vcmp.ge.f32.partialorder %v184, 0.0
  %vm249 = vcmp.ge.f32.partialorder %v185, 0.0
  %vm250 = vcmp.ge.f32.partialorder %v186, 0.0
  %vm251 = vcmp.ge.f32.partialorder %v187, 0.0
  %vm252 = vcmp.ge.f32.partialorder %v188, 0.0
  %vm253 = vcmp.ge.f32.partialorder %v189, 0.0
  %vm254 = vcmp.ge.f32.partialorder %v190, 0.0
  %vm255 = vcmp.ge.f32.partialorder %v191, 0.0
  %vm256 = vcmp.ge.f32.partialorder %v192, 0.0
  %vm257 = vcmp.ge.f32.partialorder %v193, 0.0
  %vm258 = vcmp.ge.f32.partialorder %v194, 0.0
  %vm259 = vcmp.ge.f32.partialorder %v195, 0.0
  %vm260 = vcmp.ge.f32.partialorder %v196, 0.0
  %vm261 = vcmp.ge.f32.partialorder %v197, 0.0
  %vm262 = vcmp.ge.f32.partialorder %v198, 0.0
  %vm263 = vcmp.ge.f32.partialorder %v199, 0.0
  %vm264 = vcmp.ge.f32.partialorder %v200, 0.0
  %vm265 = vcmp.ge.f32.partialorder %v201, 0.0
  %vm266 = vcmp.ge.f32.partialorder %v202, 0.0
  %vm267 = vcmp.ge.f32.partialorder %v203, 0.0
  %vm268 = vcmp.ge.f32.partialorder %v204, 0.0
  %vm269 = vcmp.ge.f32.partialorder %v205, 0.0
  %vm270 = vcmp.ge.f32.partialorder %v206, 0.0
  %vm271 = vcmp.ge.f32.partialorder %v207, 0.0
  %vm272 = vcmp.ge.f32.partialorder %v208, 0.0
  %vm273 = vcmp.ge.f32.partialorder %v209, 0.0
  %vm274 = vcmp.ge.f32.partialorder %v210, 0.0
  %vm275 = vcmp.ge.f32.partialorder %v211, 0.0
  %vm276 = vcmp.ge.f32.partialorder %v212, 0.0
  %vm277 = vcmp.ge.f32.partialorder %v213, 0.0
  %vm278 = vcmp.ge.f32.partialorder %v214, 0.0
  %vm279 = vcmp.ge.f32.partialorder %v215, 0.0
  %vm280 = vcmp.ge.f32.partialorder %v216, 0.0
  %vm281 = vcmp.ge.f32.partialorder %v217, 0.0
  %vm282 = vcmp.ge.f32.partialorder %v218, 0.0
  %vm283 = vcmp.ge.f32.partialorder %v219, 0.0
  %vm284 = vcmp.ge.f32.partialorder %v220, 0.0
  %vm285 = vcmp.ge.f32.partialorder %v221, 0.0
  %vm286 = vcmp.ge.f32.partialorder %v222, 0.0
  %vm287 = vcmp.ge.f32.partialorder %v223, 0.0
  %vm288 = vcmp.ge.f32.partialorder %v224, 0.0
  %vm289 = vcmp.ge.f32.partialorder %v225, 0.0
  %vm290 = vcmp.ge.f32.partialorder %v226, 0.0
  %v291 = vmul.f32 %v163, 0.2
  %v292 = vmul.f32 %v164, 0.2
  %v293 = vmul.f32 %v165, 0.2
  %v294 = vmul.f32 %v166, 0.2
  %v295 = vmul.f32 %v167, 0.2
  %v296 = vmul.f32 %v168, 0.2
  %v297 = vmul.f32 %v169, 0.2
  %v298 = vmul.f32 %v170, 0.2
  %v299 = vmul.f32 %v171, 0.2
  %v300 = vmul.f32 %v172, 0.2
  %v301 = vmul.f32 %v173, 0.2
  %v302 = vmul.f32 %v174, 0.2
  %v303 = vmul.f32 %v175, 0.2
  %v304 = vmul.f32 %v176, 0.2
  %v305 = vmul.f32 %v177, 0.2
  %v306 = vmul.f32 %v178, 0.2
  %v307 = vmul.f32 %v179, 0.2
  %v308 = vmul.f32 %v180, 0.2
  %v309 = vmul.f32 %v181, 0.2
  %v310 = vmul.f32 %v182, 0.2
  %v311 = vmul.f32 %v183, 0.2
  %v312 = vmul.f32 %v184, 0.2
  %v313 = vmul.f32 %v185, 0.2
  %v314 = vmul.f32 %v186, 0.2
  %v315 = vmul.f32 %v187, 0.2
  %v316 = vmul.f32 %v188, 0.2
  %v317 = vmul.f32 %v189, 0.2
  %v318 = vmul.f32 %v190, 0.2
  %v319 = vmul.f32 %v191, 0.2
  %v320 = vmul.f32 %v192, 0.2
  %v321 = vmul.f32 %v193, 0.2
  %v322 = vmul.f32 %v194, 0.2
  %v323 = vmul.f32 %v195, 0.2
  %v324 = vmul.f32 %v196, 0.2
  %v325 = vmul.f32 %v197, 0.2
  %v326 = vmul.f32 %v198, 0.2
  %v327 = vmul.f32 %v199, 0.2
  %v328 = vmul.f32 %v200, 0.2
  %v329 = vmul.f32 %v201, 0.2
  %v330 = vmul.f32 %v202, 0.2
  %v331 = vmul.f32 %v203, 0.2
  %v332 = vmul.f32 %v204, 0.2
  %v333 = vmul.f32 %v205, 0.2
  %v334 = vmul.f32 %v206, 0.2
  %v335 = vmul.f32 %v207, 0.2
  %v336 = vmul.f32 %v208, 0.2
  %v337 = vmul.f32 %v209, 0.2
  %v338 = vmul.f32 %v210, 0.2
  %v339 = vmul.f32 %v211, 0.2
  %v340 = vmul.f32 %v212, 0.2
  %v341 = vmul.f32 %v213, 0.2
  %v342 = vmul.f32 %v214, 0.2
  %v343 = vmul.f32 %v215, 0.2
  %v344 = vmul.f32 %v216, 0.2
  %v345 = vmul.f32 %v217, 0.2
  %v346 = vmul.f32 %v218, 0.2
  %v347 = vmul.f32 %v219, 0.2
  %v348 = vmul.f32 %v220, 0.2
  %v349 = vmul.f32 %v221, 0.2
  %v350 = vmul.f32 %v222, 0.2
  %v351 = vmul.f32 %v223, 0.2
  %v352 = vmul.f32 %v224, 0.2
  %v353 = vmul.f32 %v225, 0.2
  %v354 = vmul.f32 %v226, 0.2
  %v355 = vsel %vm227, %v163, %v291
  %v356 = vsel %vm228, %v164, %v292
  %v357 = vsel %vm229, %v165, %v293
  %v358 = vsel %vm230, %v166, %v294
  %v359 = vsel %vm231, %v167, %v295
  %v360 = vsel %vm232, %v168, %v296
  %v361 = vsel %vm233, %v169, %v297
  %v362 = vsel %vm234, %v170, %v298
  %v363 = vsel %vm235, %v171, %v299
  %v364 = vsel %vm236, %v172, %v300
  %v365 = vsel %vm237, %v173, %v301
  %v366 = vsel %vm238, %v174, %v302
  %v367 = vsel %vm239, %v175, %v303
  %v368 = vsel %vm240, %v176, %v304
  %v369 = vsel %vm241, %v177, %v305
  %v370 = vsel %vm242, %v178, %v306
  %v371 = vsel %vm243, %v179, %v307
  %v372 = vsel %vm244, %v180, %v308
  %v373 = vsel %vm245, %v181, %v309
  %v374 = vsel %vm246, %v182, %v310
  %v375 = vsel %vm247, %v183, %v311
  %v376 = vsel %vm248, %v184, %v312
  %v377 = vsel %vm249, %v185, %v313
  %v378 = vsel %vm250, %v186, %v314
  %v379 = vsel %vm251, %v187, %v315
  %v380 = vsel %vm252, %v188, %v316
  %v381 = vsel %vm253, %v189, %v317
  %v382 = vsel %vm254, %v190, %v318
  %v383 = vsel %vm255, %v191, %v319
  %v384 = vsel %vm256, %v192, %v320
  %v385 = vsel %vm257, %v193, %v321
  %v386 = vsel %vm258, %v194, %v322
  %v387 = vsel %vm259, %v195, %v323
  %v388 = vsel %vm260, %v196, %v324
  %v389 = vsel %vm261, %v197, %v325
  %v390 = vsel %vm262, %v198, %v326
  %v391 = vsel %vm263, %v199, %v327
  %v392 = vsel %vm264, %v200, %v328
  %v393 = vsel %vm265, %v201, %v329
  %v394 = vsel %vm266, %v202, %v330
  %v395 = vsel %vm267, %v203, %v331
  %v396 = vsel %vm268, %v204, %v332
  %v397 = vsel %vm269, %v205, %v333
  %v398 = vsel %vm270, %v206, %v334
  %v399 = vsel %vm271, %v207, %v335
  %v400 = vsel %vm272, %v208, %v336
  %v401 = vsel %vm273, %v209, %v337
  %v402 = vsel %vm274, %v210, %v338
  %v403 = vsel %vm275, %v211, %v339
  %v404 = vsel %vm276, %v212, %v340
  %v405 = vsel %vm277, %v213, %v341
  %v406 = vsel %vm278, %v214, %v342
  %v407 = vsel %vm279, %v215, %v343
  %v408 = vsel %vm280, %v216, %v344
  %v409 = vsel %vm281, %v217, %v345
  %v410 = vsel %vm282, %v218, %v346
  %v411 = vsel %vm283, %v219, %v347
  %v412 = vsel %vm284, %v220, %v348
  %v413 = vsel %vm285, %v221, %v349
  %v414 = vsel %vm286, %v222, %v350
  %v415 = vsel %vm287, %v223, %v351
  %v416 = vsel %vm288, %v224, %v352
  %v417 = vsel %vm289, %v225, %v353
  %v418 = vsel %vm290, %v226, %v354
  %vm419 = vcmask 130048
  %420 = vst.msk [vmem:[%s3] sm:$0xff] %vm419, %v355
  %421 = vst.msk [vmem:[%s3 + $0x8] sm:$0xff] %vm419, %v356
  %422 = vst.msk [vmem:[%s3 + $0x10] sm:$0xff] %vm419, %v357
  %423 = vst.msk [vmem:[%s3 + $0x18] sm:$0xff] %vm419, %v358
  %424 = vst.msk [vmem:[%s3 + $0x20] sm:$0xff] %vm419, %v359
  %425 = vst.msk [vmem:[%s3 + $0x28] sm:$0xff] %vm419, %v360
  %426 = vst.msk [vmem:[%s3 + $0x30] sm:$0xff] %vm419, %v361
  %427 = vst.msk [vmem:[%s3 + $0x38] sm:$0xff] %vm419, %v362
  %428 = vst.msk [vmem:[%s3 + $0x40] sm:$0xff] %vm419, %v363
  %429 = vst.msk [vmem:[%s3 + $0x48] sm:$0xff] %vm419, %v364
  %430 = vst.msk [vmem:[%s3 + $0x50] sm:$0xff] %vm419, %v365
  %431 = vst.msk [vmem:[%s3 + $0x58] sm:$0xff] %vm419, %v366
  %432 = vst.msk [vmem:[%s3 + $0x60] sm:$0xff] %vm419, %v367
  %433 = vst.msk [vmem:[%s3 + $0x68] sm:$0xff] %vm419, %v368
  %434 = vst.msk [vmem:[%s3 + $0x70] sm:$0xff] %vm419, %v369
  %435 = vst.msk [vmem:[%s3 + $0x78] sm:$0xff] %vm419, %v370
  %436 = vst.msk [vmem:[%s3 + $0x80] sm:$0xff] %vm419, %v371
  %437 = vst.msk [vmem:[%s3 + $0x88] sm:$0xff] %vm419, %v372
  %438 = vst.msk [vmem:[%s3 + $0x90] sm:$0xff] %vm419, %v373
  %439 = vst.msk [vmem:[%s3 + $0x98] sm:$0xff] %vm419, %v374
  %440 = vst.msk [vmem:[%s3 + $0xa0] sm:$0xff] %vm419, %v375
  %441 = vst.msk [vmem:[%s3 + $0xa8] sm:$0xff] %vm419, %v376
  %442 = vst.msk [vmem:[%s3 + $0xb0] sm:$0xff] %vm419, %v377
  %443 = vst.msk [vmem:[%s3 + $0xb8] sm:$0xff] %vm419, %v378
  %444 = vst.msk [vmem:[%s3 + $0xc0] sm:$0xff] %vm419, %v379
  %445 = vst.msk [vmem:[%s3 + $0xc8] sm:$0xff] %vm419, %v380
  %446 = vst.msk [vmem:[%s3 + $0xd0] sm:$0xff] %vm419, %v381
  %447 = vst.msk [vmem:[%s3 + $0xd8] sm:$0xff] %vm419, %v382
  %448 = vst.msk [vmem:[%s3 + $0xe0] sm:$0xff] %vm419, %v383
  %449 = vst.msk [vmem:[%s3 + $0xe8] sm:$0xff] %vm419, %v384
  %450 = vst.msk [vmem:[%s3 + $0xf0] sm:$0xff] %vm419, %v385
  %451 = vst.msk [vmem:[%s3 + $0xf8] sm:$0xff] %vm419, %v386
  %452 = vst.msk [vmem:[%s3 + $0x100] sm:$0xff] %vm419, %v387
  %453 = vst.msk [vmem:[%s3 + $0x108] sm:$0xff] %vm419, %v388
  %454 = vst.msk [vmem:[%s3 + $0x110] sm:$0xff] %vm419, %v389
  %455 = vst.msk [vmem:[%s3 + $0x118] sm:$0xff] %vm419, %v390
  %456 = vst.msk [vmem:[%s3 + $0x120] sm:$0xff] %vm419, %v391
  %457 = vst.msk [vmem:[%s3 + $0x128] sm:$0xff] %vm419, %v392
  %458 = vst.msk [vmem:[%s3 + $0x130] sm:$0xff] %vm419, %v393
  %459 = vst.msk [vmem:[%s3 + $0x138] sm:$0xff] %vm419, %v394
  %460 = vst.msk [vmem:[%s3 + $0x140] sm:$0xff] %vm419, %v395
  %461 = vst.msk [vmem:[%s3 + $0x148] sm:$0xff] %vm419, %v396
  %462 = vst.msk [vmem:[%s3 + $0x150] sm:$0xff] %vm419, %v397
  %463 = vst.msk [vmem:[%s3 + $0x158] sm:$0xff] %vm419, %v398
  %464 = vst.msk [vmem:[%s3 + $0x160] sm:$0xff] %vm419, %v399
  %465 = vst.msk [vmem:[%s3 + $0x168] sm:$0xff] %vm419, %v400
  %466 = vst.msk [vmem:[%s3 + $0x170] sm:$0xff] %vm419, %v401
  %467 = vst.msk [vmem:[%s3 + $0x178] sm:$0xff] %vm419, %v402
  %468 = vst.msk [vmem:[%s3 + $0x180] sm:$0xff] %vm419, %v403
  %469 = vst.msk [vmem:[%s3 + $0x188] sm:$0xff] %vm419, %v404
  %470 = vst.msk [vmem:[%s3 + $0x190] sm:$0xff] %vm419, %v405
  %471 = vst.msk [vmem:[%s3 + $0x198] sm:$0xff] %vm419, %v406
  %472 = vst.msk [vmem:[%s3 + $0x1a0] sm:$0xff] %vm419, %v407
  %473 = vst.msk [vmem:[%s3 + $0x1a8] sm:$0xff] %vm419, %v408
  %474 = vst.msk [vmem:[%s3 + $0x1b0] sm:$0xff] %vm419, %v409
  %475 = vst.msk [vmem:[%s3 + $0x1b8] sm:$0xff] %vm419, %v410
  %476 = vst.msk [vmem:[%s3 + $0x1c0] sm:$0xff] %vm419, %v411
  %477 = vst.msk [vmem:[%s3 + $0x1c8] sm:$0xff] %vm419, %v412
  %478 = vst.msk [vmem:[%s3 + $0x1d0] sm:$0xff] %vm419, %v413
  %479 = vst.msk [vmem:[%s3 + $0x1d8] sm:$0xff] %vm419, %v414
  %480 = vst.msk [vmem:[%s3 + $0x1e0] sm:$0xff] %vm419, %v415
  %481 = vst.msk [vmem:[%s3 + $0x1e8] sm:$0xff] %vm419, %v416
  %482 = vst.msk [vmem:[%s3 + $0x1f0] sm:$0xff] %vm419, %v417
  %483 = vst.msk [vmem:[%s3 + $0x1f8] sm:$0xff] %vm419, %v418
  // Predicated region
  $region14: #{conv_discriminator_forward.10} parent=0 // pred_check
    _
  $region15: #{conv_discriminator_forward.10} parent=0 // pred_check_branch
    %485 = sbr.rel (0) target = $region17
  $region16: #{conv_discriminator_forward.10} parent=0 // pred_region
    _
  $region17: #{conv_discriminator_forward.10} parent=0 // pred_fallthru
    _
  // Predicated region
  $region18: #{conv_discriminator_forward.10} parent=0 // pred_check
    _
  $region19: #{conv_discriminator_forward.10} parent=0 // pred_check_branch
    %487 = sbr.rel (0) target = $region21
  $region20: #{conv_discriminator_forward.10} parent=0 // pred_region
    _
  $region21: #{conv_discriminator_forward.10} parent=0 // pred_fallthru
    _

// kernel: conv_discriminator_forward.9
$region0: #{conv_discriminator_forward.9}
  #allocation0 [shape = 'u32[]', space=smem, size = 0x4, offset = 0x4, fixed_abs, tag = 'smem constant byte address 0x4 - core index']
  #allocation1 [shape = 'u32[144,128]{1,0:T(1,128)}', space=vmem, size = 0x12000, scoped, tag = 'internal scratch']
  %s0 = inlined_call_operand.vmem [shape: bf16[512,128], index: 0, kind: input, shape index: {}]
  %s1 = inlined_call_operand.vmem [shape: bf16[128,16], index: 1, kind: input, shape index: {}]
  %s2 = inlined_call_operand.vmem [shape: f32[512,16], index: 2, kind: output, shape index: {0}]
  %s3 = inlined_call_operand.vmem [shape: f32[1,16], index: 3, kind: output, shape index: {1}]
  %s4 = inlined_call_operand.vmem [shape: f32[1,16], index: 4, kind: output, shape index: {2}]
  %5 = xla_tuple %s2, %s3, %s4
  %s6 = sld [smem:[#allocation0]]
  $region38: #{conv_discriminator_forward.9} parent=0
    _
  %s8 = ssub.s32 1, %s6
  %s9 = scalar_select 0, %s8, %s6
  // Predicated region
  $region2: #{conv_discriminator_forward.9} parent=0 // pred_check
    _
  $region3: #{conv_discriminator_forward.9} parent=0 // pred_check_branch
    %11 = sbr.rel (0) target = $region5
  $region4: #{conv_discriminator_forward.9} parent=0 // pred_region
    _
  $region5: #{conv_discriminator_forward.9} parent=0 // pred_fallthru
    _
  // Predicated region
  $region6: #{conv_discriminator_forward.9} parent=0 // pred_check
    _
  $region7: #{conv_discriminator_forward.9} parent=0 // pred_check_branch
    %13 = sbr.rel (0) target = $region9
  $region8: #{conv_discriminator_forward.9} parent=0 // pred_region
    _
  $region9: #{conv_discriminator_forward.9} parent=0 // pred_fallthru
    _
  %p15 = scmp.eq.s32.totalorder 0, 0
  // Predicated region
  $region10: #{conv_discriminator_forward.9} parent=0 // pred_check
    %p16 = pneg %p15
  $region11: #{conv_discriminator_forward.9} parent=0 // pred_check_branch
    %18 = sbr.rel (%p16) target = $region13
  $region12: #{conv_discriminator_forward.9} parent=0 // pred_region
    %vm19 = vcmask 122880
    %20 = vst.msk [vmem:[%s3] sm:$0x1] %vm19, 0.0
    %21 = vst.msk [vmem:[%s4] sm:$0x1] %vm19, 0.0
  $region13: #{conv_discriminator_forward.9} parent=0 // pred_fallthru
    _
  %v22 = vld [vmem:[%s0] sm:$0xf]
  %v23 = vld [vmem:[%s0 + $0x4] sm:$0xf]
  %v24 = vld [vmem:[%s0 + $0x8] sm:$0xf]
  %v25 = vld [vmem:[%s0 + $0xc] sm:$0xf]
  %v26 = vld [vmem:[%s0 + $0x10] sm:$0xf]
  %v27 = vld [vmem:[%s0 + $0x14] sm:$0xf]
  %v28 = vld [vmem:[%s0 + $0x18] sm:$0xf]
  %v29 = vld [vmem:[%s0 + $0x1c] sm:$0xf]
  %v30 = vld [vmem:[%s0 + $0x20] sm:$0xf]
  %v31 = vld [vmem:[%s0 + $0x24] sm:$0xf]
  %v32 = vld [vmem:[%s0 + $0x28] sm:$0xf]
  %v33 = vld [vmem:[%s0 + $0x2c] sm:$0xf]
  %v34 = vld [vmem:[%s0 + $0x30] sm:$0xf]
  %v35 = vld [vmem:[%s0 + $0x34] sm:$0xf]
  %v36 = vld [vmem:[%s0 + $0x38] sm:$0xf]
  %v37 = vld [vmem:[%s0 + $0x3c] sm:$0xf]
  %v38 = vld [vmem:[%s0 + $0x40] sm:$0xf]
  %v39 = vld [vmem:[%s0 + $0x44] sm:$0xf]
  %v40 = vld [vmem:[%s0 + $0x48] sm:$0xf]
  %v41 = vld [vmem:[%s0 + $0x4c] sm:$0xf]
  %v42 = vld [vmem:[%s0 + $0x50] sm:$0xf]
  %v43 = vld [vmem:[%s0 + $0x54] sm:$0xf]
  %v44 = vld [vmem:[%s0 + $0x58] sm:$0xf]
  %v45 = vld [vmem:[%s0 + $0x5c] sm:$0xf]
  %v46 = vld [vmem:[%s0 + $0x60] sm:$0xf]
  %v47 = vld [vmem:[%s0 + $0x64] sm:$0xf]
  %v48 = vld [vmem:[%s0 + $0x68] sm:$0xf]
  %v49 = vld [vmem:[%s0 + $0x6c] sm:$0xf]
  %v50 = vld [vmem:[%s0 + $0x70] sm:$0xf]
  %v51 = vld [vmem:[%s0 + $0x74] sm:$0xf]
  %v52 = vld [vmem:[%s0 + $0x78] sm:$0xf]
  %v53 = vld [vmem:[%s0 + $0x7c] sm:$0xf]
  %v54 = vld [vmem:[%s0 + $0x80] sm:$0xf]
  %v55 = vld [vmem:[%s0 + $0x84] sm:$0xf]
  %v56 = vld [vmem:[%s0 + $0x88] sm:$0xf]
  %v57 = vld [vmem:[%s0 + $0x8c] sm:$0xf]
  %v58 = vld [vmem:[%s0 + $0x90] sm:$0xf]
  %v59 = vld [vmem:[%s0 + $0x94] sm:$0xf]
  %v60 = vld [vmem:[%s0 + $0x98] sm:$0xf]
  %v61 = vld [vmem:[%s0 + $0x9c] sm:$0xf]
  %v62 = vld [vmem:[%s0 + $0xa0] sm:$0xf]
  %v63 = vld [vmem:[%s0 + $0xa4] sm:$0xf]
  %v64 = vld [vmem:[%s0 + $0xa8] sm:$0xf]
  %v65 = vld [vmem:[%s0 + $0xac] sm:$0xf]
  %v66 = vld [vmem:[%s0 + $0xb0] sm:$0xf]
  %v67 = vld [vmem:[%s0 + $0xb4] sm:$0xf]
  %v68 = vld [vmem:[%s0 + $0xb8] sm:$0xf]
  %v69 = vld [vmem:[%s0 + $0xbc] sm:$0xf]
  %v70 = vld [vmem:[%s0 + $0xc0] sm:$0xf]
  %v71 = vld [vmem:[%s0 + $0xc4] sm:$0xf]
  %v72 = vld [vmem:[%s0 + $0xc8] sm:$0xf]
  %v73 = vld [vmem:[%s0 + $0xcc] sm:$0xf]
  %v74 = vld [vmem:[%s0 + $0xd0] sm:$0xf]
  %v75 = vld [vmem:[%s0 + $0xd4] sm:$0xf]
  %v76 = vld [vmem:[%s0 + $0xd8] sm:$0xf]
  %v77 = vld [vmem:[%s0 + $0xdc] sm:$0xf]
  %v78 = vld [vmem:[%s0 + $0xe0] sm:$0xf]
  %v79 = vld [vmem:[%s0 + $0xe4] sm:$0xf]
  %v80 = vld [vmem:[%s0 + $0xe8] sm:$0xf]
  %v81 = vld [vmem:[%s0 + $0xec] sm:$0xf]
  %v82 = vld [vmem:[%s0 + $0xf0] sm:$0xf]
  %v83 = vld [vmem:[%s0 + $0xf4] sm:$0xf]
  %v84 = vld [vmem:[%s0 + $0xf8] sm:$0xf]
  %v85 = vld [vmem:[%s0 + $0xfc] sm:$0xf]
  %v86 = vld [vmem:[%s1] sm:$0xf]
  %v87 = vld [vmem:[%s1 + $0x4] sm:$0xf]
  %v88 = vld [vmem:[%s1 + $0x8] sm:$0xf]
  %v89 = vld [vmem:[%s1 + $0xc] sm:$0xf]
  %v90 = vld [vmem:[%s1 + $0x10] sm:$0xf]
  %v91 = vld [vmem:[%s1 + $0x14] sm:$0xf]
  %v92 = vld [vmem:[%s1 + $0x18] sm:$0xf]
  %v93 = vld [vmem:[%s1 + $0x1c] sm:$0xf]
  %v94 = vld [vmem:[%s1 + $0x20] sm:$0xf]
  %v95 = vld [vmem:[%s1 + $0x24] sm:$0xf]
  %v96 = vld [vmem:[%s1 + $0x28] sm:$0xf]
  %v97 = vld [vmem:[%s1 + $0x2c] sm:$0xf]
  %v98 = vld [vmem:[%s1 + $0x30] sm:$0xf]
  %v99 = vld [vmem:[%s1 + $0x34] sm:$0xf]
  %v100 = vld [vmem:[%s1 + $0x38] sm:$0xf]
  %v101 = vld [vmem:[%s1 + $0x3c] sm:$0xf]
  %v166 = vunpack.c.l.b16 %v22
  %v167 = vunpack.c.l.b16 %v23
  %v168 = vunpack.c.l.b16 %v24
  %v169 = vunpack.c.l.b16 %v25
  %v170 = vunpack.c.l.b16 %v26
  %v171 = vunpack.c.l.b16 %v27
  %v172 = vunpack.c.l.b16 %v28
  %v173 = vunpack.c.l.b16 %v29
  %v174 = vunpack.c.l.b16 %v30
  %v175 = vunpack.c.l.b16 %v31
  %v176 = vunpack.c.l.b16 %v32
  %v177 = vunpack.c.l.b16 %v33
  %v178 = vunpack.c.l.b16 %v34
  %v179 = vunpack.c.l.b16 %v35
  %v180 = vunpack.c.l.b16 %v36
  %v181 = vunpack.c.l.b16 %v37
  %v182 = vunpack.c.l.b16 %v38
  %v183 = vunpack.c.l.b16 %v39
  %v184 = vunpack.c.l.b16 %v40
  %v185 = vunpack.c.l.b16 %v41
  %v186 = vunpack.c.l.b16 %v42
  %v187 = vunpack.c.l.b16 %v43
  %v188 = vunpack.c.l.b16 %v44
  %v189 = vunpack.c.l.b16 %v45
  %v190 = vunpack.c.l.b16 %v46
  %v191 = vunpack.c.l.b16 %v47
  %v192 = vunpack.c.l.b16 %v48
  %v193 = vunpack.c.l.b16 %v49
  %v194 = vunpack.c.l.b16 %v50
  %v195 = vunpack.c.l.b16 %v51
  %v196 = vunpack.c.l.b16 %v52
  %v197 = vunpack.c.l.b16 %v53
  %v198 = vunpack.c.l.b16 %v54
  %v199 = vunpack.c.l.b16 %v55
  %v200 = vunpack.c.l.b16 %v56
  %v201 = vunpack.c.l.b16 %v57
  %v202 = vunpack.c.l.b16 %v58
  %v203 = vunpack.c.l.b16 %v59
  %v204 = vunpack.c.l.b16 %v60
  %v205 = vunpack.c.l.b16 %v61
  %v206 = vunpack.c.l.b16 %v62
  %v207 = vunpack.c.l.b16 %v63
  %v208 = vunpack.c.l.b16 %v64
  %v209 = vunpack.c.l.b16 %v65
  %v210 = vunpack.c.l.b16 %v66
  %v211 = vunpack.c.l.b16 %v67
  %v212 = vunpack.c.l.b16 %v68
  %v213 = vunpack.c.l.b16 %v69
  %v214 = vunpack.c.l.b16 %v70
  %v215 = vunpack.c.l.b16 %v71
  %v216 = vunpack.c.l.b16 %v72
  %v217 = vunpack.c.l.b16 %v73
  %v218 = vunpack.c.l.b16 %v74
  %v219 = vunpack.c.l.b16 %v75
  %v220 = vunpack.c.l.b16 %v76
  %v221 = vunpack.c.l.b16 %v77
  %v222 = vunpack.c.l.b16 %v78
  %v223 = vunpack.c.l.b16 %v79
  %v224 = vunpack.c.l.b16 %v80
  %v225 = vunpack.c.l.b16 %v81
  %v226 = vunpack.c.l.b16 %v82
  %v227 = vunpack.c.l.b16 %v83
  %v228 = vunpack.c.l.b16 %v84
  %v229 = vunpack.c.l.b16 %v85
  %v230 = vpack.c.b16 %v167, %v166
  %v231 = vpack.c.b16 %v169, %v168
  %v232 = vpack.c.b16 %v171, %v170
  %v233 = vpack.c.b16 %v173, %v172
  %v234 = vpack.c.b16 %v175, %v174
  %v235 = vpack.c.b16 %v177, %v176
  %v236 = vpack.c.b16 %v179, %v178
  %v237 = vpack.c.b16 %v181, %v180
  %v238 = vpack.c.b16 %v183, %v182
  %v239 = vpack.c.b16 %v185, %v184
  %v240 = vpack.c.b16 %v187, %v186
  %v241 = vpack.c.b16 %v189, %v188
  %v242 = vpack.c.b16 %v191, %v190
  %v243 = vpack.c.b16 %v193, %v192
  %v244 = vpack.c.b16 %v195, %v194
  %v245 = vpack.c.b16 %v197, %v196
  %v246 = vpack.c.b16 %v199, %v198
  %v247 = vpack.c.b16 %v201, %v200
  %v248 = vpack.c.b16 %v203, %v202
  %v249 = vpack.c.b16 %v205, %v204
  %v250 = vpack.c.b16 %v207, %v206
  %v251 = vpack.c.b16 %v209, %v208
  %v252 = vpack.c.b16 %v211, %v210
  %v253 = vpack.c.b16 %v213, %v212
  %v254 = vpack.c.b16 %v215, %v214
  %v255 = vpack.c.b16 %v217, %v216
  %v256 = vpack.c.b16 %v219, %v218
  %v257 = vpack.c.b16 %v221, %v220
  %v258 = vpack.c.b16 %v223, %v222
  %v259 = vpack.c.b16 %v225, %v224
  %v260 = vpack.c.b16 %v227, %v226
  %v261 = vpack.c.b16 %v229, %v228
  %v310 = vunpack.c.l.b16 %v86
  %v311 = vunpack.c.l.b16 %v87
  %v312 = vunpack.c.l.b16 %v88
  %v313 = vunpack.c.l.b16 %v89
  %v314 = vunpack.c.l.b16 %v90
  %v315 = vunpack.c.l.b16 %v91
  %v316 = vunpack.c.l.b16 %v92
  %v317 = vunpack.c.l.b16 %v93
  %v318 = vunpack.c.l.b16 %v94
  %v319 = vunpack.c.l.b16 %v95
  %v320 = vunpack.c.l.b16 %v96
  %v321 = vunpack.c.l.b16 %v97
  %v322 = vunpack.c.l.b16 %v98
  %v323 = vunpack.c.l.b16 %v99
  %v324 = vunpack.c.l.b16 %v100
  %v325 = vunpack.c.l.b16 %v101
  %v326 = vpack.c.b16 %v311, %v310
  %v327 = vpack.c.b16 %v313, %v312
  %v328 = vpack.c.b16 %v315, %v314
  %v329 = vpack.c.b16 %v317, %v316
  %v330 = vpack.c.b16 %v319, %v318
  %v331 = vpack.c.b16 %v321, %v320
  %v332 = vpack.c.b16 %v323, %v322
  %v333 = vpack.c.b16 %v325, %v324
  %342 = vmatprep.subr.bf16.mxu0 0
  %343 = vmatpush1.bf16.msra.mxu0 %v326
  %344 = vmatprep.subr.bf16.mxu0 0
  %345 = vmatpush1.bf16.msra.mxu0 %v327
  %346 = vmatprep.subr.bf16.mxu0 0
  %347 = vmatpush1.bf16.msra.mxu0 %v328
  %348 = vmatprep.subr.bf16.mxu0 0
  %349 = vmatpush1.bf16.msra.mxu0 %v329
  %350 = vmatprep.subr.bf16.mxu0 0
  %351 = vmatpush1.bf16.msra.mxu0 %v330
  %352 = vmatprep.subr.bf16.mxu0 0
  %353 = vmatpush1.bf16.msra.mxu0 %v331
  %354 = vmatprep.subr.bf16.mxu0 0
  %355 = vmatpush1.bf16.msra.mxu0 %v332
  %356 = vmatprep.subr.bf16.mxu0 0
  %357 = vmatpush1.bf16.msra.mxu0 %v333
  %358 = vmatprep.subr.bf16.mxu0 0
  %359 = vmatpush1.bf16.msra.mxu0 0
  %360 = vmatprep.subr.bf16.mxu0 0
  %361 = vmatpush1.bf16.msra.mxu0 0
  %362 = vmatprep.subr.bf16.mxu0 0
  %363 = vmatpush1.bf16.msra.mxu0 0
  %364 = vmatprep.subr.bf16.mxu0 0
  %365 = vmatpush1.bf16.msra.mxu0 0
  %366 = vmatprep.subr.bf16.mxu0 0
  %367 = vmatpush1.bf16.msra.mxu0 0
  %368 = vmatprep.subr.bf16.mxu0 0
  %369 = vmatpush1.bf16.msra.mxu0 0
  %370 = vmatprep.subr.bf16.mxu0 0
  %371 = vmatpush1.bf16.msra.mxu0 0
  %372 = vmatprep.subr.bf16.mxu0 0
  %373 = vmatpush1.bf16.msra.mxu0 0
  %374 = vmatprep.mubr.bf16.mxu0 0
  %375 = vmatmul.mubr.bf16.gmra.mrb[0].mxu0 %v230
  %v376 = vpop.f32.mrb[0].mxu0
  %v377 = vadd.f32 0.0, %v376
  %v378 = vpop.f32.mrb[0].mxu0
  %v379 = vpop.f32.mrb[0].mxu0
  %v380 = vadd.f32 0.0, %v379
  %v381 = vpop.f32.mrb[0].mxu0
  %382 = vmatprep.mubr.bf16.mxu0 0
  %383 = vmatmul.mubr.bf16.gmra.mrb[0].mxu0 %v231
  %v384 = vpop.f32.mrb[0].mxu0
  %v385 = vadd.f32 0.0, %v384
  %v386 = vpop.f32.mrb[0].mxu0
  %v387 = vpop.f32.mrb[0].mxu0
  %v388 = vadd.f32 0.0, %v387
  %v389 = vpop.f32.mrb[0].mxu0
  %390 = vmatprep.mubr.bf16.mxu0 0
  %391 = vmatmul.mubr.bf16.gmra.mrb[0].mxu0 %v232
  %v392 = vpop.f32.mrb[0].mxu0
  %v393 = vadd.f32 0.0, %v392
  %v394 = vpop.f32.mrb[0].mxu0
  %v395 = vpop.f32.mrb[0].mxu0
  %v396 = vadd.f32 0.0, %v395
  %v397 = vpop.f32.mrb[0].mxu0
  %398 = vmatprep.mubr.bf16.mxu0 0
  %399 = vmatmul.mubr.bf16.gmra.mrb[0].mxu0 %v233
  %v400 = vpop.f32.mrb[0].mxu0
  %v401 = vadd.f32 0.0, %v400
  %v402 = vpop.f32.mrb[0].mxu0
  %v403 = vpop.f32.mrb[0].mxu0
  %v404 = vadd.f32 0.0, %v403
  %v405 = vpop.f32.mrb[0].mxu0
  %406 = vmatprep.mubr.bf16.mxu0 0
  %407 = vmatmul.mubr.bf16.gmra.mrb[0].mxu0 %v234
  %v408 = vpop.f32.mrb[0].mxu0
  %v409 = vadd.f32 0.0, %v408
  %v410 = vpop.f32.mrb[0].mxu0
  %v411 = vpop.f32.mrb[0].mxu0
  %v412 = vadd.f32 0.0, %v411
  %v413 = vpop.f32.mrb[0].mxu0
  %414 = vmatprep.mubr.bf16.mxu0 0
  %415 = vmatmul.mubr.bf16.gmra.mrb[0].mxu0 %v235
  %v416 = vpop.f32.mrb[0].mxu0
  %v417 = vadd.f32 0.0, %v416
  %v418 = vpop.f32.mrb[0].mxu0
  %v419 = vpop.f32.mrb[0].mxu0
  %v420 = vadd.f32 0.0, %v419
  %v421 = vpop.f32.mrb[0].mxu0
  %422 = vmatprep.mubr.bf16.mxu0 0
  %423 = vmatmul.mubr.bf16.gmra.mrb[0].mxu0 %v236
  %v424 = vpop.f32.mrb[0].mxu0
  %v425 = vadd.f32 0.0, %v424
  %v426 = vpop.f32.mrb[0].mxu0
  %v427 = vpop.f32.mrb[0].mxu0
  %v428 = vadd.f32 0.0, %v427
  %v429 = vpop.f32.mrb[0].mxu0
  %430 = vmatprep.mubr.bf16.mxu0 0
  %431 = vmatmul.mubr.bf16.gmra.mrb[0].mxu0 %v237
  %v432 = vpop.f32.mrb[0].mxu0
  %v433 = vadd.f32 0.0, %v432
  %v434 = vpop.f32.mrb[0].mxu0
  %v435 = vpop.f32.mrb[0].mxu0
  %v436 = vadd.f32 0.0, %v435
  %v437 = vpop.f32.mrb[0].mxu0
  %438 = vmatprep.mubr.bf16.mxu0 0
  %439 = vmatmul.mubr.bf16.gmra.mrb[0].mxu0 %v238
  %v440 = vpop.f32.mrb[0].mxu0
  %v441 = vadd.f32 0.0, %v440
  %v442 = vpop.f32.mrb[0].mxu0
  %v443 = vpop.f32.mrb[0].mxu0
  %v444 = vadd.f32 0.0, %v443
  %v445 = vpop.f32.mrb[0].mxu0
  %446 = vmatprep.mubr.bf16.mxu0 0
  %447 = vmatmul.mubr.bf16.gmra.mrb[0].mxu0 %v239
  %v448 = vpop.f32.mrb[0].mxu0
  %v449 = vadd.f32 0.0, %v448
  %v450 = vpop.f32.mrb[0].mxu0
  %v451 = vpop.f32.mrb[0].mxu0
  %v452 = vadd.f32 0.0, %v451
  %v453 = vpop.f32.mrb[0].mxu0
  %454 = vmatprep.mubr.bf16.mxu0 0
  %455 = vmatmul.mubr.bf16.gmra.mrb[0].mxu0 %v240
  %v456 = vpop.f32.mrb[0].mxu0
  %v457 = vadd.f32 0.0, %v456
  %v458 = vpop.f32.mrb[0].mxu0
  %v459 = vpop.f32.mrb[0].mxu0
  %v460 = vadd.f32 0.0, %v459
  %v461 = vpop.f32.mrb[0].mxu0
  %462 = vmatprep.mubr.bf16.mxu0 0
  %463 = vmatmul.mubr.bf16.gmra.mrb[0].mxu0 %v241
  %v464 = vpop.f32.mrb[0].mxu0
  %v465 = vadd.f32 0.0, %v464
  %v466 = vpop.f32.mrb[0].mxu0
  %v467 = vpop.f32.mrb[0].mxu0
  %v468 = vadd.f32 0.0, %v467
  %v469 = vpop.f32.mrb[0].mxu0
  %470 = vmatprep.mubr.bf16.mxu0 0
  %471 = vmatmul.mubr.bf16.gmra.mrb[0].mxu0 %v242
  %v472 = vpop.f32.mrb[0].mxu0
  %v473 = vadd.f32 0.0, %v472
  %v474 = vpop.f32.mrb[0].mxu0
  %v475 = vpop.f32.mrb[0].mxu0
  %v476 = vadd.f32 0.0, %v475
  %v477 = vpop.f32.mrb[0].mxu0
  %478 = vmatprep.mubr.bf16.mxu0 0
  %479 = vmatmul.mubr.bf16.gmra.mrb[0].mxu0 %v243
  %v480 = vpop.f32.mrb[0].mxu0
  %v481 = vadd.f32 0.0, %v480
  %v482 = vpop.f32.mrb[0].mxu0
  %v483 = vpop.f32.mrb[0].mxu0
  %v484 = vadd.f32 0.0, %v483
  %v485 = vpop.f32.mrb[0].mxu0
  %486 = vmatprep.mubr.bf16.mxu0 0
  %487 = vmatmul.mubr.bf16.gmra.mrb[0].mxu0 %v244
  %v488 = vpop.f32.mrb[0].mxu0
  %v489 = vadd.f32 0.0, %v488
  %v490 = vpop.f32.mrb[0].mxu0
  %v491 = vpop.f32.mrb[0].mxu0
  %v492 = vadd.f32 0.0, %v491
  %v493 = vpop.f32.mrb[0].mxu0
  %494 = vmatprep.mubr.bf16.mxu0 0
  %495 = vmatmul.mubr.bf16.gmra.mrb[0].mxu0 %v245
  %v496 = vpop.f32.mrb[0].mxu0
  %v497 = vadd.f32 0.0, %v496
  %v498 = vpop.f32.mrb[0].mxu0
  %v499 = vpop.f32.mrb[0].mxu0
  %v500 = vadd.f32 0.0, %v499
  %v501 = vpop.f32.mrb[0].mxu0
  %502 = vmatprep.mubr.bf16.mxu0 0
  %503 = vmatmul.mubr.bf16.gmra.mrb[0].mxu0 %v246
  %v504 = vpop.f32.mrb[0].mxu0
  %v505 = vadd.f32 0.0, %v504
  %v506 = vpop.f32.mrb[0].mxu0
  %v507 = vpop.f32.mrb[0].mxu0
  %v508 = vadd.f32 0.0, %v507
  %v509 = vpop.f32.mrb[0].mxu0
  %510 = vmatprep.mubr.bf16.mxu0 0
  %511 = vmatmul.mubr.bf16.gmra.mrb[0].mxu0 %v247
  %v512 = vpop.f32.mrb[0].mxu0
  %v513 = vadd.f32 0.0, %v512
  %v514 = vpop.f32.mrb[0].mxu0
  %v515 = vpop.f32.mrb[0].mxu0
  %v516 = vadd.f32 0.0, %v515
  %v517 = vpop.f32.mrb[0].mxu0
  %518 = vmatprep.mubr.bf16.mxu0 0
  %519 = vmatmul.mubr.bf16.gmra.mrb[0].mxu0 %v248
  %v520 = vpop.f32.mrb[0].mxu0
  %v521 = vadd.f32 0.0, %v520
  %v522 = vpop.f32.mrb[0].mxu0
  %v523 = vpop.f32.mrb[0].mxu0
  %v524 = vadd.f32 0.0, %v523
  %v525 = vpop.f32.mrb[0].mxu0
  %526 = vmatprep.mubr.bf16.mxu0 0
  %527 = vmatmul.mubr.bf16.gmra.mrb[0].mxu0 %v249
  %v528 = vpop.f32.mrb[0].mxu0
  %v529 = vadd.f32 0.0, %v528
  %v530 = vpop.f32.mrb[0].mxu0
  %v531 = vpop.f32.mrb[0].mxu0
  %v532 = vadd.f32 0.0, %v531
  %v533 = vpop.f32.mrb[0].mxu0
  %534 = vmatprep.mubr.bf16.mxu0 0
  %535 = vmatmul.mubr.bf16.gmra.mrb[0].mxu0 %v250
  %v536 = vpop.f32.mrb[0].mxu0
  %v537 = vadd.f32 0.0, %v536
  %v538 = vpop.f32.mrb[0].mxu0
  %v539 = vpop.f32.mrb[0].mxu0
  %v540 = vadd.f32 0.0, %v539
  %v541 = vpop.f32.mrb[0].mxu0
  %542 = vmatprep.mubr.bf16.mxu0 0
  %543 = vmatmul.mubr.bf16.gmra.mrb[0].mxu0 %v251
  %v544 = vpop.f32.mrb[0].mxu0
  %v545 = vadd.f32 0.0, %v544
  %v546 = vpop.f32.mrb[0].mxu0
  %v547 = vpop.f32.mrb[0].mxu0
  %v548 = vadd.f32 0.0, %v547
  %v549 = vpop.f32.mrb[0].mxu0
  %550 = vmatprep.mubr.bf16.mxu0 0
  %551 = vmatmul.mubr.bf16.gmra.mrb[0].mxu0 %v252
  %v552 = vpop.f32.mrb[0].mxu0
  %v553 = vadd.f32 0.0, %v552
  %v554 = vpop.f32.mrb[0].mxu0
  %v555 = vpop.f32.mrb[0].mxu0
  %v556 = vadd.f32 0.0, %v555
  %v557 = vpop.f32.mrb[0].mxu0
  %558 = vmatprep.mubr.bf16.mxu0 0
  %559 = vmatmul.mubr.bf16.gmra.mrb[0].mxu0 %v253
  %v560 = vpop.f32.mrb[0].mxu0
  %v561 = vadd.f32 0.0, %v560
  %v562 = vpop.f32.mrb[0].mxu0
  %v563 = vpop.f32.mrb[0].mxu0
  %v564 = vadd.f32 0.0, %v563
  %v565 = vpop.f32.mrb[0].mxu0
  %566 = vmatprep.mubr.bf16.mxu0 0
  %567 = vmatmul.mubr.bf16.gmra.mrb[0].mxu0 %v254
  %v568 = vpop.f32.mrb[0].mxu0
  %v569 = vadd.f32 0.0, %v568
  %v570 = vpop.f32.mrb[0].mxu0
  %v571 = vpop.f32.mrb[0].mxu0
  %v572 = vadd.f32 0.0, %v571
  %v573 = vpop.f32.mrb[0].mxu0
  %574 = vmatprep.mubr.bf16.mxu0 0
  %575 = vmatmul.mubr.bf16.gmra.mrb[0].mxu0 %v255
  %v576 = vpop.f32.mrb[0].mxu0
  %v577 = vadd.f32 0.0, %v576
  %v578 = vpop.f32.mrb[0].mxu0
  %v579 = vpop.f32.mrb[0].mxu0
  %v580 = vadd.f32 0.0, %v579
  %v581 = vpop.f32.mrb[0].mxu0
  %582 = vmatprep.mubr.bf16.mxu0 0
  %583 = vmatmul.mubr.bf16.gmra.mrb[0].mxu0 %v256
  %v584 = vpop.f32.mrb[0].mxu0
  %v585 = vadd.f32 0.0, %v584
  %v586 = vpop.f32.mrb[0].mxu0
  %v587 = vpop.f32.mrb[0].mxu0
  %v588 = vadd.f32 0.0, %v587
  %v589 = vpop.f32.mrb[0].mxu0
  %590 = vmatprep.mubr.bf16.mxu0 0
  %591 = vmatmul.mubr.bf16.gmra.mrb[0].mxu0 %v257
  %v592 = vpop.f32.mrb[0].mxu0
  %v593 = vadd.f32 0.0, %v592
  %v594 = vpop.f32.mrb[0].mxu0
  %v595 = vpop.f32.mrb[0].mxu0
  %v596 = vadd.f32 0.0, %v595
  %v597 = vpop.f32.mrb[0].mxu0
  %598 = vmatprep.mubr.bf16.mxu0 0
  %599 = vmatmul.mubr.bf16.gmra.mrb[0].mxu0 %v258
  %v600 = vpop.f32.mrb[0].mxu0
  %v601 = vadd.f32 0.0, %v600
  %v602 = vpop.f32.mrb[0].mxu0
  %v603 = vpop.f32.mrb[0].mxu0
  %v604 = vadd.f32 0.0, %v603
  %v605 = vpop.f32.mrb[0].mxu0
  %606 = vmatprep.mubr.bf16.mxu0 0
  %607 = vmatmul.mubr.bf16.gmra.mrb[0].mxu0 %v259
  %v608 = vpop.f32.mrb[0].mxu0
  %v609 = vadd.f32 0.0, %v608
  %v610 = vpop.f32.mrb[0].mxu0
  %v611 = vpop.f32.mrb[0].mxu0
  %v612 = vadd.f32 0.0, %v611
  %v613 = vpop.f32.mrb[0].mxu0
  %614 = vmatprep.mubr.bf16.mxu0 0
  %615 = vmatmul.mubr.bf16.gmra.mrb[0].mxu0 %v260
  %v616 = vpop.f32.mrb[0].mxu0
  %v617 = vadd.f32 0.0, %v616
  %v618 = vpop.f32.mrb[0].mxu0
  %v619 = vpop.f32.mrb[0].mxu0
  %v620 = vadd.f32 0.0, %v619
  %v621 = vpop.f32.mrb[0].mxu0
  %622 = vmatprep.mubr.bf16.mxu0 0
  %623 = vmatmul.mubr.bf16.gmra.mrb[0].mxu0 %v261
  %v624 = vpop.f32.mrb[0].mxu0
  %v625 = vadd.f32 0.0, %v624
  %v626 = vpop.f32.mrb[0].mxu0
  %v627 = vpop.f32.mrb[0].mxu0
  %v628 = vadd.f32 0.0, %v627
  %v629 = vpop.f32.mrb[0].mxu0
  %630 = vdwg.mxu0
  %vm631 = vcmask 130048
  %632 = vst.msk [vmem:[%s2] sm:$0xff] %vm631, %v377
  %633 = vst.msk [vmem:[%s2 + $0x8] sm:$0xff] %vm631, %v380
  %634 = vst.msk [vmem:[%s2 + $0x10] sm:$0xff] %vm631, %v385
  %635 = vst.msk [vmem:[%s2 + $0x18] sm:$0xff] %vm631, %v388
  %636 = vst.msk [vmem:[%s2 + $0x20] sm:$0xff] %vm631, %v393
  %637 = vst.msk [vmem:[%s2 + $0x28] sm:$0xff] %vm631, %v396
  %638 = vst.msk [vmem:[%s2 + $0x30] sm:$0xff] %vm631, %v401
  %639 = vst.msk [vmem:[%s2 + $0x38] sm:$0xff] %vm631, %v404
  %640 = vst.msk [vmem:[%s2 + $0x40] sm:$0xff] %vm631, %v409
  %641 = vst.msk [vmem:[%s2 + $0x48] sm:$0xff] %vm631, %v412
  %642 = vst.msk [vmem:[%s2 + $0x50] sm:$0xff] %vm631, %v417
  %643 = vst.msk [vmem:[%s2 + $0x58] sm:$0xff] %vm631, %v420
  %644 = vst.msk [vmem:[%s2 + $0x60] sm:$0xff] %vm631, %v425
  %645 = vst.msk [vmem:[%s2 + $0x68] sm:$0xff] %vm631, %v428
  %646 = vst.msk [vmem:[%s2 + $0x70] sm:$0xff] %vm631, %v433
  %647 = vst.msk [vmem:[%s2 + $0x78] sm:$0xff] %vm631, %v436
  %648 = vst.msk [vmem:[%s2 + $0x80] sm:$0xff] %vm631, %v441
  %649 = vst.msk [vmem:[%s2 + $0x88] sm:$0xff] %vm631, %v444
  %650 = vst.msk [vmem:[%s2 + $0x90] sm:$0xff] %vm631, %v449
  %651 = vst.msk [vmem:[%s2 + $0x98] sm:$0xff] %vm631, %v452
  %652 = vst.msk [vmem:[%s2 + $0xa0] sm:$0xff] %vm631, %v457
  %653 = vst.msk [vmem:[%s2 + $0xa8] sm:$0xff] %vm631, %v460
  %654 = vst.msk [vmem:[%s2 + $0xb0] sm:$0xff] %vm631, %v465
  %655 = vst.msk [vmem:[%s2 + $0xb8] sm:$0xff] %vm631, %v468
  %656 = vst.msk [vmem:[%s2 + $0xc0] sm:$0xff] %vm631, %v473
  %657 = vst.msk [vmem:[%s2 + $0xc8] sm:$0xff] %vm631, %v476
  %658 = vst.msk [vmem:[%s2 + $0xd0] sm:$0xff] %vm631, %v481
  %659 = vst.msk [vmem:[%s2 + $0xd8] sm:$0xff] %vm631, %v484
  %660 = vst.msk [vmem:[%s2 + $0xe0] sm:$0xff] %vm631, %v489
  %661 = vst.msk [vmem:[%s2 + $0xe8] sm:$0xff] %vm631, %v492
  %662 = vst.msk [vmem:[%s2 + $0xf0] sm:$0xff] %vm631, %v497
  %663 = vst.msk [vmem:[%s2 + $0xf8] sm:$0xff] %vm631, %v500
  %664 = vst.msk [vmem:[%s2 + $0x100] sm:$0xff] %vm631, %v505
  %665 = vst.msk [vmem:[%s2 + $0x108] sm:$0xff] %vm631, %v508
  %666 = vst.msk [vmem:[%s2 + $0x110] sm:$0xff] %vm631, %v513
  %667 = vst.msk [vmem:[%s2 + $0x118] sm:$0xff] %vm631, %v516
  %668 = vst.msk [vmem:[%s2 + $0x120] sm:$0xff] %vm631, %v521
  %669 = vst.msk [vmem:[%s2 + $0x128] sm:$0xff] %vm631, %v524
  %670 = vst.msk [vmem:[%s2 + $0x130] sm:$0xff] %vm631, %v529
  %671 = vst.msk [vmem:[%s2 + $0x138] sm:$0xff] %vm631, %v532
  %672 = vst.msk [vmem:[%s2 + $0x140] sm:$0xff] %vm631, %v537
  %673 = vst.msk [vmem:[%s2 + $0x148] sm:$0xff] %vm631, %v540
  %674 = vst.msk [vmem:[%s2 + $0x150] sm:$0xff] %vm631, %v545
  %675 = vst.msk [vmem:[%s2 + $0x158] sm:$0xff] %vm631, %v548
  %676 = vst.msk [vmem:[%s2 + $0x160] sm:$0xff] %vm631, %v553
  %677 = vst.msk [vmem:[%s2 + $0x168] sm:$0xff] %vm631, %v556
  %678 = vst.msk [vmem:[%s2 + $0x170] sm:$0xff] %vm631, %v561
  %679 = vst.msk [vmem:[%s2 + $0x178] sm:$0xff] %vm631, %v564
  %680 = vst.msk [vmem:[%s2 + $0x180] sm:$0xff] %vm631, %v569
  %681 = vst.msk [vmem:[%s2 + $0x188] sm:$0xff] %vm631, %v572
  %682 = vst.msk [vmem:[%s2 + $0x190] sm:$0xff] %vm631, %v577
  %683 = vst.msk [vmem:[%s2 + $0x198] sm:$0xff] %vm631, %v580
  %684 = vst.msk [vmem:[%s2 + $0x1a0] sm:$0xff] %vm631, %v585
  %685 = vst.msk [vmem:[%s2 + $0x1a8] sm:$0xff] %vm631, %v588
  %686 = vst.msk [vmem:[%s2 + $0x1b0] sm:$0xff] %vm631, %v593
  %687 = vst.msk [vmem:[%s2 + $0x1b8] sm:$0xff] %vm631, %v596
  %688 = vst.msk [vmem:[%s2 + $0x1c0] sm:$0xff] %vm631, %v601
  %689 = vst.msk [vmem:[%s2 + $0x1c8] sm:$0xff] %vm631, %v604
  %690 = vst.msk [vmem:[%s2 + $0x1d0] sm:$0xff] %vm631, %v609
  %691 = vst.msk [vmem:[%s2 + $0x1d8] sm:$0xff] %vm631, %v612
  %692 = vst.msk [vmem:[%s2 + $0x1e0] sm:$0xff] %vm631, %v617
  %693 = vst.msk [vmem:[%s2 + $0x1e8] sm:$0xff] %vm631, %v620
  %694 = vst.msk [vmem:[%s2 + $0x1f0] sm:$0xff] %vm631, %v625
  %695 = vst.msk [vmem:[%s2 + $0x1f8] sm:$0xff] %vm631, %v628
  %v696 = vld [vmem:[%s3] sm:$0x1]
  %v697 = vsel %vm631, %v377, 0.0
  %v698 = vsel %vm631, %v380, 0.0
  %v699 = vadd.f32 %v697, %v698
  %v700 = vsel %vm631, %v385, 0.0
  %v701 = vadd.f32 %v699, %v700
  %v702 = vsel %vm631, %v388, 0.0
  %v703 = vadd.f32 %v701, %v702
  %v704 = vsel %vm631, %v393, 0.0
  %v705 = vadd.f32 %v703, %v704
  %v706 = vsel %vm631, %v396, 0.0
  %v707 = vadd.f32 %v705, %v706
  %v708 = vsel %vm631, %v401, 0.0
  %v709 = vadd.f32 %v707, %v708
  %v710 = vsel %vm631, %v404, 0.0
  %v711 = vadd.f32 %v709, %v710
  %v712 = vsel %vm631, %v409, 0.0
  %v713 = vadd.f32 %v711, %v712
  %v714 = vsel %vm631, %v412, 0.0
  %v715 = vadd.f32 %v713, %v714
  %v716 = vsel %vm631, %v417, 0.0
  %v717 = vadd.f32 %v715, %v716
  %v718 = vsel %vm631, %v420, 0.0
  %v719 = vadd.f32 %v717, %v718
  %v720 = vsel %vm631, %v425, 0.0
  %v721 = vadd.f32 %v719, %v720
  %v722 = vsel %vm631, %v428, 0.0
  %v723 = vadd.f32 %v721, %v722
  %v724 = vsel %vm631, %v433, 0.0
  %v725 = vadd.f32 %v723, %v724
  %v726 = vsel %vm631, %v436, 0.0
  %v727 = vadd.f32 %v725, %v726
  %v728 = vsel %vm631, %v441, 0.0
  %v729 = vadd.f32 %v727, %v728
  %v730 = vsel %vm631, %v444, 0.0
  %v731 = vadd.f32 %v729, %v730
  %v732 = vsel %vm631, %v449, 0.0
  %v733 = vadd.f32 %v731, %v732
  %v734 = vsel %vm631, %v452, 0.0
  %v735 = vadd.f32 %v733, %v734
  %v736 = vsel %vm631, %v457, 0.0
  %v737 = vadd.f32 %v735, %v736
  %v738 = vsel %vm631, %v460, 0.0
  %v739 = vadd.f32 %v737, %v738
  %v740 = vsel %vm631, %v465, 0.0
  %v741 = vadd.f32 %v739, %v740
  %v742 = vsel %vm631, %v468, 0.0
  %v743 = vadd.f32 %v741, %v742
  %v744 = vsel %vm631, %v473, 0.0
  %v745 = vadd.f32 %v743, %v744
  %v746 = vsel %vm631, %v476, 0.0
  %v747 = vadd.f32 %v745, %v746
  %v748 = vsel %vm631, %v481, 0.0
  %v749 = vadd.f32 %v747, %v748
  %v750 = vsel %vm631, %v484, 0.0
  %v751 = vadd.f32 %v749, %v750
  %v752 = vsel %vm631, %v489, 0.0
  %v753 = vadd.f32 %v751, %v752
  %v754 = vsel %vm631, %v492, 0.0
  %v755 = vadd.f32 %v753, %v754
  %v756 = vsel %vm631, %v497, 0.0
  %v757 = vadd.f32 %v755, %v756
  %v758 = vsel %vm631, %v500, 0.0
  %v759 = vadd.f32 %v757, %v758
  %v760 = vsel %vm631, %v505, 0.0
  %v761 = vadd.f32 %v759, %v760
  %v762 = vsel %vm631, %v508, 0.0
  %v763 = vadd.f32 %v761, %v762
  %v764 = vsel %vm631, %v513, 0.0
  %v765 = vadd.f32 %v763, %v764
  %v766 = vsel %vm631, %v516, 0.0
  %v767 = vadd.f32 %v765, %v766
  %v768 = vsel %vm631, %v521, 0.0
  %v769 = vadd.f32 %v767, %v768
  %v770 = vsel %vm631, %v524, 0.0
  %v771 = vadd.f32 %v769, %v770
  %v772 = vsel %vm631, %v529, 0.0
  %v773 = vadd.f32 %v771, %v772
  %v774 = vsel %vm631, %v532, 0.0
  %v775 = vadd.f32 %v773, %v774
  %v776 = vsel %vm631, %v537, 0.0
  %v777 = vadd.f32 %v775, %v776
  %v778 = vsel %vm631, %v540, 0.0
  %v779 = vadd.f32 %v777, %v778
  %v780 = vsel %vm631, %v545, 0.0
  %v781 = vadd.f32 %v779, %v780
  %v782 = vsel %vm631, %v548, 0.0
  %v783 = vadd.f32 %v781, %v782
  %v784 = vsel %vm631, %v553, 0.0
  %v785 = vadd.f32 %v783, %v784
  %v786 = vsel %vm631, %v556, 0.0
  %v787 = vadd.f32 %v785, %v786
  %v788 = vsel %vm631, %v561, 0.0
  %v789 = vadd.f32 %v787, %v788
  %v790 = vsel %vm631, %v564, 0.0
  %v791 = vadd.f32 %v789, %v790
  %v792 = vsel %vm631, %v569, 0.0
  %v793 = vadd.f32 %v791, %v792
  %v794 = vsel %vm631, %v572, 0.0
  %v795 = vadd.f32 %v793, %v794
  %v796 = vsel %vm631, %v577, 0.0
  %v797 = vadd.f32 %v795, %v796
  %v798 = vsel %vm631, %v580, 0.0
  %v799 = vadd.f32 %v797, %v798
  %v800 = vsel %vm631, %v585, 0.0
  %v801 = vadd.f32 %v799, %v800
  %v802 = vsel %vm631, %v588, 0.0
  %v803 = vadd.f32 %v801, %v802
  %v804 = vsel %vm631, %v593, 0.0
  %v805 = vadd.f32 %v803, %v804
  %v806 = vsel %vm631, %v596, 0.0
  %v807 = vadd.f32 %v805, %v806
  %v808 = vsel %vm631, %v601, 0.0
  %v809 = vadd.f32 %v807, %v808
  %v810 = vsel %vm631, %v604, 0.0
  %v811 = vadd.f32 %v809, %v810
  %v812 = vsel %vm631, %v609, 0.0
  %v813 = vadd.f32 %v811, %v812
  %v814 = vsel %vm631, %v612, 0.0
  %v815 = vadd.f32 %v813, %v814
  %v816 = vsel %vm631, %v617, 0.0
  %v817 = vadd.f32 %v815, %v816
  %v818 = vsel %vm631, %v620, 0.0
  %v819 = vadd.f32 %v817, %v818
  %v820 = vsel %vm631, %v625, 0.0
  %v821 = vadd.f32 %v819, %v820
  %v822 = vsel %vm631, %v628, 0.0
  %v823 = vadd.f32 %v821, %v822
  %v824 = vrot.slane %v823, 4
  %v825 = vadd.f32 %v823, %v824
  %v826 = vrot.slane %v825, 2
  %v827 = vadd.f32 %v825, %v826
  %v828 = vrot.slane %v827, 1
  %v829 = vadd.f32 %v827, %v828
  %v830 = vadd.f32 %v696, %v829
  %vm831 = vcmask 122880
  %832 = vst.msk [vmem:[%s3] sm:$0x1] %vm831, %v830
  %v833 = vld [vmem:[%s4] sm:$0x1]
  %v834 = vmul.f32 %v377, %v377
  %v835 = vmul.f32 %v380, %v380
  %v836 = vmul.f32 %v385, %v385
  %v837 = vmul.f32 %v388, %v388
  %v838 = vmul.f32 %v393, %v393
  %v839 = vmul.f32 %v396, %v396
  %v840 = vmul.f32 %v401, %v401
  %v841 = vmul.f32 %v404, %v404
  %v842 = vmul.f32 %v409, %v409
  %v843 = vmul.f32 %v412, %v412
  %v844 = vmul.f32 %v417, %v417
  %v845 = vmul.f32 %v420, %v420
  %v846 = vmul.f32 %v425, %v425
  %v847 = vmul.f32 %v428, %v428
  %v848 = vmul.f32 %v433, %v433
  %v849 = vmul.f32 %v436, %v436
  %v850 = vmul.f32 %v441, %v441
  %v851 = vmul.f32 %v444, %v444
  %v852 = vmul.f32 %v449, %v449
  %v853 = vmul.f32 %v452, %v452
  %v854 = vmul.f32 %v457, %v457
  %v855 = vmul.f32 %v460, %v460
  %v856 = vmul.f32 %v465, %v465
  %v857 = vmul.f32 %v468, %v468
  %v858 = vmul.f32 %v473, %v473
  %v859 = vmul.f32 %v476, %v476
  %v860 = vmul.f32 %v481, %v481
  %v861 = vmul.f32 %v484, %v484
  %v862 = vmul.f32 %v489, %v489
  %v863 = vmul.f32 %v492, %v492
  %v864 = vmul.f32 %v497, %v497
  %v865 = vmul.f32 %v500, %v500
  %v866 = vmul.f32 %v505, %v505
  %v867 = vmul.f32 %v508, %v508
  %v868 = vmul.f32 %v513, %v513
  %v869 = vmul.f32 %v516, %v516
  %v870 = vmul.f32 %v521, %v521
  %v871 = vmul.f32 %v524, %v524
  %v872 = vmul.f32 %v529, %v529
  %v873 = vmul.f32 %v532, %v532
  %v874 = vmul.f32 %v537, %v537
  %v875 = vmul.f32 %v540, %v540
  %v876 = vmul.f32 %v545, %v545
  %v877 = vmul.f32 %v548, %v548
  %v878 = vmul.f32 %v553, %v553
  %v879 = vmul.f32 %v556, %v556
  %v880 = vmul.f32 %v561, %v561
  %v881 = vmul.f32 %v564, %v564
  %v882 = vmul.f32 %v569, %v569
  %v883 = vmul.f32 %v572, %v572
  %v884 = vmul.f32 %v577, %v577
  %v885 = vmul.f32 %v580, %v580
  %v886 = vmul.f32 %v585, %v585
  %v887 = vmul.f32 %v588, %v588
  %v888 = vmul.f32 %v593, %v593
  %v889 = vmul.f32 %v596, %v596
  %v890 = vmul.f32 %v601, %v601
  %v891 = vmul.f32 %v604, %v604
  %v892 = vmul.f32 %v609, %v609
  %v893 = vmul.f32 %v612, %v612
  %v894 = vmul.f32 %v617, %v617
  %v895 = vmul.f32 %v620, %v620
  %v896 = vmul.f32 %v625, %v625
  %v897 = vmul.f32 %v628, %v628
  %v898 = vsel %vm631, %v834, 0.0
  %v899 = vsel %vm631, %v835, 0.0
  %v900 = vadd.f32 %v898, %v899
  %v901 = vsel %vm631, %v836, 0.0
  %v902 = vadd.f32 %v900, %v901
  %v903 = vsel %vm631, %v837, 0.0
  %v904 = vadd.f32 %v902, %v903
  %v905 = vsel %vm631, %v838, 0.0
  %v906 = vadd.f32 %v904, %v905
  %v907 = vsel %vm631, %v839, 0.0
  %v908 = vadd.f32 %v906, %v907
  %v909 = vsel %vm631, %v840, 0.0
  %v910 = vadd.f32 %v908, %v909
  %v911 = vsel %vm631, %v841, 0.0
  %v912 = vadd.f32 %v910, %v911
  %v913 = vsel %vm631, %v842, 0.0
  %v914 = vadd.f32 %v912, %v913
  %v915 = vsel %vm631, %v843, 0.0
  %v916 = vadd.f32 %v914, %v915
  %v917 = vsel %vm631, %v844, 0.0
  %v918 = vadd.f32 %v916, %v917
  %v919 = vsel %vm631, %v845, 0.0
  %v920 = vadd.f32 %v918, %v919
  %v921 = vsel %vm631, %v846, 0.0
  %v922 = vadd.f32 %v920, %v921
  %v923 = vsel %vm631, %v847, 0.0
  %v924 = vadd.f32 %v922, %v923
  %v925 = vsel %vm631, %v848, 0.0
  %v926 = vadd.f32 %v924, %v925
  %v927 = vsel %vm631, %v849, 0.0
  %v928 = vadd.f32 %v926, %v927
  %v929 = vsel %vm631, %v850, 0.0
  %v930 = vadd.f32 %v928, %v929
  %v931 = vsel %vm631, %v851, 0.0
  %v932 = vadd.f32 %v930, %v931
  %v933 = vsel %vm631, %v852, 0.0
  %v934 = vadd.f32 %v932, %v933
  %v935 = vsel %vm631, %v853, 0.0
  %v936 = vadd.f32 %v934, %v935
  %v937 = vsel %vm631, %v854, 0.0
  %v938 = vadd.f32 %v936, %v937
  %v939 = vsel %vm631, %v855, 0.0
  %v940 = vadd.f32 %v938, %v939
  %v941 = vsel %vm631, %v856, 0.0
  %v942 = vadd.f32 %v940, %v941
  %v943 = vsel %vm631, %v857, 0.0
  %v944 = vadd.f32 %v942, %v943
  %v945 = vsel %vm631, %v858, 0.0
  %v946 = vadd.f32 %v944, %v945
  %v947 = vsel %vm631, %v859, 0.0
  %v948 = vadd.f32 %v946, %v947
  %v949 = vsel %vm631, %v860, 0.0
  %v950 = vadd.f32 %v948, %v949
  %v951 = vsel %vm631, %v861, 0.0
  %v952 = vadd.f32 %v950, %v951
  %v953 = vsel %vm631, %v862, 0.0
  %v954 = vadd.f32 %v952, %v953
  %v955 = vsel %vm631, %v863, 0.0
  %v956 = vadd.f32 %v954, %v955
  %v957 = vsel %vm631, %v864, 0.0
  %v958 = vadd.f32 %v956, %v957
  %v959 = vsel %vm631, %v865, 0.0
  %v960 = vadd.f32 %v958, %v959
  %v961 = vsel %vm631, %v866, 0.0
  %v962 = vadd.f32 %v960, %v961
  %v963 = vsel %vm631, %v867, 0.0
  %v964 = vadd.f32 %v962, %v963
  %v965 = vsel %vm631, %v868, 0.0
  %v966 = vadd.f32 %v964, %v965
  %v967 = vsel %vm631, %v869, 0.0
  %v968 = vadd.f32 %v966, %v967
  %v969 = vsel %vm631, %v870, 0.0
  %v970 = vadd.f32 %v968, %v969
  %v971 = vsel %vm631, %v871, 0.0
  %v972 = vadd.f32 %v970, %v971
  %v973 = vsel %vm631, %v872, 0.0
  %v974 = vadd.f32 %v972, %v973
  %v975 = vsel %vm631, %v873, 0.0
  %v976 = vadd.f32 %v974, %v975
  %v977 = vsel %vm631, %v874, 0.0
  %v978 = vadd.f32 %v976, %v977
  %v979 = vsel %vm631, %v875, 0.0
  %v980 = vadd.f32 %v978, %v979
  %v981 = vsel %vm631, %v876, 0.0
  %v982 = vadd.f32 %v980, %v981
  %v983 = vsel %vm631, %v877, 0.0
  %v984 = vadd.f32 %v982, %v983
  %v985 = vsel %vm631, %v878, 0.0
  %v986 = vadd.f32 %v984, %v985
  %v987 = vsel %vm631, %v879, 0.0
  %v988 = vadd.f32 %v986, %v987
  %v989 = vsel %vm631, %v880, 0.0
  %v990 = vadd.f32 %v988, %v989
  %v991 = vsel %vm631, %v881, 0.0
  %v992 = vadd.f32 %v990, %v991
  %v993 = vsel %vm631, %v882, 0.0
  %v994 = vadd.f32 %v992, %v993
  %v995 = vsel %vm631, %v883, 0.0
  %v996 = vadd.f32 %v994, %v995
  %v997 = vsel %vm631, %v884, 0.0
  %v998 = vadd.f32 %v996, %v997
  %v999 = vsel %vm631, %v885, 0.0
  %v1000 = vadd.f32 %v998, %v999
  %v1001 = vsel %vm631, %v886, 0.0
  %v1002 = vadd.f32 %v1000, %v1001
  %v1003 = vsel %vm631, %v887, 0.0
  %v1004 = vadd.f32 %v1002, %v1003
  %v1005 = vsel %vm631, %v888, 0.0
  %v1006 = vadd.f32 %v1004, %v1005
  %v1007 = vsel %vm631, %v889, 0.0
  %v1008 = vadd.f32 %v1006, %v1007
  %v1009 = vsel %vm631, %v890, 0.0
  %v1010 = vadd.f32 %v1008, %v1009
  %v1011 = vsel %vm631, %v891, 0.0
  %v1012 = vadd.f32 %v1010, %v1011
  %v1013 = vsel %vm631, %v892, 0.0
  %v1014 = vadd.f32 %v1012, %v1013
  %v1015 = vsel %vm631, %v893, 0.0
  %v1016 = vadd.f32 %v1014, %v1015
  %v1017 = vsel %vm631, %v894, 0.0
  %v1018 = vadd.f32 %v1016, %v1017
  %v1019 = vsel %vm631, %v895, 0.0
  %v1020 = vadd.f32 %v1018, %v1019
  %v1021 = vsel %vm631, %v896, 0.0
  %v1022 = vadd.f32 %v1020, %v1021
  %v1023 = vsel %vm631, %v897, 0.0
  %v1024 = vadd.f32 %v1022, %v1023
  %v1025 = vrot.slane %v1024, 4
  %v1026 = vadd.f32 %v1024, %v1025
  %v1027 = vrot.slane %v1026, 2
  %v1028 = vadd.f32 %v1026, %v1027
  %v1029 = vrot.slane %v1028, 1
  %v1030 = vadd.f32 %v1028, %v1029
  %v1031 = vadd.f32 %v833, %v1030
  %1032 = vst.msk [vmem:[%s4] sm:$0x1] %vm831, %v1031
  // Predicated region
  $region14: #{conv_discriminator_forward.9} parent=0 // pred_check
    _
  $region15: #{conv_discriminator_forward.9} parent=0 // pred_check_branch
    %1034 = sbr.rel (0) target = $region17
  $region16: #{conv_discriminator_forward.9} parent=0 // pred_region
    _
  $region17: #{conv_discriminator_forward.9} parent=0 // pred_fallthru
    _
  // Predicated region
  $region18: #{conv_discriminator_forward.9} parent=0 // pred_check
    _
  $region19: #{conv_discriminator_forward.9} parent=0 // pred_check_branch
    %1036 = sbr.rel (0) target = $region21
  $region20: #{conv_discriminator_forward.9} parent=0 // pred_region
    _
  $region21: #{conv_discriminator_forward.9} parent=0 // pred_fallthru
    _
  // Predicated region
  $region22: #{conv_discriminator_forward.9} parent=0 // pred_check
    _
  $region23: #{conv_discriminator_forward.9} parent=0 // pred_check_branch
    %1038 = sbr.rel (0) target = $region25
  $region24: #{conv_discriminator_forward.9} parent=0 // pred_region
    _
  $region25: #{conv_discriminator_forward.9} parent=0 // pred_fallthru
    _
  // Predicated region
  $region26: #{conv_discriminator_forward.9} parent=0 // pred_check
    _
  $region27: #{conv_discriminator_forward.9} parent=0 // pred_check_branch
    %1040 = sbr.rel (0) target = $region29
  $region28: #{conv_discriminator_forward.9} parent=0 // pred_region
    _
  $region29: #{conv_discriminator_forward.9} parent=0 // pred_fallthru
    _
  // Predicated region
  $region30: #{conv_discriminator_forward.9} parent=0 // pred_check
    _
  $region31: #{conv_discriminator_forward.9} parent=0 // pred_check_branch
    %1042 = sbr.rel (0) target = $region33
  $region32: #{conv_discriminator_forward.9} parent=0 // pred_region
    _
  $region33: #{conv_discriminator_forward.9} parent=0 // pred_fallthru
    _
  // Predicated region
  $region34: #{conv_discriminator_forward.9} parent=0 // pred_check
    _
  $region35: #{conv_discriminator_forward.9} parent=0 // pred_check_branch
    %1044 = sbr.rel (0) target = $region37
  $region36: #{conv_discriminator_forward.9} parent=0 // pred_region
    _
  $region37: #{conv_discriminator_forward.9} parent=0 // pred_fallthru
    _

// kernel: conv_discriminator_forward.12
$region0: #{conv_discriminator_forward.12}
  #allocation0 [shape = 'u32[]', space=smem, size = 0x4, offset = 0x4, fixed_abs, tag = 'smem constant byte address 0x4 - core index']
  #allocation1 [shape = 'u32[144,128]{1,0:T(1,128)}', space=vmem, size = 0x12000, scoped, tag = 'internal scratch']
  %s0 = inlined_call_operand.vmem [shape: f32[128,32], index: 0, kind: input, shape index: {}]
  %s1 = inlined_call_operand.vmem [shape: f32[1,32], index: 1, kind: input, shape index: {}]
  %s2 = inlined_call_operand.vmem [shape: f32[1,32], index: 2, kind: input, shape index: {}]
  %s3 = inlined_call_operand.vmem [shape: f32[128,32], index: 3, kind: output, shape index: {}]
  %s4 = sld [smem:[#allocation0]]
  $region22: #{conv_discriminator_forward.12} parent=0
    _
  %s6 = ssub.s32 1, %s4
  %s7 = scalar_select 0, %s6, %s4
  // Predicated region
  $region2: #{conv_discriminator_forward.12} parent=0 // pred_check
    _
  $region3: #{conv_discriminator_forward.12} parent=0 // pred_check_branch
    %9 = sbr.rel (0) target = $region5
  $region4: #{conv_discriminator_forward.12} parent=0 // pred_region
    _
  $region5: #{conv_discriminator_forward.12} parent=0 // pred_fallthru
    _
  // Predicated region
  $region6: #{conv_discriminator_forward.12} parent=0 // pred_check
    _
  $region7: #{conv_discriminator_forward.12} parent=0 // pred_check_branch
    %11 = sbr.rel (0) target = $region9
  $region8: #{conv_discriminator_forward.12} parent=0 // pred_region
    _
  $region9: #{conv_discriminator_forward.12} parent=0 // pred_fallthru
    _
  // Predicated region
  $region10: #{conv_discriminator_forward.12} parent=0 // pred_check
    _
  $region11: #{conv_discriminator_forward.12} parent=0 // pred_check_branch
    %13 = sbr.rel (0) target = $region13
  $region12: #{conv_discriminator_forward.12} parent=0 // pred_region
    _
  $region13: #{conv_discriminator_forward.12} parent=0 // pred_fallthru
    _
  %v14 = vld [vmem:[%s0] sm:$0xff]
  %v15 = vld [vmem:[%s0 + $0x8] sm:$0xff]
  %v16 = vld [vmem:[%s0 + $0x10] sm:$0xff]
  %v17 = vld [vmem:[%s0 + $0x18] sm:$0xff]
  %v18 = vld [vmem:[%s0 + $0x20] sm:$0xff]
  %v19 = vld [vmem:[%s0 + $0x28] sm:$0xff]
  %v20 = vld [vmem:[%s0 + $0x30] sm:$0xff]
  %v21 = vld [vmem:[%s0 + $0x38] sm:$0xff]
  %v22 = vld [vmem:[%s0 + $0x40] sm:$0xff]
  %v23 = vld [vmem:[%s0 + $0x48] sm:$0xff]
  %v24 = vld [vmem:[%s0 + $0x50] sm:$0xff]
  %v25 = vld [vmem:[%s0 + $0x58] sm:$0xff]
  %v26 = vld [vmem:[%s0 + $0x60] sm:$0xff]
  %v27 = vld [vmem:[%s0 + $0x68] sm:$0xff]
  %v28 = vld [vmem:[%s0 + $0x70] sm:$0xff]
  %v29 = vld [vmem:[%s0 + $0x78] sm:$0xff]
  %v30 = vld [vmem:[%s1] sm:$0x1]
  %v31 = vmul.f32 %v30, 0.0078125
  %v32 = vld [vmem:[%s2] sm:$0x1]
  %v33 = vmul.f32 %v32, 0.0078125
  %v34 = vmul.f32 %v31, %v31
  %v35 = vsub.f32 %v33, %v34
  %v36 = vmax.f32 %v35, 0.0
  %v38 = vlaneseq
  %v39 = vshrl.u32 %v38, 7
  %v40 = vsub.s32 0, %v39
  %v41 = vrot.slane %v31, %v40
  %v43 = vsub.f32 %v14, %v41
  %v44 = vsub.f32 %v15, %v41
  %v45 = vsub.f32 %v16, %v41
  %v46 = vsub.f32 %v17, %v41
  %v47 = vsub.f32 %v18, %v41
  %v48 = vsub.f32 %v19, %v41
  %v49 = vsub.f32 %v20, %v41
  %v50 = vsub.f32 %v21, %v41
  %v51 = vsub.f32 %v22, %v41
  %v52 = vsub.f32 %v23, %v41
  %v53 = vsub.f32 %v24, %v41
  %v54 = vsub.f32 %v25, %v41
  %v55 = vsub.f32 %v26, %v41
  %v56 = vsub.f32 %v27, %v41
  %v57 = vsub.f32 %v28, %v41
  %v58 = vsub.f32 %v29, %v41
  %v59 = vadd.f32 %v36, 1e-05
  %v60 = vrsqrt.pop %v59
  %v62 = vlaneseq
  %v63 = vshrl.u32 %v62, 7
  %v64 = vsub.s32 0, %v63
  %v65 = vrot.slane %v60, %v64
  %v67 = vmul.f32 %v43, %v65
  %v68 = vmul.f32 %v44, %v65
  %v69 = vmul.f32 %v45, %v65
  %v70 = vmul.f32 %v46, %v65
  %v71 = vmul.f32 %v47, %v65
  %v72 = vmul.f32 %v48, %v65
  %v73 = vmul.f32 %v49, %v65
  %v74 = vmul.f32 %v50, %v65
  %v75 = vmul.f32 %v51, %v65
  %v76 = vmul.f32 %v52, %v65
  %v77 = vmul.f32 %v53, %v65
  %v78 = vmul.f32 %v54, %v65
  %v79 = vmul.f32 %v55, %v65
  %v80 = vmul.f32 %v56, %v65
  %v81 = vmul.f32 %v57, %v65
  %v82 = vmul.f32 %v58, %v65
  %vm83 = vcmp.ge.f32.partialorder %v67, 0.0
  %vm84 = vcmp.ge.f32.partialorder %v68, 0.0
  %vm85 = vcmp.ge.f32.partialorder %v69, 0.0
  %vm86 = vcmp.ge.f32.partialorder %v70, 0.0
  %vm87 = vcmp.ge.f32.partialorder %v71, 0.0
  %vm88 = vcmp.ge.f32.partialorder %v72, 0.0
  %vm89 = vcmp.ge.f32.partialorder %v73, 0.0
  %vm90 = vcmp.ge.f32.partialorder %v74, 0.0
  %vm91 = vcmp.ge.f32.partialorder %v75, 0.0
  %vm92 = vcmp.ge.f32.partialorder %v76, 0.0
  %vm93 = vcmp.ge.f32.partialorder %v77, 0.0
  %vm94 = vcmp.ge.f32.partialorder %v78, 0.0
  %vm95 = vcmp.ge.f32.partialorder %v79, 0.0
  %vm96 = vcmp.ge.f32.partialorder %v80, 0.0
  %vm97 = vcmp.ge.f32.partialorder %v81, 0.0
  %vm98 = vcmp.ge.f32.partialorder %v82, 0.0
  %v99 = vmul.f32 %v67, 0.2
  %v100 = vmul.f32 %v68, 0.2
  %v101 = vmul.f32 %v69, 0.2
  %v102 = vmul.f32 %v70, 0.2
  %v103 = vmul.f32 %v71, 0.2
  %v104 = vmul.f32 %v72, 0.2
  %v105 = vmul.f32 %v73, 0.2
  %v106 = vmul.f32 %v74, 0.2
  %v107 = vmul.f32 %v75, 0.2
  %v108 = vmul.f32 %v76, 0.2
  %v109 = vmul.f32 %v77, 0.2
  %v110 = vmul.f32 %v78, 0.2
  %v111 = vmul.f32 %v79, 0.2
  %v112 = vmul.f32 %v80, 0.2
  %v113 = vmul.f32 %v81, 0.2
  %v114 = vmul.f32 %v82, 0.2
  %v115 = vsel %vm83, %v67, %v99
  %v116 = vsel %vm84, %v68, %v100
  %v117 = vsel %vm85, %v69, %v101
  %v118 = vsel %vm86, %v70, %v102
  %v119 = vsel %vm87, %v71, %v103
  %v120 = vsel %vm88, %v72, %v104
  %v121 = vsel %vm89, %v73, %v105
  %v122 = vsel %vm90, %v74, %v106
  %v123 = vsel %vm91, %v75, %v107
  %v124 = vsel %vm92, %v76, %v108
  %v125 = vsel %vm93, %v77, %v109
  %v126 = vsel %vm94, %v78, %v110
  %v127 = vsel %vm95, %v79, %v111
  %v128 = vsel %vm96, %v80, %v112
  %v129 = vsel %vm97, %v81, %v113
  %v130 = vsel %vm98, %v82, %v114
  %vm131 = vcmask 261120
  %132 = vst.msk [vmem:[%s3] sm:$0xff] %vm131, %v115
  %133 = vst.msk [vmem:[%s3 + $0x8] sm:$0xff] %vm131, %v116
  %134 = vst.msk [vmem:[%s3 + $0x10] sm:$0xff] %vm131, %v117
  %135 = vst.msk [vmem:[%s3 + $0x18] sm:$0xff] %vm131, %v118
  %136 = vst.msk [vmem:[%s3 + $0x20] sm:$0xff] %vm131, %v119
  %137 = vst.msk [vmem:[%s3 + $0x28] sm:$0xff] %vm131, %v120
  %138 = vst.msk [vmem:[%s3 + $0x30] sm:$0xff] %vm131, %v121
  %139 = vst.msk [vmem:[%s3 + $0x38] sm:$0xff] %vm131, %v122
  %140 = vst.msk [vmem:[%s3 + $0x40] sm:$0xff] %vm131, %v123
  %141 = vst.msk [vmem:[%s3 + $0x48] sm:$0xff] %vm131, %v124
  %142 = vst.msk [vmem:[%s3 + $0x50] sm:$0xff] %vm131, %v125
  %143 = vst.msk [vmem:[%s3 + $0x58] sm:$0xff] %vm131, %v126
  %144 = vst.msk [vmem:[%s3 + $0x60] sm:$0xff] %vm131, %v127
  %145 = vst.msk [vmem:[%s3 + $0x68] sm:$0xff] %vm131, %v128
  %146 = vst.msk [vmem:[%s3 + $0x70] sm:$0xff] %vm131, %v129
  %147 = vst.msk [vmem:[%s3 + $0x78] sm:$0xff] %vm131, %v130
  // Predicated region
  $region14: #{conv_discriminator_forward.12} parent=0 // pred_check
    _
  $region15: #{conv_discriminator_forward.12} parent=0 // pred_check_branch
    %149 = sbr.rel (0) target = $region17
  $region16: #{conv_discriminator_forward.12} parent=0 // pred_region
    _
  $region17: #{conv_discriminator_forward.12} parent=0 // pred_fallthru
    _
  // Predicated region
  $region18: #{conv_discriminator_forward.12} parent=0 // pred_check
    _
  $region19: #{conv_discriminator_forward.12} parent=0 // pred_check_branch
    %151 = sbr.rel (0) target = $region21
  $region20: #{conv_discriminator_forward.12} parent=0 // pred_region
    _
  $region21: #{conv_discriminator_forward.12} parent=0 // pred_fallthru
    _

// kernel: conv_discriminator_forward.11
$region0: #{conv_discriminator_forward.11}
  #allocation0 [shape = 'u32[]', space=smem, size = 0x4, offset = 0x4, fixed_abs, tag = 'smem constant byte address 0x4 - core index']
  #allocation1 [shape = 'u32[144,128]{1,0:T(1,128)}', space=vmem, size = 0x12000, scoped, tag = 'internal scratch']
  %s0 = inlined_call_operand.vmem [shape: bf16[128,256], index: 0, kind: input, shape index: {}]
  %s1 = inlined_call_operand.vmem [shape: bf16[256,32], index: 1, kind: input, shape index: {}]
  %s2 = inlined_call_operand.vmem [shape: f32[128,32], index: 2, kind: output, shape index: {0}]
  %s3 = inlined_call_operand.vmem [shape: f32[1,32], index: 3, kind: output, shape index: {1}]
  %s4 = inlined_call_operand.vmem [shape: f32[1,32], index: 4, kind: output, shape index: {2}]
  %5 = xla_tuple %s2, %s3, %s4
  %s6 = sld [smem:[#allocation0]]
  $region38: #{conv_discriminator_forward.11} parent=0
    _
  %s8 = ssub.s32 1, %s6
  %s9 = scalar_select 0, %s8, %s6
  // Predicated region
  $region2: #{conv_discriminator_forward.11} parent=0 // pred_check
    _
  $region3: #{conv_discriminator_forward.11} parent=0 // pred_check_branch
    %11 = sbr.rel (0) target = $region5
  $region4: #{conv_discriminator_forward.11} parent=0 // pred_region
    _
  $region5: #{conv_discriminator_forward.11} parent=0 // pred_fallthru
    _
  // Predicated region
  $region6: #{conv_discriminator_forward.11} parent=0 // pred_check
    _
  $region7: #{conv_discriminator_forward.11} parent=0 // pred_check_branch
    %13 = sbr.rel (0) target = $region9
  $region8: #{conv_discriminator_forward.11} parent=0 // pred_region
    _
  $region9: #{conv_discriminator_forward.11} parent=0 // pred_fallthru
    _
  %p15 = scmp.eq.s32.totalorder 0, 0
  // Predicated region
  $region10: #{conv_discriminator_forward.11} parent=0 // pred_check
    %p16 = pneg %p15
  $region11: #{conv_discriminator_forward.11} parent=0 // pred_check_branch
    %18 = sbr.rel (%p16) target = $region13
  $region12: #{conv_discriminator_forward.11} parent=0 // pred_region
    %vm19 = vcmask 253952
    %20 = vst.msk [vmem:[%s3] sm:$0x1] %vm19, 0.0
    %21 = vst.msk [vmem:[%s4] sm:$0x1] %vm19, 0.0
  $region13: #{conv_discriminator_forward.11} parent=0 // pred_fallthru
    _
  %v22 = vld [vmem:[%s0] sm:$0xff]
  %v23 = vld [vmem:[%s0 + $0x8] sm:$0xff]
  %v24 = vld [vmem:[%s0 + $0x10] sm:$0xff]
  %v25 = vld [vmem:[%s0 + $0x18] sm:$0xff]
  %v26 = vld [vmem:[%s0 + $0x20] sm:$0xff]
  %v27 = vld [vmem:[%s0 + $0x28] sm:$0xff]
  %v28 = vld [vmem:[%s0 + $0x30] sm:$0xff]
  %v29 = vld [vmem:[%s0 + $0x38] sm:$0xff]
  %v30 = vld [vmem:[%s0 + $0x40] sm:$0xff]
  %v31 = vld [vmem:[%s0 + $0x48] sm:$0xff]
  %v32 = vld [vmem:[%s0 + $0x50] sm:$0xff]
  %v33 = vld [vmem:[%s0 + $0x58] sm:$0xff]
  %v34 = vld [vmem:[%s0 + $0x60] sm:$0xff]
  %v35 = vld [vmem:[%s0 + $0x68] sm:$0xff]
  %v36 = vld [vmem:[%s0 + $0x70] sm:$0xff]
  %v37 = vld [vmem:[%s0 + $0x78] sm:$0xff]
  %v38 = vld [vmem:[%s1] sm:$0xf]
  %v39 = vld [vmem:[%s1 + $0x4] sm:$0xf]
  %v40 = vld [vmem:[%s1 + $0x8] sm:$0xf]
  %v41 = vld [vmem:[%s1 + $0xc] sm:$0xf]
  %v42 = vld [vmem:[%s1 + $0x10] sm:$0xf]
  %v43 = vld [vmem:[%s1 + $0x14] sm:$0xf]
  %v44 = vld [vmem:[%s1 + $0x18] sm:$0xf]
  %v45 = vld [vmem:[%s1 + $0x1c] sm:$0xf]
  %v46 = vld [vmem:[%s1 + $0x20] sm:$0xf]
  %v47 = vld [vmem:[%s1 + $0x24] sm:$0xf]
  %v48 = vld [vmem:[%s1 + $0x28] sm:$0xf]
  %v49 = vld [vmem:[%s1 + $0x2c] sm:$0xf]
  %v50 = vld [vmem:[%s1 + $0x30] sm:$0xf]
  %v51 = vld [vmem:[%s1 + $0x34] sm:$0xf]
  %v52 = vld [vmem:[%s1 + $0x38] sm:$0xf]
  %v53 = vld [vmem:[%s1 + $0x3c] sm:$0xf]
  %v54 = vld [vmem:[%s1 + $0x40] sm:$0xf]
  %v55 = vld [vmem:[%s1 + $0x44] sm:$0xf]
  %v56 = vld [vmem:[%s1 + $0x48] sm:$0xf]
  %v57 = vld [vmem:[%s1 + $0x4c] sm:$0xf]
  %v58 = vld [vmem:[%s1 + $0x50] sm:$0xf]
  %v59 = vld [vmem:[%s1 + $0x54] sm:$0xf]
  %v60 = vld [vmem:[%s1 + $0x58] sm:$0xf]
  %v61 = vld [vmem:[%s1 + $0x5c] sm:$0xf]
  %v62 = vld [vmem:[%s1 + $0x60] sm:$0xf]
  %v63 = vld [vmem:[%s1 + $0x64] sm:$0xf]
  %v64 = vld [vmem:[%s1 + $0x68] sm:$0xf]
  %v65 = vld [vmem:[%s1 + $0x6c] sm:$0xf]
  %v66 = vld [vmem:[%s1 + $0x70] sm:$0xf]
  %v67 = vld [vmem:[%s1 + $0x74] sm:$0xf]
  %v68 = vld [vmem:[%s1 + $0x78] sm:$0xf]
  %v69 = vld [vmem:[%s1 + $0x7c] sm:$0xf]
  %v86 = vunpack.c.l.b16 %v22
  %v87 = vunpack.c.h.b16 %v22
  %v88 = vunpack.c.l.b16 %v23
  %v89 = vunpack.c.h.b16 %v23
  %v90 = vunpack.c.l.b16 %v24
  %v91 = vunpack.c.h.b16 %v24
  %v92 = vunpack.c.l.b16 %v25
  %v93 = vunpack.c.h.b16 %v25
  %v94 = vunpack.c.l.b16 %v26
  %v95 = vunpack.c.h.b16 %v26
  %v96 = vunpack.c.l.b16 %v27
  %v97 = vunpack.c.h.b16 %v27
  %v98 = vunpack.c.l.b16 %v28
  %v99 = vunpack.c.h.b16 %v28
  %v100 = vunpack.c.l.b16 %v29
  %v101 = vunpack.c.h.b16 %v29
  %v102 = vunpack.c.l.b16 %v30
  %v103 = vunpack.c.h.b16 %v30
  %v104 = vunpack.c.l.b16 %v31
  %v105 = vunpack.c.h.b16 %v31
  %v106 = vunpack.c.l.b16 %v32
  %v107 = vunpack.c.h.b16 %v32
  %v108 = vunpack.c.l.b16 %v33
  %v109 = vunpack.c.h.b16 %v33
  %v110 = vunpack.c.l.b16 %v34
  %v111 = vunpack.c.h.b16 %v34
  %v112 = vunpack.c.l.b16 %v35
  %v113 = vunpack.c.h.b16 %v35
  %v114 = vunpack.c.l.b16 %v36
  %v115 = vunpack.c.h.b16 %v36
  %v116 = vunpack.c.l.b16 %v37
  %v117 = vunpack.c.h.b16 %v37
  %v118 = vpack.c.b16 %v88, %v86
  %v119 = vpack.c.b16 %v89, %v87
  %v120 = vpack.c.b16 %v92, %v90
  %v121 = vpack.c.b16 %v93, %v91
  %v122 = vpack.c.b16 %v96, %v94
  %v123 = vpack.c.b16 %v97, %v95
  %v124 = vpack.c.b16 %v100, %v98
  %v125 = vpack.c.b16 %v101, %v99
  %v126 = vpack.c.b16 %v104, %v102
  %v127 = vpack.c.b16 %v105, %v103
  %v128 = vpack.c.b16 %v108, %v106
  %v129 = vpack.c.b16 %v109, %v107
  %v130 = vpack.c.b16 %v112, %v110
  %v131 = vpack.c.b16 %v113, %v111
  %v132 = vpack.c.b16 %v116, %v114
  %v133 = vpack.c.b16 %v117, %v115
  %v182 = vunpack.c.l.b16 %v38
  %v183 = vunpack.c.l.b16 %v39
  %v184 = vunpack.c.l.b16 %v40
  %v185 = vunpack.c.l.b16 %v41
  %v186 = vunpack.c.l.b16 %v42
  %v187 = vunpack.c.l.b16 %v43
  %v188 = vunpack.c.l.b16 %v44
  %v189 = vunpack.c.l.b16 %v45
  %v190 = vunpack.c.l.b16 %v46
  %v191 = vunpack.c.l.b16 %v47
  %v192 = vunpack.c.l.b16 %v48
  %v193 = vunpack.c.l.b16 %v49
  %v194 = vunpack.c.l.b16 %v50
  %v195 = vunpack.c.l.b16 %v51
  %v196 = vunpack.c.l.b16 %v52
  %v197 = vunpack.c.l.b16 %v53
  %v198 = vunpack.c.l.b16 %v54
  %v199 = vunpack.c.l.b16 %v55
  %v200 = vunpack.c.l.b16 %v56
  %v201 = vunpack.c.l.b16 %v57
  %v202 = vunpack.c.l.b16 %v58
  %v203 = vunpack.c.l.b16 %v59
  %v204 = vunpack.c.l.b16 %v60
  %v205 = vunpack.c.l.b16 %v61
  %v206 = vunpack.c.l.b16 %v62
  %v207 = vunpack.c.l.b16 %v63
  %v208 = vunpack.c.l.b16 %v64
  %v209 = vunpack.c.l.b16 %v65
  %v210 = vunpack.c.l.b16 %v66
  %v211 = vunpack.c.l.b16 %v67
  %v212 = vunpack.c.l.b16 %v68
  %v213 = vunpack.c.l.b16 %v69
  %v214 = vpack.c.b16 %v183, %v182
  %v215 = vpack.c.b16 %v185, %v184
  %v216 = vpack.c.b16 %v187, %v186
  %v217 = vpack.c.b16 %v189, %v188
  %v218 = vpack.c.b16 %v191, %v190
  %v219 = vpack.c.b16 %v193, %v192
  %v220 = vpack.c.b16 %v195, %v194
  %v221 = vpack.c.b16 %v197, %v196
  %v222 = vpack.c.b16 %v199, %v198
  %v223 = vpack.c.b16 %v201, %v200
  %v224 = vpack.c.b16 %v203, %v202
  %v225 = vpack.c.b16 %v205, %v204
  %v226 = vpack.c.b16 %v207, %v206
  %v227 = vpack.c.b16 %v209, %v208
  %v228 = vpack.c.b16 %v211, %v210
  %v229 = vpack.c.b16 %v213, %v212
  %246 = vmatprep.subr.bf16.mxu0 0
  %247 = vmatpush1.bf16.msra.mxu0 %v214
  %248 = vmatprep.subr.bf16.mxu0 0
  %249 = vmatpush1.bf16.msra.mxu0 %v215
  %250 = vmatprep.subr.bf16.mxu0 0
  %251 = vmatpush1.bf16.msra.mxu0 %v216
  %252 = vmatprep.subr.bf16.mxu0 0
  %253 = vmatpush1.bf16.msra.mxu0 %v217
  %254 = vmatprep.subr.bf16.mxu0 0
  %255 = vmatpush1.bf16.msra.mxu0 %v218
  %256 = vmatprep.subr.bf16.mxu0 0
  %257 = vmatpush1.bf16.msra.mxu0 %v219
  %258 = vmatprep.subr.bf16.mxu0 0
  %259 = vmatpush1.bf16.msra.mxu0 %v220
  %260 = vmatprep.subr.bf16.mxu0 0
  %261 = vmatpush1.bf16.msra.mxu0 %v221
  %262 = vmatprep.subr.bf16.mxu0 0
  %263 = vmatpush1.bf16.msra.mxu0 %v222
  %264 = vmatprep.subr.bf16.mxu0 0
  %265 = vmatpush1.bf16.msra.mxu0 %v223
  %266 = vmatprep.subr.bf16.mxu0 0
  %267 = vmatpush1.bf16.msra.mxu0 %v224
  %268 = vmatprep.subr.bf16.mxu0 0
  %269 = vmatpush1.bf16.msra.mxu0 %v225
  %270 = vmatprep.subr.bf16.mxu0 0
  %271 = vmatpush1.bf16.msra.mxu0 %v226
  %272 = vmatprep.subr.bf16.mxu0 0
  %273 = vmatpush1.bf16.msra.mxu0 %v227
  %274 = vmatprep.subr.bf16.mxu0 0
  %275 = vmatpush1.bf16.msra.mxu0 %v228
  %276 = vmatprep.subr.bf16.mxu0 0
  %277 = vmatpush1.bf16.msra.mxu0 %v229
  %278 = vmatprep.mubr.bf16.mxu0 %v119
  %279 = vmatmul.mubr.bf16.gmra.mrb[0].mxu0 %v118
  %v280 = vpop.f32.mrb[0].mxu0
  %v281 = vadd.f32 0.0, %v280
  %v282 = vpop.f32.mrb[0].mxu0
  %v283 = vpop.f32.mrb[0].mxu0
  %v284 = vadd.f32 0.0, %v283
  %v285 = vpop.f32.mrb[0].mxu0
  %286 = vmatprep.mubr.bf16.mxu0 %v121
  %287 = vmatmul.mubr.bf16.gmra.mrb[0].mxu0 %v120
  %v288 = vpop.f32.mrb[0].mxu0
  %v289 = vadd.f32 0.0, %v288
  %v290 = vpop.f32.mrb[0].mxu0
  %v291 = vpop.f32.mrb[0].mxu0
  %v292 = vadd.f32 0.0, %v291
  %v293 = vpop.f32.mrb[0].mxu0
  %294 = vmatprep.mubr.bf16.mxu0 %v123
  %295 = vmatmul.mubr.bf16.gmra.mrb[0].mxu0 %v122
  %v296 = vpop.f32.mrb[0].mxu0
  %v297 = vadd.f32 0.0, %v296
  %v298 = vpop.f32.mrb[0].mxu0
  %v299 = vpop.f32.mrb[0].mxu0
  %v300 = vadd.f32 0.0, %v299
  %v301 = vpop.f32.mrb[0].mxu0
  %302 = vmatprep.mubr.bf16.mxu0 %v125
  %303 = vmatmul.mubr.bf16.gmra.mrb[0].mxu0 %v124
  %v304 = vpop.f32.mrb[0].mxu0
  %v305 = vadd.f32 0.0, %v304
  %v306 = vpop.f32.mrb[0].mxu0
  %v307 = vpop.f32.mrb[0].mxu0
  %v308 = vadd.f32 0.0, %v307
  %v309 = vpop.f32.mrb[0].mxu0
  %310 = vmatprep.mubr.bf16.mxu0 %v127
  %311 = vmatmul.mubr.bf16.gmra.mrb[0].mxu0 %v126
  %v312 = vpop.f32.mrb[0].mxu0
  %v313 = vadd.f32 0.0, %v312
  %v314 = vpop.f32.mrb[0].mxu0
  %v315 = vpop.f32.mrb[0].mxu0
  %v316 = vadd.f32 0.0, %v315
  %v317 = vpop.f32.mrb[0].mxu0
  %318 = vmatprep.mubr.bf16.mxu0 %v129
  %319 = vmatmul.mubr.bf16.gmra.mrb[0].mxu0 %v128
  %v320 = vpop.f32.mrb[0].mxu0
  %v321 = vadd.f32 0.0, %v320
  %v322 = vpop.f32.mrb[0].mxu0
  %v323 = vpop.f32.mrb[0].mxu0
  %v324 = vadd.f32 0.0, %v323
  %v325 = vpop.f32.mrb[0].mxu0
  %326 = vmatprep.mubr.bf16.mxu0 %v131
  %327 = vmatmul.mubr.bf16.gmra.mrb[0].mxu0 %v130
  %v328 = vpop.f32.mrb[0].mxu0
  %v329 = vadd.f32 0.0, %v328
  %v330 = vpop.f32.mrb[0].mxu0
  %v331 = vpop.f32.mrb[0].mxu0
  %v332 = vadd.f32 0.0, %v331
  %v333 = vpop.f32.mrb[0].mxu0
  %334 = vmatprep.mubr.bf16.mxu0 %v133
  %335 = vmatmul.mubr.bf16.gmra.mrb[0].mxu0 %v132
  %v336 = vpop.f32.mrb[0].mxu0
  %v337 = vadd.f32 0.0, %v336
  %v338 = vpop.f32.mrb[0].mxu0
  %v339 = vpop.f32.mrb[0].mxu0
  %v340 = vadd.f32 0.0, %v339
  %v341 = vpop.f32.mrb[0].mxu0
  %342 = vdwg.mxu0
  %vm343 = vcmask 261120
  %344 = vst.msk [vmem:[%s2] sm:$0xff] %vm343, %v281
  %345 = vst.msk [vmem:[%s2 + $0x8] sm:$0xff] %vm343, %v284
  %346 = vst.msk [vmem:[%s2 + $0x10] sm:$0xff] %vm343, %v289
  %347 = vst.msk [vmem:[%s2 + $0x18] sm:$0xff] %vm343, %v292
  %348 = vst.msk [vmem:[%s2 + $0x20] sm:$0xff] %vm343, %v297
  %349 = vst.msk [vmem:[%s2 + $0x28] sm:$0xff] %vm343, %v300
  %350 = vst.msk [vmem:[%s2 + $0x30] sm:$0xff] %vm343, %v305
  %351 = vst.msk [vmem:[%s2 + $0x38] sm:$0xff] %vm343, %v308
  %352 = vst.msk [vmem:[%s2 + $0x40] sm:$0xff] %vm343, %v313
  %353 = vst.msk [vmem:[%s2 + $0x48] sm:$0xff] %vm343, %v316
  %354 = vst.msk [vmem:[%s2 + $0x50] sm:$0xff] %vm343, %v321
  %355 = vst.msk [vmem:[%s2 + $0x58] sm:$0xff] %vm343, %v324
  %356 = vst.msk [vmem:[%s2 + $0x60] sm:$0xff] %vm343, %v329
  %357 = vst.msk [vmem:[%s2 + $0x68] sm:$0xff] %vm343, %v332
  %358 = vst.msk [vmem:[%s2 + $0x70] sm:$0xff] %vm343, %v337
  %359 = vst.msk [vmem:[%s2 + $0x78] sm:$0xff] %vm343, %v340
  %v360 = vld [vmem:[%s3] sm:$0x1]
  %v361 = vsel %vm343, %v281, 0.0
  %v362 = vsel %vm343, %v284, 0.0
  %v363 = vadd.f32 %v361, %v362
  %v364 = vsel %vm343, %v289, 0.0
  %v365 = vadd.f32 %v363, %v364
  %v366 = vsel %vm343, %v292, 0.0
  %v367 = vadd.f32 %v365, %v366
  %v368 = vsel %vm343, %v297, 0.0
  %v369 = vadd.f32 %v367, %v368
  %v370 = vsel %vm343, %v300, 0.0
  %v371 = vadd.f32 %v369, %v370
  %v372 = vsel %vm343, %v305, 0.0
  %v373 = vadd.f32 %v371, %v372
  %v374 = vsel %vm343, %v308, 0.0
  %v375 = vadd.f32 %v373, %v374
  %v376 = vsel %vm343, %v313, 0.0
  %v377 = vadd.f32 %v375, %v376
  %v378 = vsel %vm343, %v316, 0.0
  %v379 = vadd.f32 %v377, %v378
  %v380 = vsel %vm343, %v321, 0.0
  %v381 = vadd.f32 %v379, %v380
  %v382 = vsel %vm343, %v324, 0.0
  %v383 = vadd.f32 %v381, %v382
  %v384 = vsel %vm343, %v329, 0.0
  %v385 = vadd.f32 %v383, %v384
  %v386 = vsel %vm343, %v332, 0.0
  %v387 = vadd.f32 %v385, %v386
  %v388 = vsel %vm343, %v337, 0.0
  %v389 = vadd.f32 %v387, %v388
  %v390 = vsel %vm343, %v340, 0.0
  %v391 = vadd.f32 %v389, %v390
  %v392 = vrot.slane %v391, 4
  %v393 = vadd.f32 %v391, %v392
  %v394 = vrot.slane %v393, 2
  %v395 = vadd.f32 %v393, %v394
  %v396 = vrot.slane %v395, 1
  %v397 = vadd.f32 %v395, %v396
  %v398 = vadd.f32 %v360, %v397
  %vm399 = vcmask 253952
  %400 = vst.msk [vmem:[%s3] sm:$0x1] %vm399, %v398
  %v401 = vld [vmem:[%s4] sm:$0x1]
  %v402 = vmul.f32 %v281, %v281
  %v403 = vmul.f32 %v284, %v284
  %v404 = vmul.f32 %v289, %v289
  %v405 = vmul.f32 %v292, %v292
  %v406 = vmul.f32 %v297, %v297
  %v407 = vmul.f32 %v300, %v300
  %v408 = vmul.f32 %v305, %v305
  %v409 = vmul.f32 %v308, %v308
  %v410 = vmul.f32 %v313, %v313
  %v411 = vmul.f32 %v316, %v316
  %v412 = vmul.f32 %v321, %v321
  %v413 = vmul.f32 %v324, %v324
  %v414 = vmul.f32 %v329, %v329
  %v415 = vmul.f32 %v332, %v332
  %v416 = vmul.f32 %v337, %v337
  %v417 = vmul.f32 %v340, %v340
  %v418 = vsel %vm343, %v402, 0.0
  %v419 = vsel %vm343, %v403, 0.0
  %v420 = vadd.f32 %v418, %v419
  %v421 = vsel %vm343, %v404, 0.0
  %v422 = vadd.f32 %v420, %v421
  %v423 = vsel %vm343, %v405, 0.0
  %v424 = vadd.f32 %v422, %v423
  %v425 = vsel %vm343, %v406, 0.0
  %v426 = vadd.f32 %v424, %v425
  %v427 = vsel %vm343, %v407, 0.0
  %v428 = vadd.f32 %v426, %v427
  %v429 = vsel %vm343, %v408, 0.0
  %v430 = vadd.f32 %v428, %v429
  %v431 = vsel %vm343, %v409, 0.0
  %v432 = vadd.f32 %v430, %v431
  %v433 = vsel %vm343, %v410, 0.0
  %v434 = vadd.f32 %v432, %v433
  %v435 = vsel %vm343, %v411, 0.0
  %v436 = vadd.f32 %v434, %v435
  %v437 = vsel %vm343, %v412, 0.0
  %v438 = vadd.f32 %v436, %v437
  %v439 = vsel %vm343, %v413, 0.0
  %v440 = vadd.f32 %v438, %v439
  %v441 = vsel %vm343, %v414, 0.0
  %v442 = vadd.f32 %v440, %v441
  %v443 = vsel %vm343, %v415, 0.0
  %v444 = vadd.f32 %v442, %v443
  %v445 = vsel %vm343, %v416, 0.0
  %v446 = vadd.f32 %v444, %v445
  %v447 = vsel %vm343, %v417, 0.0
  %v448 = vadd.f32 %v446, %v447
  %v449 = vrot.slane %v448, 4
  %v450 = vadd.f32 %v448, %v449
  %v451 = vrot.slane %v450, 2
  %v452 = vadd.f32 %v450, %v451
  %v453 = vrot.slane %v452, 1
  %v454 = vadd.f32 %v452, %v453
  %v455 = vadd.f32 %v401, %v454
  %456 = vst.msk [vmem:[%s4] sm:$0x1] %vm399, %v455
  // Predicated region
  $region14: #{conv_discriminator_forward.11} parent=0 // pred_check
    _
  $region15: #{conv_discriminator_forward.11} parent=0 // pred_check_branch
    %458 = sbr.rel (0) target = $region17
  $region16: #{conv_discriminator_forward.11} parent=0 // pred_region
    _
  $region17: #{conv_discriminator_forward.11} parent=0 // pred_fallthru
    _
  // Predicated region
  $region18: #{conv_discriminator_forward.11} parent=0 // pred_check
    _
  $region19: #{conv_discriminator_forward.11} parent=0 // pred_check_branch
    %460 = sbr.rel (0) target = $region21
  $region20: #{conv_discriminator_forward.11} parent=0 // pred_region
    _
  $region21: #{conv_discriminator_forward.11} parent=0 // pred_fallthru
    _
  // Predicated region
  $region22: #{conv_discriminator_forward.11} parent=0 // pred_check
    _
  $region23: #{conv_discriminator_forward.11} parent=0 // pred_check_branch
    %462 = sbr.rel (0) target = $region25
  $region24: #{conv_discriminator_forward.11} parent=0 // pred_region
    _
  $region25: #{conv_discriminator_forward.11} parent=0 // pred_fallthru
    _
  // Predicated region
  $region26: #{conv_discriminator_forward.11} parent=0 // pred_check
    _
  $region27: #{conv_discriminator_forward.11} parent=0 // pred_check_branch
    %464 = sbr.rel (0) target = $region29
  $region28: #{conv_discriminator_forward.11} parent=0 // pred_region
    _
  $region29: #{conv_discriminator_forward.11} parent=0 // pred_fallthru
    _
  // Predicated region
  $region30: #{conv_discriminator_forward.11} parent=0 // pred_check
    _
  $region31: #{conv_discriminator_forward.11} parent=0 // pred_check_branch
    %466 = sbr.rel (0) target = $region33
  $region32: #{conv_discriminator_forward.11} parent=0 // pred_region
    _
  $region33: #{conv_discriminator_forward.11} parent=0 // pred_fallthru
    _
  // Predicated region
  $region34: #{conv_discriminator_forward.11} parent=0 // pred_check
    _
  $region35: #{conv_discriminator_forward.11} parent=0 // pred_check_branch
    %468 = sbr.rel (0) target = $region37
  $region36: #{conv_discriminator_forward.11} parent=0 // pred_region
    _
  $region37: #{conv_discriminator_forward.11} parent=0 // pred_fallthru
    _

// kernel: conv_discriminator_forward.14
$region0: #{conv_discriminator_forward.14}
  #allocation0 [shape = 'u32[]', space=smem, size = 0x4, offset = 0x4, fixed_abs, tag = 'smem constant byte address 0x4 - core index']
  #allocation1 [shape = 'u32[144,128]{1,0:T(1,128)}', space=vmem, size = 0x12000, scoped, tag = 'internal scratch']
  %s0 = inlined_call_operand.vmem [shape: f32[32,64], index: 0, kind: input, shape index: {}]
  %s1 = inlined_call_operand.vmem [shape: f32[1,64], index: 1, kind: input, shape index: {}]
  %s2 = inlined_call_operand.vmem [shape: f32[1,64], index: 2, kind: input, shape index: {}]
  %s3 = inlined_call_operand.vmem [shape: f32[32,64], index: 3, kind: output, shape index: {}]
  %s4 = sld [smem:[#allocation0]]
  $region22: #{conv_discriminator_forward.14} parent=0
    _
  %s6 = ssub.s32 1, %s4
  %s7 = scalar_select 0, %s6, %s4
  // Predicated region
  $region2: #{conv_discriminator_forward.14} parent=0 // pred_check
    _
  $region3: #{conv_discriminator_forward.14} parent=0 // pred_check_branch
    %9 = sbr.rel (0) target = $region5
  $region4: #{conv_discriminator_forward.14} parent=0 // pred_region
    _
  $region5: #{conv_discriminator_forward.14} parent=0 // pred_fallthru
    _
  // Predicated region
  $region6: #{conv_discriminator_forward.14} parent=0 // pred_check
    _
  $region7: #{conv_discriminator_forward.14} parent=0 // pred_check_branch
    %11 = sbr.rel (0) target = $region9
  $region8: #{conv_discriminator_forward.14} parent=0 // pred_region
    _
  $region9: #{conv_discriminator_forward.14} parent=0 // pred_fallthru
    _
  // Predicated region
  $region10: #{conv_discriminator_forward.14} parent=0 // pred_check
    _
  $region11: #{conv_discriminator_forward.14} parent=0 // pred_check_branch
    %13 = sbr.rel (0) target = $region13
  $region12: #{conv_discriminator_forward.14} parent=0 // pred_region
    _
  $region13: #{conv_discriminator_forward.14} parent=0 // pred_fallthru
    _
  %v14 = vld [vmem:[%s0] sm:$0xff]
  %v15 = vld [vmem:[%s0 + $0x8] sm:$0xff]
  %v16 = vld [vmem:[%s0 + $0x10] sm:$0xff]
  %v17 = vld [vmem:[%s0 + $0x18] sm:$0xff]
  %v18 = vld [vmem:[%s1] sm:$0x1]
  %v19 = vmul.f32 %v18, 0.03125
  %v20 = vld [vmem:[%s2] sm:$0x1]
  %v21 = vmul.f32 %v20, 0.03125
  %v22 = vmul.f32 %v19, %v19
  %v23 = vsub.f32 %v21, %v22
  %v24 = vmax.f32 %v23, 0.0
  %v26 = vlaneseq
  %v27 = vshrl.u32 %v26, 7
  %v28 = vsub.s32 0, %v27
  %v29 = vrot.slane %v19, %v28
  %v31 = vsub.f32 %v14, %v29
  %v32 = vsub.f32 %v15, %v29
  %v33 = vsub.f32 %v16, %v29
  %v34 = vsub.f32 %v17, %v29
  %v35 = vadd.f32 %v24, 1e-05
  %v36 = vrsqrt.pop %v35
  %v38 = vlaneseq
  %v39 = vshrl.u32 %v38, 7
  %v40 = vsub.s32 0, %v39
  %v41 = vrot.slane %v36, %v40
  %v43 = vmul.f32 %v31, %v41
  %v44 = vmul.f32 %v32, %v41
  %v45 = vmul.f32 %v33, %v41
  %v46 = vmul.f32 %v34, %v41
  %vm47 = vcmp.ge.f32.partialorder %v43, 0.0
  %vm48 = vcmp.ge.f32.partialorder %v44, 0.0
  %vm49 = vcmp.ge.f32.partialorder %v45, 0.0
  %vm50 = vcmp.ge.f32.partialorder %v46, 0.0
  %v51 = vmul.f32 %v43, 0.2
  %v52 = vmul.f32 %v44, 0.2
  %v53 = vmul.f32 %v45, 0.2
  %v54 = vmul.f32 %v46, 0.2
  %v55 = vsel %vm47, %v43, %v51
  %v56 = vsel %vm48, %v44, %v52
  %v57 = vsel %vm49, %v45, %v53
  %v58 = vsel %vm50, %v46, %v54
  %vm59 = vcmask 523264
  %60 = vst.msk [vmem:[%s3] sm:$0xff] %vm59, %v55
  %61 = vst.msk [vmem:[%s3 + $0x8] sm:$0xff] %vm59, %v56
  %62 = vst.msk [vmem:[%s3 + $0x10] sm:$0xff] %vm59, %v57
  %63 = vst.msk [vmem:[%s3 + $0x18] sm:$0xff] %vm59, %v58
  // Predicated region
  $region14: #{conv_discriminator_forward.14} parent=0 // pred_check
    _
  $region15: #{conv_discriminator_forward.14} parent=0 // pred_check_branch
    %65 = sbr.rel (0) target = $region17
  $region16: #{conv_discriminator_forward.14} parent=0 // pred_region
    _
  $region17: #{conv_discriminator_forward.14} parent=0 // pred_fallthru
    _
  // Predicated region
  $region18: #{conv_discriminator_forward.14} parent=0 // pred_check
    _
  $region19: #{conv_discriminator_forward.14} parent=0 // pred_check_branch
    %67 = sbr.rel (0) target = $region21
  $region20: #{conv_discriminator_forward.14} parent=0 // pred_region
    _
  $region21: #{conv_discriminator_forward.14} parent=0 // pred_fallthru
    _

// kernel: conv_discriminator_forward.13
$region0: #{conv_discriminator_forward.13}
  #allocation0 [shape = 'u32[]', space=smem, size = 0x4, offset = 0x4, fixed_abs, tag = 'smem constant byte address 0x4 - core index']
  #allocation1 [shape = 'u32[144,128]{1,0:T(1,128)}', space=vmem, size = 0x12000, scoped, tag = 'internal scratch']
  %s0 = inlined_call_operand.vmem [shape: bf16[32,512], index: 0, kind: input, shape index: {}]
  %s1 = inlined_call_operand.vmem [shape: bf16[512,64], index: 1, kind: input, shape index: {}]
  %s2 = inlined_call_operand.vmem [shape: f32[32,64], index: 2, kind: output, shape index: {0}]
  %s3 = inlined_call_operand.vmem [shape: f32[1,64], index: 3, kind: output, shape index: {1}]
  %s4 = inlined_call_operand.vmem [shape: f32[1,64], index: 4, kind: output, shape index: {2}]
  %5 = xla_tuple %s2, %s3, %s4
  %s6 = sld [smem:[#allocation0]]
  $region38: #{conv_discriminator_forward.13} parent=0
    _
  %s8 = ssub.s32 1, %s6
  %s9 = scalar_select 0, %s8, %s6
  // Predicated region
  $region2: #{conv_discriminator_forward.13} parent=0 // pred_check
    _
  $region3: #{conv_discriminator_forward.13} parent=0 // pred_check_branch
    %11 = sbr.rel (0) target = $region5
  $region4: #{conv_discriminator_forward.13} parent=0 // pred_region
    _
  $region5: #{conv_discriminator_forward.13} parent=0 // pred_fallthru
    _
  // Predicated region
  $region6: #{conv_discriminator_forward.13} parent=0 // pred_check
    _
  $region7: #{conv_discriminator_forward.13} parent=0 // pred_check_branch
    %13 = sbr.rel (0) target = $region9
  $region8: #{conv_discriminator_forward.13} parent=0 // pred_region
    _
  $region9: #{conv_discriminator_forward.13} parent=0 // pred_fallthru
    _
  %p15 = scmp.eq.s32.totalorder 0, 0
  // Predicated region
  $region10: #{conv_discriminator_forward.13} parent=0 // pred_check
    %p16 = pneg %p15
  $region11: #{conv_discriminator_forward.13} parent=0 // pred_check_branch
    %18 = sbr.rel (%p16) target = $region13
  $region12: #{conv_discriminator_forward.13} parent=0 // pred_region
    %vm19 = vcmask 516096
    %20 = vst.msk [vmem:[%s3] sm:$0x1] %vm19, 0.0
    %21 = vst.msk [vmem:[%s4] sm:$0x1] %vm19, 0.0
  $region13: #{conv_discriminator_forward.13} parent=0 // pred_fallthru
    _
  %v22 = vld [vmem:[%s0] sm:$0xff]
  %v23 = vld [vmem:[%s0 + $0x8] sm:$0xff]
  %v24 = vld [vmem:[%s0 + $0x10] sm:$0xff]
  %v25 = vld [vmem:[%s0 + $0x18] sm:$0xff]
  %v26 = vld [vmem:[%s0 + $0x20] sm:$0xff]
  %v27 = vld [vmem:[%s0 + $0x28] sm:$0xff]
  %v28 = vld [vmem:[%s0 + $0x30] sm:$0xff]
  %v29 = vld [vmem:[%s0 + $0x38] sm:$0xff]
  %v30 = vld [vmem:[%s1] sm:$0xf]
  %v31 = vld [vmem:[%s1 + $0x4] sm:$0xf]
  %v32 = vld [vmem:[%s1 + $0x8] sm:$0xf]
  %v33 = vld [vmem:[%s1 + $0xc] sm:$0xf]
  %v34 = vld [vmem:[%s1 + $0x10] sm:$0xf]
  %v35 = vld [vmem:[%s1 + $0x14] sm:$0xf]
  %v36 = vld [vmem:[%s1 + $0x18] sm:$0xf]
  %v37 = vld [vmem:[%s1 + $0x1c] sm:$0xf]
  %v38 = vld [vmem:[%s1 + $0x20] sm:$0xf]
  %v39 = vld [vmem:[%s1 + $0x24] sm:$0xf]
  %v40 = vld [vmem:[%s1 + $0x28] sm:$0xf]
  %v41 = vld [vmem:[%s1 + $0x2c] sm:$0xf]
  %v42 = vld [vmem:[%s1 + $0x30] sm:$0xf]
  %v43 = vld [vmem:[%s1 + $0x34] sm:$0xf]
  %v44 = vld [vmem:[%s1 + $0x38] sm:$0xf]
  %v45 = vld [vmem:[%s1 + $0x3c] sm:$0xf]
  %v46 = vld [vmem:[%s1 + $0x40] sm:$0xf]
  %v47 = vld [vmem:[%s1 + $0x44] sm:$0xf]
  %v48 = vld [vmem:[%s1 + $0x48] sm:$0xf]
  %v49 = vld [vmem:[%s1 + $0x4c] sm:$0xf]
  %v50 = vld [vmem:[%s1 + $0x50] sm:$0xf]
  %v51 = vld [vmem:[%s1 + $0x54] sm:$0xf]
  %v52 = vld [vmem:[%s1 + $0x58] sm:$0xf]
  %v53 = vld [vmem:[%s1 + $0x5c] sm:$0xf]
  %v54 = vld [vmem:[%s1 + $0x60] sm:$0xf]
  %v55 = vld [vmem:[%s1 + $0x64] sm:$0xf]
  %v56 = vld [vmem:[%s1 + $0x68] sm:$0xf]
  %v57 = vld [vmem:[%s1 + $0x6c] sm:$0xf]
  %v58 = vld [vmem:[%s1 + $0x70] sm:$0xf]
  %v59 = vld [vmem:[%s1 + $0x74] sm:$0xf]
  %v60 = vld [vmem:[%s1 + $0x78] sm:$0xf]
  %v61 = vld [vmem:[%s1 + $0x7c] sm:$0xf]
  %v62 = vld [vmem:[%s1 + $0x80] sm:$0xf]
  %v63 = vld [vmem:[%s1 + $0x84] sm:$0xf]
  %v64 = vld [vmem:[%s1 + $0x88] sm:$0xf]
  %v65 = vld [vmem:[%s1 + $0x8c] sm:$0xf]
  %v66 = vld [vmem:[%s1 + $0x90] sm:$0xf]
  %v67 = vld [vmem:[%s1 + $0x94] sm:$0xf]
  %v68 = vld [vmem:[%s1 + $0x98] sm:$0xf]
  %v69 = vld [vmem:[%s1 + $0x9c] sm:$0xf]
  %v70 = vld [vmem:[%s1 + $0xa0] sm:$0xf]
  %v71 = vld [vmem:[%s1 + $0xa4] sm:$0xf]
  %v72 = vld [vmem:[%s1 + $0xa8] sm:$0xf]
  %v73 = vld [vmem:[%s1 + $0xac] sm:$0xf]
  %v74 = vld [vmem:[%s1 + $0xb0] sm:$0xf]
  %v75 = vld [vmem:[%s1 + $0xb4] sm:$0xf]
  %v76 = vld [vmem:[%s1 + $0xb8] sm:$0xf]
  %v77 = vld [vmem:[%s1 + $0xbc] sm:$0xf]
  %v78 = vld [vmem:[%s1 + $0xc0] sm:$0xf]
  %v79 = vld [vmem:[%s1 + $0xc4] sm:$0xf]
  %v80 = vld [vmem:[%s1 + $0xc8] sm:$0xf]
  %v81 = vld [vmem:[%s1 + $0xcc] sm:$0xf]
  %v82 = vld [vmem:[%s1 + $0xd0] sm:$0xf]
  %v83 = vld [vmem:[%s1 + $0xd4] sm:$0xf]
  %v84 = vld [vmem:[%s1 + $0xd8] sm:$0xf]
  %v85 = vld [vmem:[%s1 + $0xdc] sm:$0xf]
  %v86 = vld [vmem:[%s1 + $0xe0] sm:$0xf]
  %v87 = vld [vmem:[%s1 + $0xe4] sm:$0xf]
  %v88 = vld [vmem:[%s1 + $0xe8] sm:$0xf]
  %v89 = vld [vmem:[%s1 + $0xec] sm:$0xf]
  %v90 = vld [vmem:[%s1 + $0xf0] sm:$0xf]
  %v91 = vld [vmem:[%s1 + $0xf4] sm:$0xf]
  %v92 = vld [vmem:[%s1 + $0xf8] sm:$0xf]
  %v93 = vld [vmem:[%s1 + $0xfc] sm:$0xf]
  %v102 = vunpack.c.l.b16 %v22
  %v103 = vunpack.c.h.b16 %v22
  %v104 = vunpack.c.l.b16 %v23
  %v105 = vunpack.c.h.b16 %v23
  %v106 = vunpack.c.l.b16 %v24
  %v107 = vunpack.c.h.b16 %v24
  %v108 = vunpack.c.l.b16 %v25
  %v109 = vunpack.c.h.b16 %v25
  %v110 = vunpack.c.l.b16 %v26
  %v111 = vunpack.c.h.b16 %v26
  %v112 = vunpack.c.l.b16 %v27
  %v113 = vunpack.c.h.b16 %v27
  %v114 = vunpack.c.l.b16 %v28
  %v115 = vunpack.c.h.b16 %v28
  %v116 = vunpack.c.l.b16 %v29
  %v117 = vunpack.c.h.b16 %v29
  %v118 = vpack.c.b16 %v106, %v102
  %v119 = vpack.c.b16 %v107, %v103
  %v120 = vpack.c.b16 %v108, %v104
  %v121 = vpack.c.b16 %v109, %v105
  %v122 = vpack.c.b16 %v114, %v110
  %v123 = vpack.c.b16 %v115, %v111
  %v124 = vpack.c.b16 %v116, %v112
  %v125 = vpack.c.b16 %v117, %v113
  %v198 = vunpack.c.l.b16 %v30
  %v199 = vunpack.c.l.b16 %v31
  %v200 = vunpack.c.l.b16 %v32
  %v201 = vunpack.c.l.b16 %v33
  %v202 = vunpack.c.l.b16 %v34
  %v203 = vunpack.c.l.b16 %v35
  %v204 = vunpack.c.l.b16 %v36
  %v205 = vunpack.c.l.b16 %v37
  %v206 = vunpack.c.l.b16 %v38
  %v207 = vunpack.c.l.b16 %v39
  %v208 = vunpack.c.l.b16 %v40
  %v209 = vunpack.c.l.b16 %v41
  %v210 = vunpack.c.l.b16 %v42
  %v211 = vunpack.c.l.b16 %v43
  %v212 = vunpack.c.l.b16 %v44
  %v213 = vunpack.c.l.b16 %v45
  %v214 = vunpack.c.l.b16 %v46
  %v215 = vunpack.c.l.b16 %v47
  %v216 = vunpack.c.l.b16 %v48
  %v217 = vunpack.c.l.b16 %v49
  %v218 = vunpack.c.l.b16 %v50
  %v219 = vunpack.c.l.b16 %v51
  %v220 = vunpack.c.l.b16 %v52
  %v221 = vunpack.c.l.b16 %v53
  %v222 = vunpack.c.l.b16 %v54
  %v223 = vunpack.c.l.b16 %v55
  %v224 = vunpack.c.l.b16 %v56
  %v225 = vunpack.c.l.b16 %v57
  %v226 = vunpack.c.l.b16 %v58
  %v227 = vunpack.c.l.b16 %v59
  %v228 = vunpack.c.l.b16 %v60
  %v229 = vunpack.c.l.b16 %v61
  %v230 = vunpack.c.l.b16 %v62
  %v231 = vunpack.c.l.b16 %v63
  %v232 = vunpack.c.l.b16 %v64
  %v233 = vunpack.c.l.b16 %v65
  %v234 = vunpack.c.l.b16 %v66
  %v235 = vunpack.c.l.b16 %v67
  %v236 = vunpack.c.l.b16 %v68
  %v237 = vunpack.c.l.b16 %v69
  %v238 = vunpack.c.l.b16 %v70
  %v239 = vunpack.c.l.b16 %v71
  %v240 = vunpack.c.l.b16 %v72
  %v241 = vunpack.c.l.b16 %v73
  %v242 = vunpack.c.l.b16 %v74
  %v243 = vunpack.c.l.b16 %v75
  %v244 = vunpack.c.l.b16 %v76
  %v245 = vunpack.c.l.b16 %v77
  %v246 = vunpack.c.l.b16 %v78
  %v247 = vunpack.c.l.b16 %v79
  %v248 = vunpack.c.l.b16 %v80
  %v249 = vunpack.c.l.b16 %v81
  %v250 = vunpack.c.l.b16 %v82
  %v251 = vunpack.c.l.b16 %v83
  %v252 = vunpack.c.l.b16 %v84
  %v253 = vunpack.c.l.b16 %v85
  %v254 = vunpack.c.l.b16 %v86
  %v255 = vunpack.c.l.b16 %v87
  %v256 = vunpack.c.l.b16 %v88
  %v257 = vunpack.c.l.b16 %v89
  %v258 = vunpack.c.l.b16 %v90
  %v259 = vunpack.c.l.b16 %v91
  %v260 = vunpack.c.l.b16 %v92
  %v261 = vunpack.c.l.b16 %v93
  %v262 = vpack.c.b16 %v199, %v198
  %v263 = vpack.c.b16 %v201, %v200
  %v264 = vpack.c.b16 %v203, %v202
  %v265 = vpack.c.b16 %v205, %v204
  %v266 = vpack.c.b16 %v207, %v206
  %v267 = vpack.c.b16 %v209, %v208
  %v268 = vpack.c.b16 %v211, %v210
  %v269 = vpack.c.b16 %v213, %v212
  %v270 = vpack.c.b16 %v215, %v214
  %v271 = vpack.c.b16 %v217, %v216
  %v272 = vpack.c.b16 %v219, %v218
  %v273 = vpack.c.b16 %v221, %v220
  %v274 = vpack.c.b16 %v223, %v222
  %v275 = vpack.c.b16 %v225, %v224
  %v276 = vpack.c.b16 %v227, %v226
  %v277 = vpack.c.b16 %v229, %v228
  %v278 = vpack.c.b16 %v231, %v230
  %v279 = vpack.c.b16 %v233, %v232
  %v280 = vpack.c.b16 %v235, %v234
  %v281 = vpack.c.b16 %v237, %v236
  %v282 = vpack.c.b16 %v239, %v238
  %v283 = vpack.c.b16 %v241, %v240
  %v284 = vpack.c.b16 %v243, %v242
  %v285 = vpack.c.b16 %v245, %v244
  %v286 = vpack.c.b16 %v247, %v246
  %v287 = vpack.c.b16 %v249, %v248
  %v288 = vpack.c.b16 %v251, %v250
  %v289 = vpack.c.b16 %v253, %v252
  %v290 = vpack.c.b16 %v255, %v254
  %v291 = vpack.c.b16 %v257, %v256
  %v292 = vpack.c.b16 %v259, %v258
  %v293 = vpack.c.b16 %v261, %v260
  %326 = vmatprep.subr.bf16.mxu0 0
  %327 = vmatpush1.bf16.msra.mxu0 %v262
  %328 = vmatprep.subr.bf16.mxu0 0
  %329 = vmatpush1.bf16.msra.mxu0 %v263
  %330 = vmatprep.subr.bf16.mxu0 0
  %331 = vmatpush1.bf16.msra.mxu0 %v264
  %332 = vmatprep.subr.bf16.mxu0 0
  %333 = vmatpush1.bf16.msra.mxu0 %v265
  %334 = vmatprep.subr.bf16.mxu0 0
  %335 = vmatpush1.bf16.msra.mxu0 %v266
  %336 = vmatprep.subr.bf16.mxu0 0
  %337 = vmatpush1.bf16.msra.mxu0 %v267
  %338 = vmatprep.subr.bf16.mxu0 0
  %339 = vmatpush1.bf16.msra.mxu0 %v268
  %340 = vmatprep.subr.bf16.mxu0 0
  %341 = vmatpush1.bf16.msra.mxu0 %v269
  %342 = vmatprep.subr.bf16.mxu0 0
  %343 = vmatpush1.bf16.msra.mxu0 %v270
  %344 = vmatprep.subr.bf16.mxu0 0
  %345 = vmatpush1.bf16.msra.mxu0 %v271
  %346 = vmatprep.subr.bf16.mxu0 0
  %347 = vmatpush1.bf16.msra.mxu0 %v272
  %348 = vmatprep.subr.bf16.mxu0 0
  %349 = vmatpush1.bf16.msra.mxu0 %v273
  %350 = vmatprep.subr.bf16.mxu0 0
  %351 = vmatpush1.bf16.msra.mxu0 %v274
  %352 = vmatprep.subr.bf16.mxu0 0
  %353 = vmatpush1.bf16.msra.mxu0 %v275
  %354 = vmatprep.subr.bf16.mxu0 0
  %355 = vmatpush1.bf16.msra.mxu0 %v276
  %356 = vmatprep.subr.bf16.mxu0 0
  %357 = vmatpush1.bf16.msra.mxu0 %v277
  %358 = vmatprep.mubr.bf16.mxu0 %v119
  %359 = vmatmul.mubr.bf16.gmra.mrb[0].mxu0 %v118
  %v360 = vpop.f32.mrb[0].mxu0
  %v361 = vadd.f32 0.0, %v360
  %v362 = vpop.f32.mrb[0].mxu0
  %v363 = vpop.f32.mrb[0].mxu0
  %v364 = vadd.f32 0.0, %v363
  %v365 = vpop.f32.mrb[0].mxu0
  %366 = vmatprep.mubr.bf16.mxu0 %v123
  %367 = vmatmul.mubr.bf16.gmra.mrb[0].mxu0 %v122
  %v368 = vpop.f32.mrb[0].mxu0
  %v369 = vadd.f32 0.0, %v368
  %v370 = vpop.f32.mrb[0].mxu0
  %v371 = vpop.f32.mrb[0].mxu0
  %v372 = vadd.f32 0.0, %v371
  %v373 = vpop.f32.mrb[0].mxu0
  %374 = vdwg.mxu0
  %375 = vmatprep.subr.bf16.mxu0 0
  %376 = vmatpush1.bf16.msra.mxu0 %v278
  %377 = vmatprep.subr.bf16.mxu0 0
  %378 = vmatpush1.bf16.msra.mxu0 %v279
  %379 = vmatprep.subr.bf16.mxu0 0
  %380 = vmatpush1.bf16.msra.mxu0 %v280
  %381 = vmatprep.subr.bf16.mxu0 0
  %382 = vmatpush1.bf16.msra.mxu0 %v281
  %383 = vmatprep.subr.bf16.mxu0 0
  %384 = vmatpush1.bf16.msra.mxu0 %v282
  %385 = vmatprep.subr.bf16.mxu0 0
  %386 = vmatpush1.bf16.msra.mxu0 %v283
  %387 = vmatprep.subr.bf16.mxu0 0
  %388 = vmatpush1.bf16.msra.mxu0 %v284
  %389 = vmatprep.subr.bf16.mxu0 0
  %390 = vmatpush1.bf16.msra.mxu0 %v285
  %391 = vmatprep.subr.bf16.mxu0 0
  %392 = vmatpush1.bf16.msra.mxu0 %v286
  %393 = vmatprep.subr.bf16.mxu0 0
  %394 = vmatpush1.bf16.msra.mxu0 %v287
  %395 = vmatprep.subr.bf16.mxu0 0
  %396 = vmatpush1.bf16.msra.mxu0 %v288
  %397 = vmatprep.subr.bf16.mxu0 0
  %398 = vmatpush1.bf16.msra.mxu0 %v289
  %399 = vmatprep.subr.bf16.mxu0 0
  %400 = vmatpush1.bf16.msra.mxu0 %v290
  %401 = vmatprep.subr.bf16.mxu0 0
  %402 = vmatpush1.bf16.msra.mxu0 %v291
  %403 = vmatprep.subr.bf16.mxu0 0
  %404 = vmatpush1.bf16.msra.mxu0 %v292
  %405 = vmatprep.subr.bf16.mxu0 0
  %406 = vmatpush1.bf16.msra.mxu0 %v293
  %407 = vmatprep.mubr.bf16.mxu0 %v121
  %408 = vmatmul.mubr.bf16.gmra.mrb[0].mxu0 %v120
  %v409 = vpop.f32.mrb[0].mxu0
  %v410 = vadd.f32 %v361, %v409
  %v411 = vpop.f32.mrb[0].mxu0
  %v412 = vpop.f32.mrb[0].mxu0
  %v413 = vadd.f32 %v364, %v412
  %v414 = vpop.f32.mrb[0].mxu0
  %415 = vmatprep.mubr.bf16.mxu0 %v125
  %416 = vmatmul.mubr.bf16.gmra.mrb[0].mxu0 %v124
  %v417 = vpop.f32.mrb[0].mxu0
  %v418 = vadd.f32 %v369, %v417
  %v419 = vpop.f32.mrb[0].mxu0
  %v420 = vpop.f32.mrb[0].mxu0
  %v421 = vadd.f32 %v372, %v420
  %v422 = vpop.f32.mrb[0].mxu0
  %423 = vdwg.mxu0
  %vm424 = vcmask 523264
  %425 = vst.msk [vmem:[%s2] sm:$0xff] %vm424, %v410
  %426 = vst.msk [vmem:[%s2 + $0x8] sm:$0xff] %vm424, %v413
  %427 = vst.msk [vmem:[%s2 + $0x10] sm:$0xff] %vm424, %v418
  %428 = vst.msk [vmem:[%s2 + $0x18] sm:$0xff] %vm424, %v421
  %v429 = vld [vmem:[%s3] sm:$0x1]
  %v430 = vsel %vm424, %v410, 0.0
  %v431 = vsel %vm424, %v413, 0.0
  %v432 = vadd.f32 %v430, %v431
  %v433 = vsel %vm424, %v418, 0.0
  %v434 = vadd.f32 %v432, %v433
  %v435 = vsel %vm424, %v421, 0.0
  %v436 = vadd.f32 %v434, %v435
  %v437 = vrot.slane %v436, 4
  %v438 = vadd.f32 %v436, %v437
  %v439 = vrot.slane %v438, 2
  %v440 = vadd.f32 %v438, %v439
  %v441 = vrot.slane %v440, 1
  %v442 = vadd.f32 %v440, %v441
  %v443 = vadd.f32 %v429, %v442
  %vm444 = vcmask 516096
  %445 = vst.msk [vmem:[%s3] sm:$0x1] %vm444, %v443
  %v446 = vld [vmem:[%s4] sm:$0x1]
  %v447 = vmul.f32 %v410, %v410
  %v448 = vmul.f32 %v413, %v413
  %v449 = vmul.f32 %v418, %v418
  %v450 = vmul.f32 %v421, %v421
  %v451 = vsel %vm424, %v447, 0.0
  %v452 = vsel %vm424, %v448, 0.0
  %v453 = vadd.f32 %v451, %v452
  %v454 = vsel %vm424, %v449, 0.0
  %v455 = vadd.f32 %v453, %v454
  %v456 = vsel %vm424, %v450, 0.0
  %v457 = vadd.f32 %v455, %v456
  %v458 = vrot.slane %v457, 4
  %v459 = vadd.f32 %v457, %v458
  %v460 = vrot.slane %v459, 2
  %v461 = vadd.f32 %v459, %v460
  %v462 = vrot.slane %v461, 1
  %v463 = vadd.f32 %v461, %v462
  %v464 = vadd.f32 %v446, %v463
  %465 = vst.msk [vmem:[%s4] sm:$0x1] %vm444, %v464
  // Predicated region
  $region14: #{conv_discriminator_forward.13} parent=0 // pred_check
    _
  $region15: #{conv_discriminator_forward.13} parent=0 // pred_check_branch
    %467 = sbr.rel (0) target = $region17
  $region16: #{conv_discriminator_forward.13} parent=0 // pred_region
    _
  $region17: #{conv_discriminator_forward.13} parent=0 // pred_fallthru
    _
  // Predicated region
  $region18: #{conv_discriminator_forward.13} parent=0 // pred_check
    _
  $region19: #{conv_discriminator_forward.13} parent=0 // pred_check_branch
    %469 = sbr.rel (0) target = $region21
  $region20: #{conv_discriminator_forward.13} parent=0 // pred_region
    _
  $region21: #{conv_discriminator_forward.13} parent=0 // pred_fallthru
    _
  // Predicated region
  $region22: #{conv_discriminator_forward.13} parent=0 // pred_check
    _
  $region23: #{conv_discriminator_forward.13} parent=0 // pred_check_branch
    %471 = sbr.rel (0) target = $region25
  $region24: #{conv_discriminator_forward.13} parent=0 // pred_region
    _
  $region25: #{conv_discriminator_forward.13} parent=0 // pred_fallthru
    _
  // Predicated region
  $region26: #{conv_discriminator_forward.13} parent=0 // pred_check
    _
  $region27: #{conv_discriminator_forward.13} parent=0 // pred_check_branch
    %473 = sbr.rel (0) target = $region29
  $region28: #{conv_discriminator_forward.13} parent=0 // pred_region
    _
  $region29: #{conv_discriminator_forward.13} parent=0 // pred_fallthru
    _
  // Predicated region
  $region30: #{conv_discriminator_forward.13} parent=0 // pred_check
    _
  $region31: #{conv_discriminator_forward.13} parent=0 // pred_check_branch
    %475 = sbr.rel (0) target = $region33
  $region32: #{conv_discriminator_forward.13} parent=0 // pred_region
    _
  $region33: #{conv_discriminator_forward.13} parent=0 // pred_fallthru
    _
  // Predicated region
  $region34: #{conv_discriminator_forward.13} parent=0 // pred_check
    _
  $region35: #{conv_discriminator_forward.13} parent=0 // pred_check_branch
    %477 = sbr.rel (0) target = $region37
  $region36: #{conv_discriminator_forward.13} parent=0 // pred_region
    _
  $region37: #{conv_discriminator_forward.13} parent=0 // pred_fallthru
    _

// kernel: conv_discriminator_forward.15
$region0: #{conv_discriminator_forward.15}
  #allocation0 [shape = 'u32[]', space=smem, size = 0x4, offset = 0x4, fixed_abs, tag = 'smem constant byte address 0x4 - core index']
  #allocation1 [shape = 'u32[144,128]{1,0:T(1,128)}', space=vmem, size = 0x12000, scoped, tag = 'internal scratch']
  %s0 = inlined_call_operand.vmem [shape: bf16[2,1024], index: 0, kind: input, shape index: {}]
  %s1 = inlined_call_operand.vmem [shape: bf16[1024,128], index: 1, kind: input, shape index: {}]
  %s2 = inlined_call_operand.vmem [shape: f32[2,128], index: 2, kind: output, shape index: {}]
  %s3 = sld [smem:[#allocation0]]
  $region18: #{conv_discriminator_forward.15} parent=0
    _
  %s5 = ssub.s32 1, %s3
  %s6 = scalar_select 0, %s5, %s3
  // Predicated region
  $region2: #{conv_discriminator_forward.15} parent=0 // pred_check
    _
  $region3: #{conv_discriminator_forward.15} parent=0 // pred_check_branch
    %8 = sbr.rel (0) target = $region5
  $region4: #{conv_discriminator_forward.15} parent=0 // pred_region
    _
  $region5: #{conv_discriminator_forward.15} parent=0 // pred_fallthru
    _
  // Predicated region
  $region6: #{conv_discriminator_forward.15} parent=0 // pred_check
    _
  $region7: #{conv_discriminator_forward.15} parent=0 // pred_check_branch
    %10 = sbr.rel (0) target = $region9
  $region8: #{conv_discriminator_forward.15} parent=0 // pred_region
    _
  $region9: #{conv_discriminator_forward.15} parent=0 // pred_fallthru
    _
  %v12 = vld [vmem:[%s0] sm:$0xff]
  %v13 = vld [vmem:[%s1] sm:$0xf]
  %v14 = vld [vmem:[%s1 + $0x4] sm:$0xf]
  %v15 = vld [vmem:[%s1 + $0x8] sm:$0xf]
  %v16 = vld [vmem:[%s1 + $0xc] sm:$0xf]
  %v17 = vld [vmem:[%s1 + $0x10] sm:$0xf]
  %v18 = vld [vmem:[%s1 + $0x14] sm:$0xf]
  %v19 = vld [vmem:[%s1 + $0x18] sm:$0xf]
  %v20 = vld [vmem:[%s1 + $0x1c] sm:$0xf]
  %v21 = vld [vmem:[%s1 + $0x20] sm:$0xf]
  %v22 = vld [vmem:[%s1 + $0x24] sm:$0xf]
  %v23 = vld [vmem:[%s1 + $0x28] sm:$0xf]
  %v24 = vld [vmem:[%s1 + $0x2c] sm:$0xf]
  %v25 = vld [vmem:[%s1 + $0x30] sm:$0xf]
  %v26 = vld [vmem:[%s1 + $0x34] sm:$0xf]
  %v27 = vld [vmem:[%s1 + $0x38] sm:$0xf]
  %v28 = vld [vmem:[%s1 + $0x3c] sm:$0xf]
  %v29 = vld [vmem:[%s1 + $0x40] sm:$0xf]
  %v30 = vld [vmem:[%s1 + $0x44] sm:$0xf]
  %v31 = vld [vmem:[%s1 + $0x48] sm:$0xf]
  %v32 = vld [vmem:[%s1 + $0x4c] sm:$0xf]
  %v33 = vld [vmem:[%s1 + $0x50] sm:$0xf]
  %v34 = vld [vmem:[%s1 + $0x54] sm:$0xf]
  %v35 = vld [vmem:[%s1 + $0x58] sm:$0xf]
  %v36 = vld [vmem:[%s1 + $0x5c] sm:$0xf]
  %v37 = vld [vmem:[%s1 + $0x60] sm:$0xf]
  %v38 = vld [vmem:[%s1 + $0x64] sm:$0xf]
  %v39 = vld [vmem:[%s1 + $0x68] sm:$0xf]
  %v40 = vld [vmem:[%s1 + $0x6c] sm:$0xf]
  %v41 = vld [vmem:[%s1 + $0x70] sm:$0xf]
  %v42 = vld [vmem:[%s1 + $0x74] sm:$0xf]
  %v43 = vld [vmem:[%s1 + $0x78] sm:$0xf]
  %v44 = vld [vmem:[%s1 + $0x7c] sm:$0xf]
  %v45 = vld [vmem:[%s1 + $0x80] sm:$0xf]
  %v46 = vld [vmem:[%s1 + $0x84] sm:$0xf]
  %v47 = vld [vmem:[%s1 + $0x88] sm:$0xf]
  %v48 = vld [vmem:[%s1 + $0x8c] sm:$0xf]
  %v49 = vld [vmem:[%s1 + $0x90] sm:$0xf]
  %v50 = vld [vmem:[%s1 + $0x94] sm:$0xf]
  %v51 = vld [vmem:[%s1 + $0x98] sm:$0xf]
  %v52 = vld [vmem:[%s1 + $0x9c] sm:$0xf]
  %v53 = vld [vmem:[%s1 + $0xa0] sm:$0xf]
  %v54 = vld [vmem:[%s1 + $0xa4] sm:$0xf]
  %v55 = vld [vmem:[%s1 + $0xa8] sm:$0xf]
  %v56 = vld [vmem:[%s1 + $0xac] sm:$0xf]
  %v57 = vld [vmem:[%s1 + $0xb0] sm:$0xf]
  %v58 = vld [vmem:[%s1 + $0xb4] sm:$0xf]
  %v59 = vld [vmem:[%s1 + $0xb8] sm:$0xf]
  %v60 = vld [vmem:[%s1 + $0xbc] sm:$0xf]
  %v61 = vld [vmem:[%s1 + $0xc0] sm:$0xf]
  %v62 = vld [vmem:[%s1 + $0xc4] sm:$0xf]
  %v63 = vld [vmem:[%s1 + $0xc8] sm:$0xf]
  %v64 = vld [vmem:[%s1 + $0xcc] sm:$0xf]
  %v65 = vld [vmem:[%s1 + $0xd0] sm:$0xf]
  %v66 = vld [vmem:[%s1 + $0xd4] sm:$0xf]
  %v67 = vld [vmem:[%s1 + $0xd8] sm:$0xf]
  %v68 = vld [vmem:[%s1 + $0xdc] sm:$0xf]
  %v69 = vld [vmem:[%s1 + $0xe0] sm:$0xf]
  %v70 = vld [vmem:[%s1 + $0xe4] sm:$0xf]
  %v71 = vld [vmem:[%s1 + $0xe8] sm:$0xf]
  %v72 = vld [vmem:[%s1 + $0xec] sm:$0xf]
  %v73 = vld [vmem:[%s1 + $0xf0] sm:$0xf]
  %v74 = vld [vmem:[%s1 + $0xf4] sm:$0xf]
  %v75 = vld [vmem:[%s1 + $0xf8] sm:$0xf]
  %v76 = vld [vmem:[%s1 + $0xfc] sm:$0xf]
  %v77 = vld [vmem:[%s1 + $0x100] sm:$0xf]
  %v78 = vld [vmem:[%s1 + $0x104] sm:$0xf]
  %v79 = vld [vmem:[%s1 + $0x108] sm:$0xf]
  %v80 = vld [vmem:[%s1 + $0x10c] sm:$0xf]
  %v81 = vld [vmem:[%s1 + $0x110] sm:$0xf]
  %v82 = vld [vmem:[%s1 + $0x114] sm:$0xf]
  %v83 = vld [vmem:[%s1 + $0x118] sm:$0xf]
  %v84 = vld [vmem:[%s1 + $0x11c] sm:$0xf]
  %v85 = vld [vmem:[%s1 + $0x120] sm:$0xf]
  %v86 = vld [vmem:[%s1 + $0x124] sm:$0xf]
  %v87 = vld [vmem:[%s1 + $0x128] sm:$0xf]
  %v88 = vld [vmem:[%s1 + $0x12c] sm:$0xf]
  %v89 = vld [vmem:[%s1 + $0x130] sm:$0xf]
  %v90 = vld [vmem:[%s1 + $0x134] sm:$0xf]
  %v91 = vld [vmem:[%s1 + $0x138] sm:$0xf]
  %v92 = vld [vmem:[%s1 + $0x13c] sm:$0xf]
  %v93 = vld [vmem:[%s1 + $0x140] sm:$0xf]
  %v94 = vld [vmem:[%s1 + $0x144] sm:$0xf]
  %v95 = vld [vmem:[%s1 + $0x148] sm:$0xf]
  %v96 = vld [vmem:[%s1 + $0x14c] sm:$0xf]
  %v97 = vld [vmem:[%s1 + $0x150] sm:$0xf]
  %v98 = vld [vmem:[%s1 + $0x154] sm:$0xf]
  %v99 = vld [vmem:[%s1 + $0x158] sm:$0xf]
  %v100 = vld [vmem:[%s1 + $0x15c] sm:$0xf]
  %v101 = vld [vmem:[%s1 + $0x160] sm:$0xf]
  %v102 = vld [vmem:[%s1 + $0x164] sm:$0xf]
  %v103 = vld [vmem:[%s1 + $0x168] sm:$0xf]
  %v104 = vld [vmem:[%s1 + $0x16c] sm:$0xf]
  %v105 = vld [vmem:[%s1 + $0x170] sm:$0xf]
  %v106 = vld [vmem:[%s1 + $0x174] sm:$0xf]
  %v107 = vld [vmem:[%s1 + $0x178] sm:$0xf]
  %v108 = vld [vmem:[%s1 + $0x17c] sm:$0xf]
  %v109 = vld [vmem:[%s1 + $0x180] sm:$0xf]
  %v110 = vld [vmem:[%s1 + $0x184] sm:$0xf]
  %v111 = vld [vmem:[%s1 + $0x188] sm:$0xf]
  %v112 = vld [vmem:[%s1 + $0x18c] sm:$0xf]
  %v113 = vld [vmem:[%s1 + $0x190] sm:$0xf]
  %v114 = vld [vmem:[%s1 + $0x194] sm:$0xf]
  %v115 = vld [vmem:[%s1 + $0x198] sm:$0xf]
  %v116 = vld [vmem:[%s1 + $0x19c] sm:$0xf]
  %v117 = vld [vmem:[%s1 + $0x1a0] sm:$0xf]
  %v118 = vld [vmem:[%s1 + $0x1a4] sm:$0xf]
  %v119 = vld [vmem:[%s1 + $0x1a8] sm:$0xf]
  %v120 = vld [vmem:[%s1 + $0x1ac] sm:$0xf]
  %v121 = vld [vmem:[%s1 + $0x1b0] sm:$0xf]
  %v122 = vld [vmem:[%s1 + $0x1b4] sm:$0xf]
  %v123 = vld [vmem:[%s1 + $0x1b8] sm:$0xf]
  %v124 = vld [vmem:[%s1 + $0x1bc] sm:$0xf]
  %v125 = vld [vmem:[%s1 + $0x1c0] sm:$0xf]
  %v126 = vld [vmem:[%s1 + $0x1c4] sm:$0xf]
  %v127 = vld [vmem:[%s1 + $0x1c8] sm:$0xf]
  %v128 = vld [vmem:[%s1 + $0x1cc] sm:$0xf]
  %v129 = vld [vmem:[%s1 + $0x1d0] sm:$0xf]
  %v130 = vld [vmem:[%s1 + $0x1d4] sm:$0xf]
  %v131 = vld [vmem:[%s1 + $0x1d8] sm:$0xf]
  %v132 = vld [vmem:[%s1 + $0x1dc] sm:$0xf]
  %v133 = vld [vmem:[%s1 + $0x1e0] sm:$0xf]
  %v134 = vld [vmem:[%s1 + $0x1e4] sm:$0xf]
  %v135 = vld [vmem:[%s1 + $0x1e8] sm:$0xf]
  %v136 = vld [vmem:[%s1 + $0x1ec] sm:$0xf]
  %v137 = vld [vmem:[%s1 + $0x1f0] sm:$0xf]
  %v138 = vld [vmem:[%s1 + $0x1f4] sm:$0xf]
  %v139 = vld [vmem:[%s1 + $0x1f8] sm:$0xf]
  %v140 = vld [vmem:[%s1 + $0x1fc] sm:$0xf]
  %v142 = vcombine.high %v12, %v12
  %v144 = vunpack.c.l.s4 1966171168
  %v145 = vunpack.c.0.s8 %v144
  %v146 = vlaneseq
  %v147 = vshrl.u32 %v146, 7
  %v148 = vsub.s32 %v145, %v147
  %v149 = vrot.slane %v12, %v148
  %v151 = vunpack.c.l.s4 1966171168
  %v152 = vunpack.c.0.s8 %v151
  %v153 = vlaneseq
  %v154 = vshrl.u32 %v153, 7
  %v155 = vsub.s32 %v152, %v154
  %v156 = vrot.slane %v142, %v155
  %v157 = vcombine.high %v149, %v149
  %v158 = vcombine.high %v156, %v156
  %v160 = vunpack.c.l.s4 1966171168
  %v161 = vunpack.c.0.s8 %v160
  %v162 = vlaneseq
  %v163 = vshrl.u32 %v162, 7
  %v164 = vsub.s32 %v161, %v163
  %v165 = vrot.slane %v149, %v164
  %v167 = vunpack.c.l.s4 1966171168
  %v168 = vunpack.c.0.s8 %v167
  %v169 = vlaneseq
  %v170 = vshrl.u32 %v169, 7
  %v171 = vsub.s32 %v168, %v170
  %v172 = vrot.slane %v156, %v171
  %v174 = vunpack.c.l.s4 1966171168
  %v175 = vunpack.c.0.s8 %v174
  %v176 = vlaneseq
  %v177 = vshrl.u32 %v176, 7
  %v178 = vsub.s32 %v175, %v177
  %v179 = vrot.slane %v157, %v178
  %v181 = vunpack.c.l.s4 1966171168
  %v182 = vunpack.c.0.s8 %v181
  %v183 = vlaneseq
  %v184 = vshrl.u32 %v183, 7
  %v185 = vsub.s32 %v182, %v184
  %v186 = vrot.slane %v158, %v185
  %v187 = vcombine.high %v165, %v165
  %v188 = vcombine.high %v172, %v172
  %v189 = vcombine.high %v179, %v179
  %v190 = vcombine.high %v186, %v186
  %v327 = vunpack.c.l.b16 %v13
  %v328 = vunpack.c.l.b16 %v14
  %v329 = vunpack.c.l.b16 %v15
  %v330 = vunpack.c.l.b16 %v16
  %v331 = vunpack.c.l.b16 %v17
  %v332 = vunpack.c.l.b16 %v18
  %v333 = vunpack.c.l.b16 %v19
  %v334 = vunpack.c.l.b16 %v20
  %v335 = vunpack.c.l.b16 %v21
  %v336 = vunpack.c.l.b16 %v22
  %v337 = vunpack.c.l.b16 %v23
  %v338 = vunpack.c.l.b16 %v24
  %v339 = vunpack.c.l.b16 %v25
  %v340 = vunpack.c.l.b16 %v26
  %v341 = vunpack.c.l.b16 %v27
  %v342 = vunpack.c.l.b16 %v28
  %v343 = vunpack.c.l.b16 %v29
  %v344 = vunpack.c.l.b16 %v30
  %v345 = vunpack.c.l.b16 %v31
  %v346 = vunpack.c.l.b16 %v32
  %v347 = vunpack.c.l.b16 %v33
  %v348 = vunpack.c.l.b16 %v34
  %v349 = vunpack.c.l.b16 %v35
  %v350 = vunpack.c.l.b16 %v36
  %v351 = vunpack.c.l.b16 %v37
  %v352 = vunpack.c.l.b16 %v38
  %v353 = vunpack.c.l.b16 %v39
  %v354 = vunpack.c.l.b16 %v40
  %v355 = vunpack.c.l.b16 %v41
  %v356 = vunpack.c.l.b16 %v42
  %v357 = vunpack.c.l.b16 %v43
  %v358 = vunpack.c.l.b16 %v44
  %v359 = vunpack.c.l.b16 %v45
  %v360 = vunpack.c.l.b16 %v46
  %v361 = vunpack.c.l.b16 %v47
  %v362 = vunpack.c.l.b16 %v48
  %v363 = vunpack.c.l.b16 %v49
  %v364 = vunpack.c.l.b16 %v50
  %v365 = vunpack.c.l.b16 %v51
  %v366 = vunpack.c.l.b16 %v52
  %v367 = vunpack.c.l.b16 %v53
  %v368 = vunpack.c.l.b16 %v54
  %v369 = vunpack.c.l.b16 %v55
  %v370 = vunpack.c.l.b16 %v56
  %v371 = vunpack.c.l.b16 %v57
  %v372 = vunpack.c.l.b16 %v58
  %v373 = vunpack.c.l.b16 %v59
  %v374 = vunpack.c.l.b16 %v60
  %v375 = vunpack.c.l.b16 %v61
  %v376 = vunpack.c.l.b16 %v62
  %v377 = vunpack.c.l.b16 %v63
  %v378 = vunpack.c.l.b16 %v64
  %v379 = vunpack.c.l.b16 %v65
  %v380 = vunpack.c.l.b16 %v66
  %v381 = vunpack.c.l.b16 %v67
  %v382 = vunpack.c.l.b16 %v68
  %v383 = vunpack.c.l.b16 %v69
  %v384 = vunpack.c.l.b16 %v70
  %v385 = vunpack.c.l.b16 %v71
  %v386 = vunpack.c.l.b16 %v72
  %v387 = vunpack.c.l.b16 %v73
  %v388 = vunpack.c.l.b16 %v74
  %v389 = vunpack.c.l.b16 %v75
  %v390 = vunpack.c.l.b16 %v76
  %v391 = vunpack.c.l.b16 %v77
  %v392 = vunpack.c.l.b16 %v78
  %v393 = vunpack.c.l.b16 %v79
  %v394 = vunpack.c.l.b16 %v80
  %v395 = vunpack.c.l.b16 %v81
  %v396 = vunpack.c.l.b16 %v82
  %v397 = vunpack.c.l.b16 %v83
  %v398 = vunpack.c.l.b16 %v84
  %v399 = vunpack.c.l.b16 %v85
  %v400 = vunpack.c.l.b16 %v86
  %v401 = vunpack.c.l.b16 %v87
  %v402 = vunpack.c.l.b16 %v88
  %v403 = vunpack.c.l.b16 %v89
  %v404 = vunpack.c.l.b16 %v90
  %v405 = vunpack.c.l.b16 %v91
  %v406 = vunpack.c.l.b16 %v92
  %v407 = vunpack.c.l.b16 %v93
  %v408 = vunpack.c.l.b16 %v94
  %v409 = vunpack.c.l.b16 %v95
  %v410 = vunpack.c.l.b16 %v96
  %v411 = vunpack.c.l.b16 %v97
  %v412 = vunpack.c.l.b16 %v98
  %v413 = vunpack.c.l.b16 %v99
  %v414 = vunpack.c.l.b16 %v100
  %v415 = vunpack.c.l.b16 %v101
  %v416 = vunpack.c.l.b16 %v102
  %v417 = vunpack.c.l.b16 %v103
  %v418 = vunpack.c.l.b16 %v104
  %v419 = vunpack.c.l.b16 %v105
  %v420 = vunpack.c.l.b16 %v106
  %v421 = vunpack.c.l.b16 %v107
  %v422 = vunpack.c.l.b16 %v108
  %v423 = vunpack.c.l.b16 %v109
  %v424 = vunpack.c.l.b16 %v110
  %v425 = vunpack.c.l.b16 %v111
  %v426 = vunpack.c.l.b16 %v112
  %v427 = vunpack.c.l.b16 %v113
  %v428 = vunpack.c.l.b16 %v114
  %v429 = vunpack.c.l.b16 %v115
  %v430 = vunpack.c.l.b16 %v116
  %v431 = vunpack.c.l.b16 %v117
  %v432 = vunpack.c.l.b16 %v118
  %v433 = vunpack.c.l.b16 %v119
  %v434 = vunpack.c.l.b16 %v120
  %v435 = vunpack.c.l.b16 %v121
  %v436 = vunpack.c.l.b16 %v122
  %v437 = vunpack.c.l.b16 %v123
  %v438 = vunpack.c.l.b16 %v124
  %v439 = vunpack.c.l.b16 %v125
  %v440 = vunpack.c.l.b16 %v126
  %v441 = vunpack.c.l.b16 %v127
  %v442 = vunpack.c.l.b16 %v128
  %v443 = vunpack.c.l.b16 %v129
  %v444 = vunpack.c.l.b16 %v130
  %v445 = vunpack.c.l.b16 %v131
  %v446 = vunpack.c.l.b16 %v132
  %v447 = vunpack.c.l.b16 %v133
  %v448 = vunpack.c.l.b16 %v134
  %v449 = vunpack.c.l.b16 %v135
  %v450 = vunpack.c.l.b16 %v136
  %v451 = vunpack.c.l.b16 %v137
  %v452 = vunpack.c.l.b16 %v138
  %v453 = vunpack.c.l.b16 %v139
  %v454 = vunpack.c.l.b16 %v140
  %v455 = vpack.c.b16 %v328, %v327
  %v456 = vpack.c.b16 %v330, %v329
  %v457 = vpack.c.b16 %v332, %v331
  %v458 = vpack.c.b16 %v334, %v333
  %v459 = vpack.c.b16 %v336, %v335
  %v460 = vpack.c.b16 %v338, %v337
  %v461 = vpack.c.b16 %v340, %v339
  %v462 = vpack.c.b16 %v342, %v341
  %v463 = vpack.c.b16 %v344, %v343
  %v464 = vpack.c.b16 %v346, %v345
  %v465 = vpack.c.b16 %v348, %v347
  %v466 = vpack.c.b16 %v350, %v349
  %v467 = vpack.c.b16 %v352, %v351
  %v468 = vpack.c.b16 %v354, %v353
  %v469 = vpack.c.b16 %v356, %v355
  %v470 = vpack.c.b16 %v358, %v357
  %v471 = vpack.c.b16 %v360, %v359
  %v472 = vpack.c.b16 %v362, %v361
  %v473 = vpack.c.b16 %v364, %v363
  %v474 = vpack.c.b16 %v366, %v365
  %v475 = vpack.c.b16 %v368, %v367
  %v476 = vpack.c.b16 %v370, %v369
  %v477 = vpack.c.b16 %v372, %v371
  %v478 = vpack.c.b16 %v374, %v373
  %v479 = vpack.c.b16 %v376, %v375
  %v480 = vpack.c.b16 %v378, %v377
  %v481 = vpack.c.b16 %v380, %v379
  %v482 = vpack.c.b16 %v382, %v381
  %v483 = vpack.c.b16 %v384, %v383
  %v484 = vpack.c.b16 %v386, %v385
  %v485 = vpack.c.b16 %v388, %v387
  %v486 = vpack.c.b16 %v390, %v389
  %v487 = vpack.c.b16 %v392, %v391
  %v488 = vpack.c.b16 %v394, %v393
  %v489 = vpack.c.b16 %v396, %v395
  %v490 = vpack.c.b16 %v398, %v397
  %v491 = vpack.c.b16 %v400, %v399
  %v492 = vpack.c.b16 %v402, %v401
  %v493 = vpack.c.b16 %v404, %v403
  %v494 = vpack.c.b16 %v406, %v405
  %v495 = vpack.c.b16 %v408, %v407
  %v496 = vpack.c.b16 %v410, %v409
  %v497 = vpack.c.b16 %v412, %v411
  %v498 = vpack.c.b16 %v414, %v413
  %v499 = vpack.c.b16 %v416, %v415
  %v500 = vpack.c.b16 %v418, %v417
  %v501 = vpack.c.b16 %v420, %v419
  %v502 = vpack.c.b16 %v422, %v421
  %v503 = vpack.c.b16 %v424, %v423
  %v504 = vpack.c.b16 %v426, %v425
  %v505 = vpack.c.b16 %v428, %v427
  %v506 = vpack.c.b16 %v430, %v429
  %v507 = vpack.c.b16 %v432, %v431
  %v508 = vpack.c.b16 %v434, %v433
  %v509 = vpack.c.b16 %v436, %v435
  %v510 = vpack.c.b16 %v438, %v437
  %v511 = vpack.c.b16 %v440, %v439
  %v512 = vpack.c.b16 %v442, %v441
  %v513 = vpack.c.b16 %v444, %v443
  %v514 = vpack.c.b16 %v446, %v445
  %v515 = vpack.c.b16 %v448, %v447
  %v516 = vpack.c.b16 %v450, %v449
  %v517 = vpack.c.b16 %v452, %v451
  %v518 = vpack.c.b16 %v454, %v453
  %583 = vmatprep.subr.bf16.mxu0 0
  %584 = vmatpush1.bf16.msra.mxu0 %v455
  %585 = vmatprep.subr.bf16.mxu0 0
  %586 = vmatpush1.bf16.msra.mxu0 %v456
  %587 = vmatprep.subr.bf16.mxu0 0
  %588 = vmatpush1.bf16.msra.mxu0 %v457
  %589 = vmatprep.subr.bf16.mxu0 0
  %590 = vmatpush1.bf16.msra.mxu0 %v458
  %591 = vmatprep.subr.bf16.mxu0 0
  %592 = vmatpush1.bf16.msra.mxu0 %v459
  %593 = vmatprep.subr.bf16.mxu0 0
  %594 = vmatpush1.bf16.msra.mxu0 %v460
  %595 = vmatprep.subr.bf16.mxu0 0
  %596 = vmatpush1.bf16.msra.mxu0 %v461
  %597 = vmatprep.subr.bf16.mxu0 0
  %598 = vmatpush1.bf16.msra.mxu0 %v462
  %599 = vmatprep.subr.bf16.mxu0 0
  %600 = vmatpush1.bf16.msra.mxu0 %v463
  %601 = vmatprep.subr.bf16.mxu0 0
  %602 = vmatpush1.bf16.msra.mxu0 %v464
  %603 = vmatprep.subr.bf16.mxu0 0
  %604 = vmatpush1.bf16.msra.mxu0 %v465
  %605 = vmatprep.subr.bf16.mxu0 0
  %606 = vmatpush1.bf16.msra.mxu0 %v466
  %607 = vmatprep.subr.bf16.mxu0 0
  %608 = vmatpush1.bf16.msra.mxu0 %v467
  %609 = vmatprep.subr.bf16.mxu0 0
  %610 = vmatpush1.bf16.msra.mxu0 %v468
  %611 = vmatprep.subr.bf16.mxu0 0
  %612 = vmatpush1.bf16.msra.mxu0 %v469
  %613 = vmatprep.subr.bf16.mxu0 0
  %614 = vmatpush1.bf16.msra.mxu0 %v470
  %615 = vmatprep.mubr.bf16.mxu0 %v179
  %616 = vmatmul.mubr.bf16.gmra.mrb[0].mxu0 %v165
  %v617 = vpop.f32.mrb[0].mxu0
  %v618 = vadd.f32 0.0, %v617
  %v619 = vpop.f32.mrb[0].mxu0
  %v620 = vpop.f32.mrb[0].mxu0
  %v621 = vpop.f32.mrb[0].mxu0
  %622 = vdwg.mxu0
  %623 = vmatprep.subr.bf16.mxu0 0
  %624 = vmatpush1.bf16.msra.mxu0 %v471
  %625 = vmatprep.subr.bf16.mxu0 0
  %626 = vmatpush1.bf16.msra.mxu0 %v472
  %627 = vmatprep.subr.bf16.mxu0 0
  %628 = vmatpush1.bf16.msra.mxu0 %v473
  %629 = vmatprep.subr.bf16.mxu0 0
  %630 = vmatpush1.bf16.msra.mxu0 %v474
  %631 = vmatprep.subr.bf16.mxu0 0
  %632 = vmatpush1.bf16.msra.mxu0 %v475
  %633 = vmatprep.subr.bf16.mxu0 0
  %634 = vmatpush1.bf16.msra.mxu0 %v476
  %635 = vmatprep.subr.bf16.mxu0 0
  %636 = vmatpush1.bf16.msra.mxu0 %v477
  %637 = vmatprep.subr.bf16.mxu0 0
  %638 = vmatpush1.bf16.msra.mxu0 %v478
  %639 = vmatprep.subr.bf16.mxu0 0
  %640 = vmatpush1.bf16.msra.mxu0 %v479
  %641 = vmatprep.subr.bf16.mxu0 0
  %642 = vmatpush1.bf16.msra.mxu0 %v480
  %643 = vmatprep.subr.bf16.mxu0 0
  %644 = vmatpush1.bf16.msra.mxu0 %v481
  %645 = vmatprep.subr.bf16.mxu0 0
  %646 = vmatpush1.bf16.msra.mxu0 %v482
  %647 = vmatprep.subr.bf16.mxu0 0
  %648 = vmatpush1.bf16.msra.mxu0 %v483
  %649 = vmatprep.subr.bf16.mxu0 0
  %650 = vmatpush1.bf16.msra.mxu0 %v484
  %651 = vmatprep.subr.bf16.mxu0 0
  %652 = vmatpush1.bf16.msra.mxu0 %v485
  %653 = vmatprep.subr.bf16.mxu0 0
  %654 = vmatpush1.bf16.msra.mxu0 %v486
  %655 = vmatprep.mubr.bf16.mxu0 %v189
  %656 = vmatmul.mubr.bf16.gmra.mrb[0].mxu0 %v187
  %v657 = vpop.f32.mrb[0].mxu0
  %v658 = vadd.f32 %v618, %v657
  %v659 = vpop.f32.mrb[0].mxu0
  %v660 = vpop.f32.mrb[0].mxu0
  %v661 = vpop.f32.mrb[0].mxu0
  %662 = vdwg.mxu0
  %663 = vmatprep.subr.bf16.mxu0 0
  %664 = vmatpush1.bf16.msra.mxu0 %v487
  %665 = vmatprep.subr.bf16.mxu0 0
  %666 = vmatpush1.bf16.msra.mxu0 %v488
  %667 = vmatprep.subr.bf16.mxu0 0
  %668 = vmatpush1.bf16.msra.mxu0 %v489
  %669 = vmatprep.subr.bf16.mxu0 0
  %670 = vmatpush1.bf16.msra.mxu0 %v490
  %671 = vmatprep.subr.bf16.mxu0 0
  %672 = vmatpush1.bf16.msra.mxu0 %v491
  %673 = vmatprep.subr.bf16.mxu0 0
  %674 = vmatpush1.bf16.msra.mxu0 %v492
  %675 = vmatprep.subr.bf16.mxu0 0
  %676 = vmatpush1.bf16.msra.mxu0 %v493
  %677 = vmatprep.subr.bf16.mxu0 0
  %678 = vmatpush1.bf16.msra.mxu0 %v494
  %679 = vmatprep.subr.bf16.mxu0 0
  %680 = vmatpush1.bf16.msra.mxu0 %v495
  %681 = vmatprep.subr.bf16.mxu0 0
  %682 = vmatpush1.bf16.msra.mxu0 %v496
  %683 = vmatprep.subr.bf16.mxu0 0
  %684 = vmatpush1.bf16.msra.mxu0 %v497
  %685 = vmatprep.subr.bf16.mxu0 0
  %686 = vmatpush1.bf16.msra.mxu0 %v498
  %687 = vmatprep.subr.bf16.mxu0 0
  %688 = vmatpush1.bf16.msra.mxu0 %v499
  %689 = vmatprep.subr.bf16.mxu0 0
  %690 = vmatpush1.bf16.msra.mxu0 %v500
  %691 = vmatprep.subr.bf16.mxu0 0
  %692 = vmatpush1.bf16.msra.mxu0 %v501
  %693 = vmatprep.subr.bf16.mxu0 0
  %694 = vmatpush1.bf16.msra.mxu0 %v502
  %695 = vmatprep.mubr.bf16.mxu0 %v186
  %696 = vmatmul.mubr.bf16.gmra.mrb[0].mxu0 %v172
  %v697 = vpop.f32.mrb[0].mxu0
  %v698 = vadd.f32 %v658, %v697
  %v699 = vpop.f32.mrb[0].mxu0
  %v700 = vpop.f32.mrb[0].mxu0
  %v701 = vpop.f32.mrb[0].mxu0
  %702 = vdwg.mxu0
  %703 = vmatprep.subr.bf16.mxu0 0
  %704 = vmatpush1.bf16.msra.mxu0 %v503
  %705 = vmatprep.subr.bf16.mxu0 0
  %706 = vmatpush1.bf16.msra.mxu0 %v504
  %707 = vmatprep.subr.bf16.mxu0 0
  %708 = vmatpush1.bf16.msra.mxu0 %v505
  %709 = vmatprep.subr.bf16.mxu0 0
  %710 = vmatpush1.bf16.msra.mxu0 %v506
  %711 = vmatprep.subr.bf16.mxu0 0
  %712 = vmatpush1.bf16.msra.mxu0 %v507
  %713 = vmatprep.subr.bf16.mxu0 0
  %714 = vmatpush1.bf16.msra.mxu0 %v508
  %715 = vmatprep.subr.bf16.mxu0 0
  %716 = vmatpush1.bf16.msra.mxu0 %v509
  %717 = vmatprep.subr.bf16.mxu0 0
  %718 = vmatpush1.bf16.msra.mxu0 %v510
  %719 = vmatprep.subr.bf16.mxu0 0
  %720 = vmatpush1.bf16.msra.mxu0 %v511
  %721 = vmatprep.subr.bf16.mxu0 0
  %722 = vmatpush1.bf16.msra.mxu0 %v512
  %723 = vmatprep.subr.bf16.mxu0 0
  %724 = vmatpush1.bf16.msra.mxu0 %v513
  %725 = vmatprep.subr.bf16.mxu0 0
  %726 = vmatpush1.bf16.msra.mxu0 %v514
  %727 = vmatprep.subr.bf16.mxu0 0
  %728 = vmatpush1.bf16.msra.mxu0 %v515
  %729 = vmatprep.subr.bf16.mxu0 0
  %730 = vmatpush1.bf16.msra.mxu0 %v516
  %731 = vmatprep.subr.bf16.mxu0 0
  %732 = vmatpush1.bf16.msra.mxu0 %v517
  %733 = vmatprep.subr.bf16.mxu0 0
  %734 = vmatpush1.bf16.msra.mxu0 %v518
  %735 = vmatprep.mubr.bf16.mxu0 %v190
  %736 = vmatmul.mubr.bf16.gmra.mrb[0].mxu0 %v188
  %v737 = vpop.f32.mrb[0].mxu0
  %v738 = vadd.f32 %v698, %v737
  %v739 = vpop.f32.mrb[0].mxu0
  %v740 = vpop.f32.mrb[0].mxu0
  %v741 = vpop.f32.mrb[0].mxu0
  %742 = vdwg.mxu0
  %v743 = vsub.f32 0.0, %v738
  %v744 = vmul.f32 %v743, 1.442695
  %v745 = vpow.pop %v744
  %v746 = vadd.f32 %v745, 1.0
  %v747 = vrcp.pop %v746
  %v748 = vmul.f32 1.0, %v747
  %749 = vst [vmem:[%s2] sm:$0x3] %v748
  // Predicated region
  $region10: #{conv_discriminator_forward.15} parent=0 // pred_check
    _
  $region11: #{conv_discriminator_forward.15} parent=0 // pred_check_branch
    %751 = sbr.rel (0) target = $region13
  $region12: #{conv_discriminator_forward.15} parent=0 // pred_region
    _
  $region13: #{conv_discriminator_forward.15} parent=0 // pred_fallthru
    _
  // Predicated region
  $region14: #{conv_discriminator_forward.15} parent=0 // pred_check
    _
  $region15: #{conv_discriminator_forward.15} parent=0 // pred_check_branch
    %753 = sbr.rel (0) target = $region17
  $region16: #{conv_discriminator_forward.15} parent=0 // pred_region
    _
  $region17: #{conv_discriminator_forward.15} parent=0 // pred_fallthru
    _

</llo_original>
